<compile_context>
chip_gen: v7x
topology: tpu7x:2x2x1
jax: 0.10.0
libtpu: 0.0.40
codegen_flags: <defaults>
</compile_context>

<pallas_src>
import functools
import math

import jax
import jax.numpy as jnp
from jax import lax
from jax.experimental import pallas as pl
from jax.experimental.pallas import tpu as pltpu


# ----------------------------------------------------------------------------
# Helpers
# ----------------------------------------------------------------------------
def _wspec(shape):
    """Whole-array block that does not vary with the grid (weights / biases)."""
    return pl.BlockSpec(shape, lambda b: (0,) * len(shape))


def _layer_norm(x, alpha, bias, eps):
    # Matches the PyTorch module: alpha*(x-mean)/(std+eps)+bias with torch.std
    # being the UNBIASED (n-1) standard deviation and eps added to std.
    d = x.shape[-1]
    mean = jnp.mean(x, axis=-1, keepdims=True)
    diff = x - mean
    var = jnp.sum(diff * diff, axis=-1, keepdims=True) / (d - 1)
    inv = pl.reciprocal(jnp.sqrt(var) + eps, approx=True)
    return alpha * diff * inv + bias


# ----------------------------------------------------------------------------
# Fused sublayer kernels
# ----------------------------------------------------------------------------
def _mha_block_kernel(*refs, heads, d_k, causal, self_attn, eps):
    """LayerNorm + Q/K/V projections + multi-head attention + output
    projection (+ bias) + residual add, for one batch element."""
    if self_attn:
        (x_ref, lna_ref, lnb_ref,
         wq_ref, wk_ref, wv_ref, wo_ref, bo_ref, o_ref) = refs
        kv_ref = None
    else:
        (x_ref, kv_ref, lna_ref, lnb_ref,
         wq_ref, wk_ref, wv_ref, wo_ref, bo_ref, o_ref) = refs

    x = x_ref[...]                                         # (Sq, D) f32
    x2 = _layer_norm(x, lna_ref[...], lnb_ref[...], eps)   # (Sq, D) f32

    q_in = x2.astype(jnp.bfloat16)
    kv_in = q_in if self_attn else kv_ref[...].astype(jnp.bfloat16)

    # Bias-free Q/K/V projections on the MXU with f32 accumulation.
    q = jnp.dot(q_in, wq_ref[...], preferred_element_type=jnp.float32)
    k = jnp.dot(kv_in, wk_ref[...], preferred_element_type=jnp.float32)
    v = jnp.dot(kv_in, wv_ref[...], preferred_element_type=jnp.float32)

    sq, sk = q.shape[0], k.shape[0]
    scale = 1.0 / math.sqrt(d_k)
    if causal:
        row = lax.broadcasted_iota(jnp.int32, (sq, sk), 0)
        col = lax.broadcasted_iota(jnp.int32, (sq, sk), 1)
        tri = col <= row

    # Residual + output-projection bias fused into the accumulator.
    out = x + bo_ref[...]

    for h in range(heads):                     # static unroll; heads is small
        sl = slice(h * d_k, (h + 1) * d_k)
        qh = q[:, sl].astype(jnp.bfloat16)
        kh = k[:, sl].astype(jnp.bfloat16)
        vh = v[:, sl].astype(jnp.bfloat16)

        # Q @ K^T / sqrt(d_k)
        s = lax.dot_general(qh, kh, (((1,), (1,)), ((), ())),
                            preferred_element_type=jnp.float32) * scale

        # Faithful to the reference: tril (if sequential), then
        # masked_fill(attn == 0, -inf) — combined into a single select.
        keep = s != 0.0
        if causal:
            keep = jnp.logical_and(keep, tri)
        s = jnp.where(keep, s, -jnp.inf)

        m = jnp.max(s, axis=-1, keepdims=True)
        e = jnp.exp(s - m)
        p = e * pl.reciprocal(jnp.sum(e, axis=-1, keepdims=True), approx=True)

        oh = jnp.dot(p.astype(jnp.bfloat16), vh,
                     preferred_element_type=jnp.float32)
        # Output projection decomposed per head:
        #   concat(oh_0..oh_{H-1}) @ Wo == sum_h oh_h @ Wo[h*dk:(h+1)*dk, :]
        out = out + jnp.dot(oh.astype(jnp.bfloat16), wo_ref[sl, :],
                            preferred_element_type=jnp.float32)

    o_ref[...] = out


def _ffn_block_kernel(x_ref, lna_ref, lnb_ref, w1_ref, b1_ref, w2_ref, b2_ref,
                      o_ref, *, eps):
    """LayerNorm + Linear/ReLU/Linear + residual add, for one batch element."""
    x = x_ref[...]                                         # (S, D) f32
    x2 = _layer_norm(x, lna_ref[...], lnb_ref[...], eps)
    h = jnp.dot(x2.astype(jnp.bfloat16), w1_ref[...],
                preferred_element_type=jnp.float32) + b1_ref[...]
    h = jnp.maximum(h, 0.0)                                # ReLU
    y = jnp.dot(h.astype(jnp.bfloat16), w2_ref[...],
                preferred_element_type=jnp.float32) + b2_ref[...]
    o_ref[...] = x + y                                     # fused residual


# ----------------------------------------------------------------------------
# pallas_call wrappers
# ----------------------------------------------------------------------------
def mha_block(x, kv, ln_a, ln_b, attn_p, *, heads, causal, self_attn,
              eps=1e-6):
    B, S, D = x.shape
    d_k = D // heads
    kernel = functools.partial(_mha_block_kernel, heads=heads, d_k=d_k,
                               causal=causal, self_attn=self_attn, eps=eps)

    act_spec = pl.BlockSpec((None, S, D), lambda b: (b, 0, 0))
    in_specs = [act_spec]
    operands = [x]
    if not self_attn:
        Sk = kv.shape[1]
        in_specs.append(pl.BlockSpec((None, Sk, D), lambda b: (b, 0, 0)))
        operands.append(kv)
    in_specs += [_wspec((1, D)), _wspec((1, D)),
                 _wspec((D, D)), _wspec((D, D)), _wspec((D, D)), _wspec((D, D)),
                 _wspec((1, D))]
    operands += [ln_a, ln_b,
                 attn_p["wq"], attn_p["wk"], attn_p["wv"], attn_p["wo"],
                 attn_p["bo"]]

    return pl.pallas_call(
        kernel,
        out_shape=jax.ShapeDtypeStruct((B, S, D), jnp.float32),
        grid=(B,),
        in_specs=in_specs,
        out_specs=act_spec,
        compiler_params=pltpu.CompilerParams(
            dimension_semantics=("parallel",)),
    )(*operands)


def ffn_block(x, ln_a, ln_b, w1, b1, w2, b2, *, eps=1e-6):
    B, S, D = x.shape
    F = w1.shape[1]
    act_spec = pl.BlockSpec((None, S, D), lambda b: (b, 0, 0))
    return pl.pallas_call(
        functools.partial(_ffn_block_kernel, eps=eps),
        out_shape=jax.ShapeDtypeStruct((B, S, D), jnp.float32),
        grid=(B,),
        in_specs=[act_spec,
                  _wspec((1, D)), _wspec((1, D)),
                  _wspec((D, F)), _wspec((1, F)),
                  _wspec((F, D)), _wspec((1, D))],
        out_specs=act_spec,
        compiler_params=pltpu.CompilerParams(
            dimension_semantics=("parallel",)),
    )(x, ln_a, ln_b, w1, b1, w2, b2)


def decoder_layer(params, x, memory, *, heads):
    # Matmul weights cast to bf16 once (MXU-native operands; halved DMA bytes).
    def bf16(w):
        return w.astype(jnp.bfloat16)

    attn1 = {k: (bf16(v) if k.startswith("w") else v)
             for k, v in params["attn1"].items()}
    attn2 = {k: (bf16(v) if k.startswith("w") else v)
             for k, v in params["attn2"].items()}

    # Sublayer 1: causal self-attention (LN1 + MHA + out-proj + residual).
    x = mha_block(x, x, params["ln1_a"], params["ln1_b"], attn1,
                  heads=heads, causal=True, self_attn=True)
    # Sublayer 2: cross-attention over `memory` (LN2 applied to queries only).
    x = mha_block(x, memory, params["ln2_a"], params["ln2_b"], attn2,
                  heads=heads, causal=False, self_attn=False)
    # Sublayer 3: feed-forward (LN3 + FFN + residual).
    x = ffn_block(x, params["ln3_a"], params["ln3_b"],
                  bf16(params["ff_w1"]), params["ff_b1"],
                  bf16(params["ff_w2"]), params["ff_b2"])
    return x


# ----------------------------------------------------------------------------
# Deterministic parameter init
# ----------------------------------------------------------------------------
def init_params(key, d_model, d_ff, heads):
    ks = jax.random.split(key, 16)
    sc = 0.02

    def mat(k, shape):
        return (jax.random.normal(k, shape, jnp.float32) * sc).astype(jnp.float32)

    def mha(k0, k1, k2, k3, k4):
        return {
            "wq": mat(k0, (d_model, d_model)),
            "wk": mat(k1, (d_model, d_model)),
            "wv": mat(k2, (d_model, d_model)),
            "wo": mat(k3, (d_model, d_model)),
            "bo": mat(k4, (1, d_model)),
        }

    return {
        "ln1_a": jnp.ones((1, d_model), jnp.float32),
        "ln1_b": jnp.zeros((1, d_model), jnp.float32),
        "ln2_a": jnp.ones((1, d_model), jnp.float32),
        "ln2_b": jnp.zeros((1, d_model), jnp.float32),
        "ln3_a": jnp.ones((1, d_model), jnp.float32),
        "ln3_b": jnp.zeros((1, d_model), jnp.float32),
        "attn1": mha(ks[0], ks[1], ks[2], ks[3], ks[4]),
        "attn2": mha(ks[5], ks[6], ks[7], ks[8], ks[9]),
        "ff_w1": mat(ks[10], (d_model, d_ff)),
        "ff_b1": mat(ks[11], (1, d_ff)),
        "ff_w2": mat(ks[12], (d_ff, d_model)),
        "ff_b2": mat(ks[13], (1, d_model)),
    }


# ----------------------------------------------------------------------------
# Main
# ----------------------------------------------------------------------------
if __name__ == "__main__":
    B, S, D = 2, 8, 32
    HEADS = 4
    D_FF = 2048  # FeedForward default d_ff=2048

    key = jax.random.PRNGKey(0)
    k_x, k_mem, k_p = jax.random.split(key, 3)
    x = jax.random.normal(k_x, (B, S, D), jnp.float32)
    memory = jax.random.normal(k_mem, (B, S, D), jnp.float32)
    params = init_params(k_p, D, D_FF, HEADS)

    fwd = jax.jit(functools.partial(decoder_layer, heads=HEADS))
    out = jax.block_until_ready(fwd(params, x, memory))

    assert out.shape == (B, S, D) and out.dtype == jnp.float32
    assert bool(jnp.isfinite(out).all())
    print("KERNEL_OK")
</pallas_src>

<mosaic_0001>
module attributes {stable_mosaic.version = 11 : i64} {
  func.func @_ffn_block_kernel(%arg0: i32, %arg1: memref<1x8x32xf32, #tpu.memory_space<vmem>>, %arg2: memref<1x32xf32, #tpu.memory_space<vmem>>, %arg3: memref<1x32xf32, #tpu.memory_space<vmem>>, %arg4: memref<32x2048xbf16, #tpu.memory_space<vmem>>, %arg5: memref<1x2048xf32, #tpu.memory_space<vmem>>, %arg6: memref<2048x32xbf16, #tpu.memory_space<vmem>>, %arg7: memref<1x32xf32, #tpu.memory_space<vmem>>, %arg8: memref<1x8x32xf32, #tpu.memory_space<vmem>>) attributes {dimension_semantics = [#tpu.dimension_semantics<parallel>], iteration_bounds = array<i64: 2>, scalar_prefetch = 0 : i64, scratch_operands = 0 : i64, tpu.core_type = #tpu.core_type<tc>, window_params = [{transform_indices = @transform_0, window_bounds = array<i64: 1, 8, 32>}, {pipeline_mode = #tpu.pipeline_mode<synchronous>, transform_indices = @transform_1, window_bounds = array<i64: 1, 32>}, {pipeline_mode = #tpu.pipeline_mode<synchronous>, transform_indices = @transform_2, window_bounds = array<i64: 1, 32>}, {pipeline_mode = #tpu.pipeline_mode<synchronous>, transform_indices = @transform_3, window_bounds = array<i64: 32, 2048>}, {pipeline_mode = #tpu.pipeline_mode<synchronous>, transform_indices = @transform_4, window_bounds = array<i64: 1, 2048>}, {pipeline_mode = #tpu.pipeline_mode<synchronous>, transform_indices = @transform_5, window_bounds = array<i64: 2048, 32>}, {pipeline_mode = #tpu.pipeline_mode<synchronous>, transform_indices = @transform_6, window_bounds = array<i64: 1, 32>}, {transform_indices = @transform_7, window_bounds = array<i64: 1, 8, 32>}]} {
    %c0 = arith.constant 0 : index
    %c0_0 = arith.constant 0 : index
    %c0_1 = arith.constant 0 : index
    %0 = vector.load %arg1[%c0, %c0_0, %c0_1] : memref<1x8x32xf32, #tpu.memory_space<vmem>>, vector<1x8x32xf32>
    %1 = vector.shape_cast %0 : vector<1x8x32xf32> to vector<8x32xf32>
    %c0_2 = arith.constant 0 : index
    %c0_3 = arith.constant 0 : index
    %2 = vector.load %arg2[%c0_2, %c0_3] : memref<1x32xf32, #tpu.memory_space<vmem>>, vector<1x32xf32>
    %c0_4 = arith.constant 0 : index
    %c0_5 = arith.constant 0 : index
    %3 = vector.load %arg3[%c0_4, %c0_5] : memref<1x32xf32, #tpu.memory_space<vmem>>, vector<1x32xf32>
    %cst = arith.constant dense<0.000000e+00> : vector<8xf32>
    %4 = vector.multi_reduction <add>, %1, %cst [1] : vector<8x32xf32> to vector<8xf32>
    %5 = vector.shape_cast %4 : vector<8xf32> to vector<8x1xf32>
    %cst_6 = arith.constant 3.200000e+01 : f32
    %6 = vector.broadcast %cst_6 : f32 to vector<8x1xf32>
    %7 = arith.divf %5, %6 : vector<8x1xf32>
    %8 = vector.broadcast %7 : vector<8x1xf32> to vector<8x32xf32>
    %9 = arith.subf %1, %8 : vector<8x32xf32>
    %10 = arith.mulf %9, %9 : vector<8x32xf32>
    %cst_7 = arith.constant dense<0.000000e+00> : vector<8xf32>
    %11 = vector.multi_reduction <add>, %10, %cst_7 [1] : vector<8x32xf32> to vector<8xf32>
    %12 = vector.shape_cast %11 : vector<8xf32> to vector<8x1xf32>
    %cst_8 = arith.constant 3.100000e+01 : f32
    %13 = vector.broadcast %cst_8 : f32 to vector<8x1xf32>
    %14 = arith.divf %12, %13 : vector<8x1xf32>
    %15 = math.sqrt %14 : vector<8x1xf32>
    %cst_9 = arith.constant 9.99999997E-7 : f32
    %16 = vector.broadcast %cst_9 : f32 to vector<8x1xf32>
    %17 = arith.addf %15, %16 : vector<8x1xf32>
    %18 = tpu.reciprocal %17 {approx = true} : vector<8x1xf32> -> vector<8x1xf32>
    %19 = vector.broadcast %2 : vector<1x32xf32> to vector<8x32xf32>
    %20 = arith.mulf %19, %9 : vector<8x32xf32>
    %21 = vector.broadcast %18 : vector<8x1xf32> to vector<8x32xf32>
    %22 = arith.mulf %20, %21 : vector<8x32xf32>
    %23 = vector.broadcast %3 : vector<1x32xf32> to vector<8x32xf32>
    %24 = arith.addf %22, %23 : vector<8x32xf32>
    %25 = arith.truncf %24 : vector<8x32xf32> to vector<8x32xbf16>
    %c0_10 = arith.constant 0 : index
    %c0_11 = arith.constant 0 : index
    %26 = vector.load %arg4[%c0_10, %c0_11] : memref<32x2048xbf16, #tpu.memory_space<vmem>>, vector<32x2048xbf16>
    %cst_12 = arith.constant dense<0.000000e+00> : vector<8x2048xf32>
    %27 = tpu.matmul %25, %26, %cst_12 {dimension_numbers = #tpu.dot_dimension_numbers<[1], [0], [0], [1], [0, 0, 1, 1], [], []>} : vector<8x32xbf16>, vector<32x2048xbf16>, vector<8x2048xf32> -> vector<8x2048xf32>
    %c0_13 = arith.constant 0 : index
    %c0_14 = arith.constant 0 : index
    %28 = vector.load %arg5[%c0_13, %c0_14] : memref<1x2048xf32, #tpu.memory_space<vmem>>, vector<1x2048xf32>
    %29 = vector.broadcast %28 : vector<1x2048xf32> to vector<8x2048xf32>
    %30 = arith.addf %27, %29 : vector<8x2048xf32>
    %cst_15 = arith.constant 0.000000e+00 : f32
    %31 = vector.broadcast %cst_15 : f32 to vector<8x2048xf32>
    %32 = arith.maximumf %30, %31 : vector<8x2048xf32>
    %33 = arith.truncf %32 : vector<8x2048xf32> to vector<8x2048xbf16>
    %c0_16 = arith.constant 0 : index
    %c0_17 = arith.constant 0 : index
    %34 = vector.load %arg6[%c0_16, %c0_17] : memref<2048x32xbf16, #tpu.memory_space<vmem>>, vector<2048x32xbf16>
    %cst_18 = arith.constant dense<0.000000e+00> : vector<8x32xf32>
    %35 = tpu.matmul %33, %34, %cst_18 {dimension_numbers = #tpu.dot_dimension_numbers<[1], [0], [0], [1], [0, 0, 1, 1], [], []>} : vector<8x2048xbf16>, vector<2048x32xbf16>, vector<8x32xf32> -> vector<8x32xf32>
    %c0_19 = arith.constant 0 : index
    %c0_20 = arith.constant 0 : index
    %36 = vector.load %arg7[%c0_19, %c0_20] : memref<1x32xf32, #tpu.memory_space<vmem>>, vector<1x32xf32>
    %37 = vector.broadcast %36 : vector<1x32xf32> to vector<8x32xf32>
    %38 = arith.addf %35, %37 : vector<8x32xf32>
    %39 = arith.addf %1, %38 : vector<8x32xf32>
    %c0_21 = arith.constant 0 : index
    %c0_22 = arith.constant 0 : index
    %c0_23 = arith.constant 0 : index
    %40 = vector.load %arg8[%c0_21, %c0_22, %c0_23] : memref<1x8x32xf32, #tpu.memory_space<vmem>>, vector<1x8x32xf32>
    %41 = vector.shape_cast %40 : vector<1x8x32xf32> to vector<8x32xf32>
    %42 = vector.shape_cast %39 : vector<8x32xf32> to vector<1x8x32xf32>
    tpu.vector_store %arg8[%c0_21, %c0_22, %c0_23], %42 {strides = array<i32>} : memref<1x8x32xf32, #tpu.memory_space<vmem>>, vector<1x8x32xf32>,
    return
  }
  func.func @transform_0(%arg0: i32) -> (i32, i32, i32) {
    %c0_i32 = arith.constant 0 : i32
    %c0_i32_0 = arith.constant 0 : i32
    %c0_i32_1 = arith.constant 0 : i32
    return %arg0, %c0_i32, %c0_i32_0 : i32, i32, i32
  }
  func.func @transform_1(%arg0: i32) -> (i32, i32) {
    %c0_i32 = arith.constant 0 : i32
    %c0_i32_0 = arith.constant 0 : i32
    %c0_i32_1 = arith.constant 0 : i32
    return %c0_i32, %c0_i32_0 : i32, i32
  }
  func.func @transform_2(%arg0: i32) -> (i32, i32) {
    %c0_i32 = arith.constant 0 : i32
    %c0_i32_0 = arith.constant 0 : i32
    %c0_i32_1 = arith.constant 0 : i32
    return %c0_i32, %c0_i32_0 : i32, i32
  }
  func.func @transform_3(%arg0: i32) -> (i32, i32) {
    %c0_i32 = arith.constant 0 : i32
    %c0_i32_0 = arith.constant 0 : i32
    %c0_i32_1 = arith.constant 0 : i32
    return %c0_i32, %c0_i32_0 : i32, i32
  }
  func.func @transform_4(%arg0: i32) -> (i32, i32) {
    %c0_i32 = arith.constant 0 : i32
    %c0_i32_0 = arith.constant 0 : i32
    %c0_i32_1 = arith.constant 0 : i32
    return %c0_i32, %c0_i32_0 : i32, i32
  }
  func.func @transform_5(%arg0: i32) -> (i32, i32) {
    %c0_i32 = arith.constant 0 : i32
    %c0_i32_0 = arith.constant 0 : i32
    %c0_i32_1 = arith.constant 0 : i32
    return %c0_i32, %c0_i32_0 : i32, i32
  }
  func.func @transform_6(%arg0: i32) -> (i32, i32) {
    %c0_i32 = arith.constant 0 : i32
    %c0_i32_0 = arith.constant 0 : i32
    %c0_i32_1 = arith.constant 0 : i32
    return %c0_i32, %c0_i32_0 : i32, i32
  }
  func.func @transform_7(%arg0: i32) -> (i32, i32, i32) {
    %c0_i32 = arith.constant 0 : i32
    %c0_i32_0 = arith.constant 0 : i32
    %c0_i32_1 = arith.constant 0 : i32
    return %arg0, %c0_i32, %c0_i32_0 : i32, i32, i32
  }
}

module attributes {stable_mosaic.version = 11 : i64} {
  func.func @_mha_block_kernel(%arg0: i32, %arg1: memref<1x8x32xf32, #tpu.memory_space<vmem>>, %arg2: memref<1x8x32xf32, #tpu.memory_space<vmem>>, %arg3: memref<1x32xf32, #tpu.memory_space<vmem>>, %arg4: memref<1x32xf32, #tpu.memory_space<vmem>>, %arg5: memref<32x32xbf16, #tpu.memory_space<vmem>>, %arg6: memref<32x32xbf16, #tpu.memory_space<vmem>>, %arg7: memref<32x32xbf16, #tpu.memory_space<vmem>>, %arg8: memref<32x32xbf16, #tpu.memory_space<vmem>>, %arg9: memref<1x32xf32, #tpu.memory_space<vmem>>, %arg10: memref<1x8x32xf32, #tpu.memory_space<vmem>>) attributes {dimension_semantics = [#tpu.dimension_semantics<parallel>], iteration_bounds = array<i64: 2>, scalar_prefetch = 0 : i64, scratch_operands = 0 : i64, tpu.core_type = #tpu.core_type<tc>, window_params = [{transform_indices = @transform_0, window_bounds = array<i64: 1, 8, 32>}, {transform_indices = @transform_1, window_bounds = array<i64: 1, 8, 32>}, {pipeline_mode = #tpu.pipeline_mode<synchronous>, transform_indices = @transform_2, window_bounds = array<i64: 1, 32>}, {pipeline_mode = #tpu.pipeline_mode<synchronous>, transform_indices = @transform_3, window_bounds = array<i64: 1, 32>}, {pipeline_mode = #tpu.pipeline_mode<synchronous>, transform_indices = @transform_4, window_bounds = array<i64: 32, 32>}, {pipeline_mode = #tpu.pipeline_mode<synchronous>, transform_indices = @transform_5, window_bounds = array<i64: 32, 32>}, {pipeline_mode = #tpu.pipeline_mode<synchronous>, transform_indices = @transform_6, window_bounds = array<i64: 32, 32>}, {pipeline_mode = #tpu.pipeline_mode<synchronous>, transform_indices = @transform_7, window_bounds = array<i64: 32, 32>}, {pipeline_mode = #tpu.pipeline_mode<synchronous>, transform_indices = @transform_8, window_bounds = array<i64: 1, 32>}, {transform_indices = @transform_9, window_bounds = array<i64: 1, 8, 32>}]} {
    %c0 = arith.constant 0 : index
    %c0_0 = arith.constant 0 : index
    %c0_1 = arith.constant 0 : index
    %0 = vector.load %arg1[%c0, %c0_0, %c0_1] : memref<1x8x32xf32, #tpu.memory_space<vmem>>, vector<1x8x32xf32>
    %1 = vector.shape_cast %0 : vector<1x8x32xf32> to vector<8x32xf32>
    %c0_2 = arith.constant 0 : index
    %c0_3 = arith.constant 0 : index
    %2 = vector.load %arg3[%c0_2, %c0_3] : memref<1x32xf32, #tpu.memory_space<vmem>>, vector<1x32xf32>
    %c0_4 = arith.constant 0 : index
    %c0_5 = arith.constant 0 : index
    %3 = vector.load %arg4[%c0_4, %c0_5] : memref<1x32xf32, #tpu.memory_space<vmem>>, vector<1x32xf32>
    %cst = arith.constant dense<0.000000e+00> : vector<8xf32>
    %4 = vector.multi_reduction <add>, %1, %cst [1] : vector<8x32xf32> to vector<8xf32>
    %5 = vector.shape_cast %4 : vector<8xf32> to vector<8x1xf32>
    %cst_6 = arith.constant 3.200000e+01 : f32
    %6 = vector.broadcast %cst_6 : f32 to vector<8x1xf32>
    %7 = arith.divf %5, %6 : vector<8x1xf32>
    %8 = vector.broadcast %7 : vector<8x1xf32> to vector<8x32xf32>
    %9 = arith.subf %1, %8 : vector<8x32xf32>
    %10 = arith.mulf %9, %9 : vector<8x32xf32>
    %cst_7 = arith.constant dense<0.000000e+00> : vector<8xf32>
    %11 = vector.multi_reduction <add>, %10, %cst_7 [1] : vector<8x32xf32> to vector<8xf32>
    %12 = vector.shape_cast %11 : vector<8xf32> to vector<8x1xf32>
    %cst_8 = arith.constant 3.100000e+01 : f32
    %13 = vector.broadcast %cst_8 : f32 to vector<8x1xf32>
    %14 = arith.divf %12, %13 : vector<8x1xf32>
    %15 = math.sqrt %14 : vector<8x1xf32>
    %cst_9 = arith.constant 9.99999997E-7 : f32
    %16 = vector.broadcast %cst_9 : f32 to vector<8x1xf32>
    %17 = arith.addf %15, %16 : vector<8x1xf32>
    %18 = tpu.reciprocal %17 {approx = true} : vector<8x1xf32> -> vector<8x1xf32>
    %19 = vector.broadcast %2 : vector<1x32xf32> to vector<8x32xf32>
    %20 = arith.mulf %19, %9 : vector<8x32xf32>
    %21 = vector.broadcast %18 : vector<8x1xf32> to vector<8x32xf32>
    %22 = arith.mulf %20, %21 : vector<8x32xf32>
    %23 = vector.broadcast %3 : vector<1x32xf32> to vector<8x32xf32>
    %24 = arith.addf %22, %23 : vector<8x32xf32>
    %25 = arith.truncf %24 : vector<8x32xf32> to vector<8x32xbf16>
    %c0_10 = arith.constant 0 : index
    %c0_11 = arith.constant 0 : index
    %c0_12 = arith.constant 0 : index
    %26 = vector.load %arg2[%c0_10, %c0_11, %c0_12] : memref<1x8x32xf32, #tpu.memory_space<vmem>>, vector<1x8x32xf32>
    %27 = vector.shape_cast %26 : vector<1x8x32xf32> to vector<8x32xf32>
    %28 = arith.truncf %27 : vector<8x32xf32> to vector<8x32xbf16>
    %c0_13 = arith.constant 0 : index
    %c0_14 = arith.constant 0 : index
    %29 = vector.load %arg5[%c0_13, %c0_14] : memref<32x32xbf16, #tpu.memory_space<vmem>>, vector<32x32xbf16>
    %cst_15 = arith.constant dense<0.000000e+00> : vector<8x32xf32>
    %30 = tpu.matmul %25, %29, %cst_15 {dimension_numbers = #tpu.dot_dimension_numbers<[1], [0], [0], [1], [0, 0, 1, 1], [], []>} : vector<8x32xbf16>, vector<32x32xbf16>, vector<8x32xf32> -> vector<8x32xf32>
    %c0_16 = arith.constant 0 : index
    %c0_17 = arith.constant 0 : index
    %31 = vector.load %arg6[%c0_16, %c0_17] : memref<32x32xbf16, #tpu.memory_space<vmem>>, vector<32x32xbf16>
    %cst_18 = arith.constant dense<0.000000e+00> : vector<8x32xf32>
    %32 = tpu.matmul %28, %31, %cst_18 {dimension_numbers = #tpu.dot_dimension_numbers<[1], [0], [0], [1], [0, 0, 1, 1], [], []>} : vector<8x32xbf16>, vector<32x32xbf16>, vector<8x32xf32> -> vector<8x32xf32>
    %c0_19 = arith.constant 0 : index
    %c0_20 = arith.constant 0 : index
    %33 = vector.load %arg7[%c0_19, %c0_20] : memref<32x32xbf16, #tpu.memory_space<vmem>>, vector<32x32xbf16>
    %cst_21 = arith.constant dense<0.000000e+00> : vector<8x32xf32>
    %34 = tpu.matmul %28, %33, %cst_21 {dimension_numbers = #tpu.dot_dimension_numbers<[1], [0], [0], [1], [0, 0, 1, 1], [], []>} : vector<8x32xbf16>, vector<32x32xbf16>, vector<8x32xf32> -> vector<8x32xf32>
    %c0_22 = arith.constant 0 : index
    %c0_23 = arith.constant 0 : index
    %35 = vector.load %arg9[%c0_22, %c0_23] : memref<1x32xf32, #tpu.memory_space<vmem>>, vector<1x32xf32>
    %36 = vector.broadcast %35 : vector<1x32xf32> to vector<8x32xf32>
    %37 = arith.addf %1, %36 : vector<8x32xf32>
    %38 = vector.extract_strided_slice %30 {offsets = [0, 0], sizes = [8, 8], strides = [1, 1]} : vector<8x32xf32> to vector<8x8xf32>
    %39 = arith.truncf %38 : vector<8x8xf32> to vector<8x8xbf16>
    %40 = vector.extract_strided_slice %32 {offsets = [0, 0], sizes = [8, 8], strides = [1, 1]} : vector<8x32xf32> to vector<8x8xf32>
    %41 = arith.truncf %40 : vector<8x8xf32> to vector<8x8xbf16>
    %42 = vector.extract_strided_slice %34 {offsets = [0, 0], sizes = [8, 8], strides = [1, 1]} : vector<8x32xf32> to vector<8x8xf32>
    %43 = arith.truncf %42 : vector<8x8xf32> to vector<8x8xbf16>
    %cst_24 = arith.constant dense<0.000000e+00> : vector<8x8xf32>
    %44 = tpu.matmul %39, %41, %cst_24 {dimension_numbers = #tpu.dot_dimension_numbers<[1], [1], [0], [0], [0, 0, 1, 0], [], []>} : vector<8x8xbf16>, vector<8x8xbf16>, vector<8x8xf32> -> vector<8x8xf32>
    %cst_25 = arith.constant 0.353553385 : f32
    %45 = vector.broadcast %cst_25 : f32 to vector<8x8xf32>
    %46 = arith.mulf %44, %45 : vector<8x8xf32>
    %cst_26 = arith.constant 0.000000e+00 : f32
    %47 = vector.broadcast %cst_26 : f32 to vector<8x8xf32>
    %48 = arith.cmpf one, %46, %47 : vector<8x8xf32>
    %cst_27 = arith.constant 0xFF800000 : f32
    %49 = vector.broadcast %cst_27 : f32 to vector<8x8xf32>
    %50 = arith.select %48, %46, %49 : vector<8x8xi1>, vector<8x8xf32>
    %cst_28 = arith.constant dense<0xFF800000> : vector<8xf32>
    %51 = vector.multi_reduction <maximumf>, %50, %cst_28 [1] : vector<8x8xf32> to vector<8xf32>
    %52 = vector.shape_cast %51 : vector<8xf32> to vector<8x1xf32>
    %53 = vector.broadcast %52 : vector<8x1xf32> to vector<8x8xf32>
    %54 = arith.subf %50, %53 : vector<8x8xf32>
    %55 = math.exp %54 : vector<8x8xf32>
    %cst_29 = arith.constant dense<0.000000e+00> : vector<8xf32>
    %56 = vector.multi_reduction <add>, %55, %cst_29 [1] : vector<8x8xf32> to vector<8xf32>
    %57 = vector.shape_cast %56 : vector<8xf32> to vector<8x1xf32>
    %58 = tpu.reciprocal %57 {approx = true} : vector<8x1xf32> -> vector<8x1xf32>
    %59 = vector.broadcast %58 : vector<8x1xf32> to vector<8x8xf32>
    %60 = arith.mulf %55, %59 : vector<8x8xf32>
    %61 = arith.truncf %60 : vector<8x8xf32> to vector<8x8xbf16>
    %cst_30 = arith.constant dense<0.000000e+00> : vector<8x8xf32>
    %62 = tpu.matmul %61, %43, %cst_30 {dimension_numbers = #tpu.dot_dimension_numbers<[1], [0], [0], [1], [0, 0, 1, 1], [], []>} : vector<8x8xbf16>, vector<8x8xbf16>, vector<8x8xf32> -> vector<8x8xf32>
    %63 = arith.truncf %62 : vector<8x8xf32> to vector<8x8xbf16>
    %c0_31 = arith.constant 0 : index
    %c0_32 = arith.constant 0 : index
    %64 = vector.load %arg8[%c0_31, %c0_32] : memref<32x32xbf16, #tpu.memory_space<vmem>>, vector<8x32xbf16>
    %cst_33 = arith.constant dense<0.000000e+00> : vector<8x32xf32>
    %65 = tpu.matmul %63, %64, %cst_33 {dimension_numbers = #tpu.dot_dimension_numbers<[1], [0], [0], [1], [0, 0, 1, 1], [], []>} : vector<8x8xbf16>, vector<8x32xbf16>, vector<8x32xf32> -> vector<8x32xf32>
    %66 = arith.addf %37, %65 : vector<8x32xf32>
    %67 = vector.extract_strided_slice %30 {offsets = [0, 8], sizes = [8, 8], strides = [1, 1]} : vector<8x32xf32> to vector<8x8xf32>
    %68 = arith.truncf %67 : vector<8x8xf32> to vector<8x8xbf16>
    %69 = vector.extract_strided_slice %32 {offsets = [0, 8], sizes = [8, 8], strides = [1, 1]} : vector<8x32xf32> to vector<8x8xf32>
    %70 = arith.truncf %69 : vector<8x8xf32> to vector<8x8xbf16>
    %71 = vector.extract_strided_slice %34 {offsets = [0, 8], sizes = [8, 8], strides = [1, 1]} : vector<8x32xf32> to vector<8x8xf32>
    %72 = arith.truncf %71 : vector<8x8xf32> to vector<8x8xbf16>
    %cst_34 = arith.constant dense<0.000000e+00> : vector<8x8xf32>
    %73 = tpu.matmul %68, %70, %cst_34 {dimension_numbers = #tpu.dot_dimension_numbers<[1], [1], [0], [0], [0, 0, 1, 0], [], []>} : vector<8x8xbf16>, vector<8x8xbf16>, vector<8x8xf32> -> vector<8x8xf32>
    %cst_35 = arith.constant 0.353553385 : f32
    %74 = vector.broadcast %cst_35 : f32 to vector<8x8xf32>
    %75 = arith.mulf %73, %74 : vector<8x8xf32>
    %cst_36 = arith.constant 0.000000e+00 : f32
    %76 = vector.broadcast %cst_36 : f32 to vector<8x8xf32>
    %77 = arith.cmpf one, %75, %76 : vector<8x8xf32>
    %cst_37 = arith.constant 0xFF800000 : f32
    %78 = vector.broadcast %cst_37 : f32 to vector<8x8xf32>
    %79 = arith.select %77, %75, %78 : vector<8x8xi1>, vector<8x8xf32>
    %cst_38 = arith.constant dense<0xFF800000> : vector<8xf32>
    %80 = vector.multi_reduction <maximumf>, %79, %cst_38 [1] : vector<8x8xf32> to vector<8xf32>
    %81 = vector.shape_cast %80 : vector<8xf32> to vector<8x1xf32>
    %82 = vector.broadcast %81 : vector<8x1xf32> to vector<8x8xf32>
    %83 = arith.subf %79, %82 : vector<8x8xf32>
    %84 = math.exp %83 : vector<8x8xf32>
    %cst_39 = arith.constant dense<0.000000e+00> : vector<8xf32>
    %85 = vector.multi_reduction <add>, %84, %cst_39 [1] : vector<8x8xf32> to vector<8xf32>
    %86 = vector.shape_cast %85 : vector<8xf32> to vector<8x1xf32>
    %87 = tpu.reciprocal %86 {approx = true} : vector<8x1xf32> -> vector<8x1xf32>
    %88 = vector.broadcast %87 : vector<8x1xf32> to vector<8x8xf32>
    %89 = arith.mulf %84, %88 : vector<8x8xf32>
    %90 = arith.truncf %89 : vector<8x8xf32> to vector<8x8xbf16>
    %cst_40 = arith.constant dense<0.000000e+00> : vector<8x8xf32>
    %91 = tpu.matmul %90, %72, %cst_40 {dimension_numbers = #tpu.dot_dimension_numbers<[1], [0], [0], [1], [0, 0, 1, 1], [], []>} : vector<8x8xbf16>, vector<8x8xbf16>, vector<8x8xf32> -> vector<8x8xf32>
    %92 = arith.truncf %91 : vector<8x8xf32> to vector<8x8xbf16>
    %c8 = arith.constant 8 : index
    %c0_41 = arith.constant 0 : index
    %93 = vector.load %arg8[%c8, %c0_41] : memref<32x32xbf16, #tpu.memory_space<vmem>>, vector<8x32xbf16>
    %cst_42 = arith.constant dense<0.000000e+00> : vector<8x32xf32>
    %94 = tpu.matmul %92, %93, %cst_42 {dimension_numbers = #tpu.dot_dimension_numbers<[1], [0], [0], [1], [0, 0, 1, 1], [], []>} : vector<8x8xbf16>, vector<8x32xbf16>, vector<8x32xf32> -> vector<8x32xf32>
    %95 = arith.addf %66, %94 : vector<8x32xf32>
    %96 = vector.extract_strided_slice %30 {offsets = [0, 16], sizes = [8, 8], strides = [1, 1]} : vector<8x32xf32> to vector<8x8xf32>
    %97 = arith.truncf %96 : vector<8x8xf32> to vector<8x8xbf16>
    %98 = vector.extract_strided_slice %32 {offsets = [0, 16], sizes = [8, 8], strides = [1, 1]} : vector<8x32xf32> to vector<8x8xf32>
    %99 = arith.truncf %98 : vector<8x8xf32> to vector<8x8xbf16>
    %100 = vector.extract_strided_slice %34 {offsets = [0, 16], sizes = [8, 8], strides = [1, 1]} : vector<8x32xf32> to vector<8x8xf32>
    %101 = arith.truncf %100 : vector<8x8xf32> to vector<8x8xbf16>
    %cst_43 = arith.constant dense<0.000000e+00> : vector<8x8xf32>
    %102 = tpu.matmul %97, %99, %cst_43 {dimension_numbers = #tpu.dot_dimension_numbers<[1], [1], [0], [0], [0, 0, 1, 0], [], []>} : vector<8x8xbf16>, vector<8x8xbf16>, vector<8x8xf32> -> vector<8x8xf32>
    %cst_44 = arith.constant 0.353553385 : f32
    %103 = vector.broadcast %cst_44 : f32 to vector<8x8xf32>
    %104 = arith.mulf %102, %103 : vector<8x8xf32>
    %cst_45 = arith.constant 0.000000e+00 : f32
    %105 = vector.broadcast %cst_45 : f32 to vector<8x8xf32>
    %106 = arith.cmpf one, %104, %105 : vector<8x8xf32>
    %cst_46 = arith.constant 0xFF800000 : f32
    %107 = vector.broadcast %cst_46 : f32 to vector<8x8xf32>
    %108 = arith.select %106, %104, %107 : vector<8x8xi1>, vector<8x8xf32>
    %cst_47 = arith.constant dense<0xFF800000> : vector<8xf32>
    %109 = vector.multi_reduction <maximumf>, %108, %cst_47 [1] : vector<8x8xf32> to vector<8xf32>
    %110 = vector.shape_cast %109 : vector<8xf32> to vector<8x1xf32>
    %111 = vector.broadcast %110 : vector<8x1xf32> to vector<8x8xf32>
    %112 = arith.subf %108, %111 : vector<8x8xf32>
    %113 = math.exp %112 : vector<8x8xf32>
    %cst_48 = arith.constant dense<0.000000e+00> : vector<8xf32>
    %114 = vector.multi_reduction <add>, %113, %cst_48 [1] : vector<8x8xf32> to vector<8xf32>
    %115 = vector.shape_cast %114 : vector<8xf32> to vector<8x1xf32>
    %116 = tpu.reciprocal %115 {approx = true} : vector<8x1xf32> -> vector<8x1xf32>
    %117 = vector.broadcast %116 : vector<8x1xf32> to vector<8x8xf32>
    %118 = arith.mulf %113, %117 : vector<8x8xf32>
    %119 = arith.truncf %118 : vector<8x8xf32> to vector<8x8xbf16>
    %cst_49 = arith.constant dense<0.000000e+00> : vector<8x8xf32>
    %120 = tpu.matmul %119, %101, %cst_49 {dimension_numbers = #tpu.dot_dimension_numbers<[1], [0], [0], [1], [0, 0, 1, 1], [], []>} : vector<8x8xbf16>, vector<8x8xbf16>, vector<8x8xf32> -> vector<8x8xf32>
    %121 = arith.truncf %120 : vector<8x8xf32> to vector<8x8xbf16>
    %c16 = arith.constant 16 : index
    %c0_50 = arith.constant 0 : index
    %122 = vector.load %arg8[%c16, %c0_50] : memref<32x32xbf16, #tpu.memory_space<vmem>>, vector<8x32xbf16>
    %cst_51 = arith.constant dense<0.000000e+00> : vector<8x32xf32>
    %123 = tpu.matmul %121, %122, %cst_51 {dimension_numbers = #tpu.dot_dimension_numbers<[1], [0], [0], [1], [0, 0, 1, 1], [], []>} : vector<8x8xbf16>, vector<8x32xbf16>, vector<8x32xf32> -> vector<8x32xf32>
    %124 = arith.addf %95, %123 : vector<8x32xf32>
    %125 = vector.extract_strided_slice %30 {offsets = [0, 24], sizes = [8, 8], strides = [1, 1]} : vector<8x32xf32> to vector<8x8xf32>
    %126 = arith.truncf %125 : vector<8x8xf32> to vector<8x8xbf16>
    %127 = vector.extract_strided_slice %32 {offsets = [0, 24], sizes = [8, 8], strides = [1, 1]} : vector<8x32xf32> to vector<8x8xf32>
    %128 = arith.truncf %127 : vector<8x8xf32> to vector<8x8xbf16>
    %129 = vector.extract_strided_slice %34 {offsets = [0, 24], sizes = [8, 8], strides = [1, 1]} : vector<8x32xf32> to vector<8x8xf32>
    %130 = arith.truncf %129 : vector<8x8xf32> to vector<8x8xbf16>
    %cst_52 = arith.constant dense<0.000000e+00> : vector<8x8xf32>
    %131 = tpu.matmul %126, %128, %cst_52 {dimension_numbers = #tpu.dot_dimension_numbers<[1], [1], [0], [0], [0, 0, 1, 0], [], []>} : vector<8x8xbf16>, vector<8x8xbf16>, vector<8x8xf32> -> vector<8x8xf32>
    %cst_53 = arith.constant 0.353553385 : f32
    %132 = vector.broadcast %cst_53 : f32 to vector<8x8xf32>
    %133 = arith.mulf %131, %132 : vector<8x8xf32>
    %cst_54 = arith.constant 0.000000e+00 : f32
    %134 = vector.broadcast %cst_54 : f32 to vector<8x8xf32>
    %135 = arith.cmpf one, %133, %134 : vector<8x8xf32>
    %cst_55 = arith.constant 0xFF800000 : f32
    %136 = vector.broadcast %cst_55 : f32 to vector<8x8xf32>
    %137 = arith.select %135, %133, %136 : vector<8x8xi1>, vector<8x8xf32>
    %cst_56 = arith.constant dense<0xFF800000> : vector<8xf32>
    %138 = vector.multi_reduction <maximumf>, %137, %cst_56 [1] : vector<8x8xf32> to vector<8xf32>
    %139 = vector.shape_cast %138 : vector<8xf32> to vector<8x1xf32>
    %140 = vector.broadcast %139 : vector<8x1xf32> to vector<8x8xf32>
    %141 = arith.subf %137, %140 : vector<8x8xf32>
    %142 = math.exp %141 : vector<8x8xf32>
    %cst_57 = arith.constant dense<0.000000e+00> : vector<8xf32>
    %143 = vector.multi_reduction <add>, %142, %cst_57 [1] : vector<8x8xf32> to vector<8xf32>
    %144 = vector.shape_cast %143 : vector<8xf32> to vector<8x1xf32>
    %145 = tpu.reciprocal %144 {approx = true} : vector<8x1xf32> -> vector<8x1xf32>
    %146 = vector.broadcast %145 : vector<8x1xf32> to vector<8x8xf32>
    %147 = arith.mulf %142, %146 : vector<8x8xf32>
    %148 = arith.truncf %147 : vector<8x8xf32> to vector<8x8xbf16>
    %cst_58 = arith.constant dense<0.000000e+00> : vector<8x8xf32>
    %149 = tpu.matmul %148, %130, %cst_58 {dimension_numbers = #tpu.dot_dimension_numbers<[1], [0], [0], [1], [0, 0, 1, 1], [], []>} : vector<8x8xbf16>, vector<8x8xbf16>, vector<8x8xf32> -> vector<8x8xf32>
    %150 = arith.truncf %149 : vector<8x8xf32> to vector<8x8xbf16>
    %c24 = arith.constant 24 : index
    %c0_59 = arith.constant 0 : index
    %151 = vector.load %arg8[%c24, %c0_59] : memref<32x32xbf16, #tpu.memory_space<vmem>>, vector<8x32xbf16>
    %cst_60 = arith.constant dense<0.000000e+00> : vector<8x32xf32>
    %152 = tpu.matmul %150, %151, %cst_60 {dimension_numbers = #tpu.dot_dimension_numbers<[1], [0], [0], [1], [0, 0, 1, 1], [], []>} : vector<8x8xbf16>, vector<8x32xbf16>, vector<8x32xf32> -> vector<8x32xf32>
    %153 = arith.addf %124, %152 : vector<8x32xf32>
    %c0_61 = arith.constant 0 : index
    %c0_62 = arith.constant 0 : index
    %c0_63 = arith.constant 0 : index
    %154 = vector.load %arg10[%c0_61, %c0_62, %c0_63] : memref<1x8x32xf32, #tpu.memory_space<vmem>>, vector<1x8x32xf32>
    %155 = vector.shape_cast %154 : vector<1x8x32xf32> to vector<8x32xf32>
    %156 = vector.shape_cast %153 : vector<8x32xf32> to vector<1x8x32xf32>
    tpu.vector_store %arg10[%c0_61, %c0_62, %c0_63], %156 {strides = array<i32>} : memref<1x8x32xf32, #tpu.memory_space<vmem>>, vector<1x8x32xf32>,
    return
  }
  func.func @transform_0(%arg0: i32) -> (i32, i32, i32) {
    %c0_i32 = arith.constant 0 : i32
    %c0_i32_0 = arith.constant 0 : i32
    %c0_i32_1 = arith.constant 0 : i32
    return %arg0, %c0_i32, %c0_i32_0 : i32, i32, i32
  }
  func.func @transform_1(%arg0: i32) -> (i32, i32, i32) {
    %c0_i32 = arith.constant 0 : i32
    %c0_i32_0 = arith.constant 0 : i32
    %c0_i32_1 = arith.constant 0 : i32
    return %arg0, %c0_i32, %c0_i32_0 : i32, i32, i32
  }
  func.func @transform_2(%arg0: i32) -> (i32, i32) {
    %c0_i32 = arith.constant 0 : i32
    %c0_i32_0 = arith.constant 0 : i32
    %c0_i32_1 = arith.constant 0 : i32
    return %c0_i32, %c0_i32_0 : i32, i32
  }
  func.func @transform_3(%arg0: i32) -> (i32, i32) {
    %c0_i32 = arith.constant 0 : i32
    %c0_i32_0 = arith.constant 0 : i32
    %c0_i32_1 = arith.constant 0 : i32
    return %c0_i32, %c0_i32_0 : i32, i32
  }
  func.func @transform_4(%arg0: i32) -> (i32, i32) {
    %c0_i32 = arith.constant 0 : i32
    %c0_i32_0 = arith.constant 0 : i32
    %c0_i32_1 = arith.constant 0 : i32
    return %c0_i32, %c0_i32_0 : i32, i32
  }
  func.func @transform_5(%arg0: i32) -> (i32, i32) {
    %c0_i32 = arith.constant 0 : i32
    %c0_i32_0 = arith.constant 0 : i32
    %c0_i32_1 = arith.constant 0 : i32
    return %c0_i32, %c0_i32_0 : i32, i32
  }
  func.func @transform_6(%arg0: i32) -> (i32, i32) {
    %c0_i32 = arith.constant 0 : i32
    %c0_i32_0 = arith.constant 0 : i32
    %c0_i32_1 = arith.constant 0 : i32
    return %c0_i32, %c0_i32_0 : i32, i32
  }
  func.func @transform_7(%arg0: i32) -> (i32, i32) {
    %c0_i32 = arith.constant 0 : i32
    %c0_i32_0 = arith.constant 0 : i32
    %c0_i32_1 = arith.constant 0 : i32
    return %c0_i32, %c0_i32_0 : i32, i32
  }
  func.func @transform_8(%arg0: i32) -> (i32, i32) {
    %c0_i32 = arith.constant 0 : i32
    %c0_i32_0 = arith.constant 0 : i32
    %c0_i32_1 = arith.constant 0 : i32
    return %c0_i32, %c0_i32_0 : i32, i32
  }
  func.func @transform_9(%arg0: i32) -> (i32, i32, i32) {
    %c0_i32 = arith.constant 0 : i32
    %c0_i32_0 = arith.constant 0 : i32
    %c0_i32_1 = arith.constant 0 : i32
    return %arg0, %c0_i32, %c0_i32_0 : i32, i32, i32
  }
}

module attributes {stable_mosaic.version = 11 : i64} {
  func.func @_mha_block_kernel(%arg0: i32, %arg1: memref<1x8x32xf32, #tpu.memory_space<vmem>>, %arg2: memref<1x32xf32, #tpu.memory_space<vmem>>, %arg3: memref<1x32xf32, #tpu.memory_space<vmem>>, %arg4: memref<32x32xbf16, #tpu.memory_space<vmem>>, %arg5: memref<32x32xbf16, #tpu.memory_space<vmem>>, %arg6: memref<32x32xbf16, #tpu.memory_space<vmem>>, %arg7: memref<32x32xbf16, #tpu.memory_space<vmem>>, %arg8: memref<1x32xf32, #tpu.memory_space<vmem>>, %arg9: memref<1x8x32xf32, #tpu.memory_space<vmem>>) attributes {dimension_semantics = [#tpu.dimension_semantics<parallel>], iteration_bounds = array<i64: 2>, scalar_prefetch = 0 : i64, scratch_operands = 0 : i64, tpu.core_type = #tpu.core_type<tc>, window_params = [{transform_indices = @transform_0, window_bounds = array<i64: 1, 8, 32>}, {pipeline_mode = #tpu.pipeline_mode<synchronous>, transform_indices = @transform_1, window_bounds = array<i64: 1, 32>}, {pipeline_mode = #tpu.pipeline_mode<synchronous>, transform_indices = @transform_2, window_bounds = array<i64: 1, 32>}, {pipeline_mode = #tpu.pipeline_mode<synchronous>, transform_indices = @transform_3, window_bounds = array<i64: 32, 32>}, {pipeline_mode = #tpu.pipeline_mode<synchronous>, transform_indices = @transform_4, window_bounds = array<i64: 32, 32>}, {pipeline_mode = #tpu.pipeline_mode<synchronous>, transform_indices = @transform_5, window_bounds = array<i64: 32, 32>}, {pipeline_mode = #tpu.pipeline_mode<synchronous>, transform_indices = @transform_6, window_bounds = array<i64: 32, 32>}, {pipeline_mode = #tpu.pipeline_mode<synchronous>, transform_indices = @transform_7, window_bounds = array<i64: 1, 32>}, {transform_indices = @transform_8, window_bounds = array<i64: 1, 8, 32>}]} {
    %c0 = arith.constant 0 : index
    %c0_0 = arith.constant 0 : index
    %c0_1 = arith.constant 0 : index
    %0 = vector.load %arg1[%c0, %c0_0, %c0_1] : memref<1x8x32xf32, #tpu.memory_space<vmem>>, vector<1x8x32xf32>
    %1 = vector.shape_cast %0 : vector<1x8x32xf32> to vector<8x32xf32>
    %c0_2 = arith.constant 0 : index
    %c0_3 = arith.constant 0 : index
    %2 = vector.load %arg2[%c0_2, %c0_3] : memref<1x32xf32, #tpu.memory_space<vmem>>, vector<1x32xf32>
    %c0_4 = arith.constant 0 : index
    %c0_5 = arith.constant 0 : index
    %3 = vector.load %arg3[%c0_4, %c0_5] : memref<1x32xf32, #tpu.memory_space<vmem>>, vector<1x32xf32>
    %cst = arith.constant dense<0.000000e+00> : vector<8xf32>
    %4 = vector.multi_reduction <add>, %1, %cst [1] : vector<8x32xf32> to vector<8xf32>
    %5 = vector.shape_cast %4 : vector<8xf32> to vector<8x1xf32>
    %cst_6 = arith.constant 3.200000e+01 : f32
    %6 = vector.broadcast %cst_6 : f32 to vector<8x1xf32>
    %7 = arith.divf %5, %6 : vector<8x1xf32>
    %8 = vector.broadcast %7 : vector<8x1xf32> to vector<8x32xf32>
    %9 = arith.subf %1, %8 : vector<8x32xf32>
    %10 = arith.mulf %9, %9 : vector<8x32xf32>
    %cst_7 = arith.constant dense<0.000000e+00> : vector<8xf32>
    %11 = vector.multi_reduction <add>, %10, %cst_7 [1] : vector<8x32xf32> to vector<8xf32>
    %12 = vector.shape_cast %11 : vector<8xf32> to vector<8x1xf32>
    %cst_8 = arith.constant 3.100000e+01 : f32
    %13 = vector.broadcast %cst_8 : f32 to vector<8x1xf32>
    %14 = arith.divf %12, %13 : vector<8x1xf32>
    %15 = math.sqrt %14 : vector<8x1xf32>
    %cst_9 = arith.constant 9.99999997E-7 : f32
    %16 = vector.broadcast %cst_9 : f32 to vector<8x1xf32>
    %17 = arith.addf %15, %16 : vector<8x1xf32>
    %18 = tpu.reciprocal %17 {approx = true} : vector<8x1xf32> -> vector<8x1xf32>
    %19 = vector.broadcast %2 : vector<1x32xf32> to vector<8x32xf32>
    %20 = arith.mulf %19, %9 : vector<8x32xf32>
    %21 = vector.broadcast %18 : vector<8x1xf32> to vector<8x32xf32>
    %22 = arith.mulf %20, %21 : vector<8x32xf32>
    %23 = vector.broadcast %3 : vector<1x32xf32> to vector<8x32xf32>
    %24 = arith.addf %22, %23 : vector<8x32xf32>
    %25 = arith.truncf %24 : vector<8x32xf32> to vector<8x32xbf16>
    %c0_10 = arith.constant 0 : index
    %c0_11 = arith.constant 0 : index
    %26 = vector.load %arg4[%c0_10, %c0_11] : memref<32x32xbf16, #tpu.memory_space<vmem>>, vector<32x32xbf16>
    %cst_12 = arith.constant dense<0.000000e+00> : vector<8x32xf32>
    %27 = tpu.matmul %25, %26, %cst_12 {dimension_numbers = #tpu.dot_dimension_numbers<[1], [0], [0], [1], [0, 0, 1, 1], [], []>} : vector<8x32xbf16>, vector<32x32xbf16>, vector<8x32xf32> -> vector<8x32xf32>
    %c0_13 = arith.constant 0 : index
    %c0_14 = arith.constant 0 : index
    %28 = vector.load %arg5[%c0_13, %c0_14] : memref<32x32xbf16, #tpu.memory_space<vmem>>, vector<32x32xbf16>
    %cst_15 = arith.constant dense<0.000000e+00> : vector<8x32xf32>
    %29 = tpu.matmul %25, %28, %cst_15 {dimension_numbers = #tpu.dot_dimension_numbers<[1], [0], [0], [1], [0, 0, 1, 1], [], []>} : vector<8x32xbf16>, vector<32x32xbf16>, vector<8x32xf32> -> vector<8x32xf32>
    %c0_16 = arith.constant 0 : index
    %c0_17 = arith.constant 0 : index
    %30 = vector.load %arg6[%c0_16, %c0_17] : memref<32x32xbf16, #tpu.memory_space<vmem>>, vector<32x32xbf16>
    %cst_18 = arith.constant dense<0.000000e+00> : vector<8x32xf32>
    %31 = tpu.matmul %25, %30, %cst_18 {dimension_numbers = #tpu.dot_dimension_numbers<[1], [0], [0], [1], [0, 0, 1, 1], [], []>} : vector<8x32xbf16>, vector<32x32xbf16>, vector<8x32xf32> -> vector<8x32xf32>
    %32 = tpu.iota {dimensions = array<i32: 0>} : vector<8x8xi32>
    %33 = tpu.iota {dimensions = array<i32: 1>} : vector<8x8xi32>
    %34 = arith.cmpi sle, %33, %32 : vector<8x8xi32>
    %c0_19 = arith.constant 0 : index
    %c0_20 = arith.constant 0 : index
    %35 = vector.load %arg8[%c0_19, %c0_20] : memref<1x32xf32, #tpu.memory_space<vmem>>, vector<1x32xf32>
    %36 = vector.broadcast %35 : vector<1x32xf32> to vector<8x32xf32>
    %37 = arith.addf %1, %36 : vector<8x32xf32>
    %38 = vector.extract_strided_slice %27 {offsets = [0, 0], sizes = [8, 8], strides = [1, 1]} : vector<8x32xf32> to vector<8x8xf32>
    %39 = arith.truncf %38 : vector<8x8xf32> to vector<8x8xbf16>
    %40 = vector.extract_strided_slice %29 {offsets = [0, 0], sizes = [8, 8], strides = [1, 1]} : vector<8x32xf32> to vector<8x8xf32>
    %41 = arith.truncf %40 : vector<8x8xf32> to vector<8x8xbf16>
    %42 = vector.extract_strided_slice %31 {offsets = [0, 0], sizes = [8, 8], strides = [1, 1]} : vector<8x32xf32> to vector<8x8xf32>
    %43 = arith.truncf %42 : vector<8x8xf32> to vector<8x8xbf16>
    %cst_21 = arith.constant dense<0.000000e+00> : vector<8x8xf32>
    %44 = tpu.matmul %39, %41, %cst_21 {dimension_numbers = #tpu.dot_dimension_numbers<[1], [1], [0], [0], [0, 0, 1, 0], [], []>} : vector<8x8xbf16>, vector<8x8xbf16>, vector<8x8xf32> -> vector<8x8xf32>
    %cst_22 = arith.constant 0.353553385 : f32
    %45 = vector.broadcast %cst_22 : f32 to vector<8x8xf32>
    %46 = arith.mulf %44, %45 : vector<8x8xf32>
    %cst_23 = arith.constant 0.000000e+00 : f32
    %47 = vector.broadcast %cst_23 : f32 to vector<8x8xf32>
    %48 = arith.cmpf one, %46, %47 : vector<8x8xf32>
    %49 = arith.andi %48, %34 : vector<8x8xi1>
    %cst_24 = arith.constant 0xFF800000 : f32
    %50 = vector.broadcast %cst_24 : f32 to vector<8x8xf32>
    %51 = arith.select %49, %46, %50 : vector<8x8xi1>, vector<8x8xf32>
    %cst_25 = arith.constant dense<0xFF800000> : vector<8xf32>
    %52 = vector.multi_reduction <maximumf>, %51, %cst_25 [1] : vector<8x8xf32> to vector<8xf32>
    %53 = vector.shape_cast %52 : vector<8xf32> to vector<8x1xf32>
    %54 = vector.broadcast %53 : vector<8x1xf32> to vector<8x8xf32>
    %55 = arith.subf %51, %54 : vector<8x8xf32>
    %56 = math.exp %55 : vector<8x8xf32>
    %cst_26 = arith.constant dense<0.000000e+00> : vector<8xf32>
    %57 = vector.multi_reduction <add>, %56, %cst_26 [1] : vector<8x8xf32> to vector<8xf32>
    %58 = vector.shape_cast %57 : vector<8xf32> to vector<8x1xf32>
    %59 = tpu.reciprocal %58 {approx = true} : vector<8x1xf32> -> vector<8x1xf32>
    %60 = vector.broadcast %59 : vector<8x1xf32> to vector<8x8xf32>
    %61 = arith.mulf %56, %60 : vector<8x8xf32>
    %62 = arith.truncf %61 : vector<8x8xf32> to vector<8x8xbf16>
    %cst_27 = arith.constant dense<0.000000e+00> : vector<8x8xf32>
    %63 = tpu.matmul %62, %43, %cst_27 {dimension_numbers = #tpu.dot_dimension_numbers<[1], [0], [0], [1], [0, 0, 1, 1], [], []>} : vector<8x8xbf16>, vector<8x8xbf16>, vector<8x8xf32> -> vector<8x8xf32>
    %64 = arith.truncf %63 : vector<8x8xf32> to vector<8x8xbf16>
    %c0_28 = arith.constant 0 : index
    %c0_29 = arith.constant 0 : index
    %65 = vector.load %arg7[%c0_28, %c0_29] : memref<32x32xbf16, #tpu.memory_space<vmem>>, vector<8x32xbf16>
    %cst_30 = arith.constant dense<0.000000e+00> : vector<8x32xf32>
    %66 = tpu.matmul %64, %65, %cst_30 {dimension_numbers = #tpu.dot_dimension_numbers<[1], [0], [0], [1], [0, 0, 1, 1], [], []>} : vector<8x8xbf16>, vector<8x32xbf16>, vector<8x32xf32> -> vector<8x32xf32>
    %67 = arith.addf %37, %66 : vector<8x32xf32>
    %68 = vector.extract_strided_slice %27 {offsets = [0, 8], sizes = [8, 8], strides = [1, 1]} : vector<8x32xf32> to vector<8x8xf32>
    %69 = arith.truncf %68 : vector<8x8xf32> to vector<8x8xbf16>
    %70 = vector.extract_strided_slice %29 {offsets = [0, 8], sizes = [8, 8], strides = [1, 1]} : vector<8x32xf32> to vector<8x8xf32>
    %71 = arith.truncf %70 : vector<8x8xf32> to vector<8x8xbf16>
    %72 = vector.extract_strided_slice %31 {offsets = [0, 8], sizes = [8, 8], strides = [1, 1]} : vector<8x32xf32> to vector<8x8xf32>
    %73 = arith.truncf %72 : vector<8x8xf32> to vector<8x8xbf16>
    %cst_31 = arith.constant dense<0.000000e+00> : vector<8x8xf32>
    %74 = tpu.matmul %69, %71, %cst_31 {dimension_numbers = #tpu.dot_dimension_numbers<[1], [1], [0], [0], [0, 0, 1, 0], [], []>} : vector<8x8xbf16>, vector<8x8xbf16>, vector<8x8xf32> -> vector<8x8xf32>
    %cst_32 = arith.constant 0.353553385 : f32
    %75 = vector.broadcast %cst_32 : f32 to vector<8x8xf32>
    %76 = arith.mulf %74, %75 : vector<8x8xf32>
    %cst_33 = arith.constant 0.000000e+00 : f32
    %77 = vector.broadcast %cst_33 : f32 to vector<8x8xf32>
    %78 = arith.cmpf one, %76, %77 : vector<8x8xf32>
    %79 = arith.andi %78, %34 : vector<8x8xi1>
    %cst_34 = arith.constant 0xFF800000 : f32
    %80 = vector.broadcast %cst_34 : f32 to vector<8x8xf32>
    %81 = arith.select %79, %76, %80 : vector<8x8xi1>, vector<8x8xf32>
    %cst_35 = arith.constant dense<0xFF800000> : vector<8xf32>
    %82 = vector.multi_reduction <maximumf>, %81, %cst_35 [1] : vector<8x8xf32> to vector<8xf32>
    %83 = vector.shape_cast %82 : vector<8xf32> to vector<8x1xf32>
    %84 = vector.broadcast %83 : vector<8x1xf32> to vector<8x8xf32>
    %85 = arith.subf %81, %84 : vector<8x8xf32>
    %86 = math.exp %85 : vector<8x8xf32>
    %cst_36 = arith.constant dense<0.000000e+00> : vector<8xf32>
    %87 = vector.multi_reduction <add>, %86, %cst_36 [1] : vector<8x8xf32> to vector<8xf32>
    %88 = vector.shape_cast %87 : vector<8xf32> to vector<8x1xf32>
    %89 = tpu.reciprocal %88 {approx = true} : vector<8x1xf32> -> vector<8x1xf32>
    %90 = vector.broadcast %89 : vector<8x1xf32> to vector<8x8xf32>
    %91 = arith.mulf %86, %90 : vector<8x8xf32>
    %92 = arith.truncf %91 : vector<8x8xf32> to vector<8x8xbf16>
    %cst_37 = arith.constant dense<0.000000e+00> : vector<8x8xf32>
    %93 = tpu.matmul %92, %73, %cst_37 {dimension_numbers = #tpu.dot_dimension_numbers<[1], [0], [0], [1], [0, 0, 1, 1], [], []>} : vector<8x8xbf16>, vector<8x8xbf16>, vector<8x8xf32> -> vector<8x8xf32>
    %94 = arith.truncf %93 : vector<8x8xf32> to vector<8x8xbf16>
    %c8 = arith.constant 8 : index
    %c0_38 = arith.constant 0 : index
    %95 = vector.load %arg7[%c8, %c0_38] : memref<32x32xbf16, #tpu.memory_space<vmem>>, vector<8x32xbf16>
    %cst_39 = arith.constant dense<0.000000e+00> : vector<8x32xf32>
    %96 = tpu.matmul %94, %95, %cst_39 {dimension_numbers = #tpu.dot_dimension_numbers<[1], [0], [0], [1], [0, 0, 1, 1], [], []>} : vector<8x8xbf16>, vector<8x32xbf16>, vector<8x32xf32> -> vector<8x32xf32>
    %97 = arith.addf %67, %96 : vector<8x32xf32>
    %98 = vector.extract_strided_slice %27 {offsets = [0, 16], sizes = [8, 8], strides = [1, 1]} : vector<8x32xf32> to vector<8x8xf32>
    %99 = arith.truncf %98 : vector<8x8xf32> to vector<8x8xbf16>
    %100 = vector.extract_strided_slice %29 {offsets = [0, 16], sizes = [8, 8], strides = [1, 1]} : vector<8x32xf32> to vector<8x8xf32>
    %101 = arith.truncf %100 : vector<8x8xf32> to vector<8x8xbf16>
    %102 = vector.extract_strided_slice %31 {offsets = [0, 16], sizes = [8, 8], strides = [1, 1]} : vector<8x32xf32> to vector<8x8xf32>
    %103 = arith.truncf %102 : vector<8x8xf32> to vector<8x8xbf16>
    %cst_40 = arith.constant dense<0.000000e+00> : vector<8x8xf32>
    %104 = tpu.matmul %99, %101, %cst_40 {dimension_numbers = #tpu.dot_dimension_numbers<[1], [1], [0], [0], [0, 0, 1, 0], [], []>} : vector<8x8xbf16>, vector<8x8xbf16>, vector<8x8xf32> -> vector<8x8xf32>
    %cst_41 = arith.constant 0.353553385 : f32
    %105 = vector.broadcast %cst_41 : f32 to vector<8x8xf32>
    %106 = arith.mulf %104, %105 : vector<8x8xf32>
    %cst_42 = arith.constant 0.000000e+00 : f32
    %107 = vector.broadcast %cst_42 : f32 to vector<8x8xf32>
    %108 = arith.cmpf one, %106, %107 : vector<8x8xf32>
    %109 = arith.andi %108, %34 : vector<8x8xi1>
    %cst_43 = arith.constant 0xFF800000 : f32
    %110 = vector.broadcast %cst_43 : f32 to vector<8x8xf32>
    %111 = arith.select %109, %106, %110 : vector<8x8xi1>, vector<8x8xf32>
    %cst_44 = arith.constant dense<0xFF800000> : vector<8xf32>
    %112 = vector.multi_reduction <maximumf>, %111, %cst_44 [1] : vector<8x8xf32> to vector<8xf32>
    %113 = vector.shape_cast %112 : vector<8xf32> to vector<8x1xf32>
    %114 = vector.broadcast %113 : vector<8x1xf32> to vector<8x8xf32>
    %115 = arith.subf %111, %114 : vector<8x8xf32>
    %116 = math.exp %115 : vector<8x8xf32>
    %cst_45 = arith.constant dense<0.000000e+00> : vector<8xf32>
    %117 = vector.multi_reduction <add>, %116, %cst_45 [1] : vector<8x8xf32> to vector<8xf32>
    %118 = vector.shape_cast %117 : vector<8xf32> to vector<8x1xf32>
    %119 = tpu.reciprocal %118 {approx = true} : vector<8x1xf32> -> vector<8x1xf32>
    %120 = vector.broadcast %119 : vector<8x1xf32> to vector<8x8xf32>
    %121 = arith.mulf %116, %120 : vector<8x8xf32>
    %122 = arith.truncf %121 : vector<8x8xf32> to vector<8x8xbf16>
    %cst_46 = arith.constant dense<0.000000e+00> : vector<8x8xf32>
    %123 = tpu.matmul %122, %103, %cst_46 {dimension_numbers = #tpu.dot_dimension_numbers<[1], [0], [0], [1], [0, 0, 1, 1], [], []>} : vector<8x8xbf16>, vector<8x8xbf16>, vector<8x8xf32> -> vector<8x8xf32>
    %124 = arith.truncf %123 : vector<8x8xf32> to vector<8x8xbf16>
    %c16 = arith.constant 16 : index
    %c0_47 = arith.constant 0 : index
    %125 = vector.load %arg7[%c16, %c0_47] : memref<32x32xbf16, #tpu.memory_space<vmem>>, vector<8x32xbf16>
    %cst_48 = arith.constant dense<0.000000e+00> : vector<8x32xf32>
    %126 = tpu.matmul %124, %125, %cst_48 {dimension_numbers = #tpu.dot_dimension_numbers<[1], [0], [0], [1], [0, 0, 1, 1], [], []>} : vector<8x8xbf16>, vector<8x32xbf16>, vector<8x32xf32> -> vector<8x32xf32>
    %127 = arith.addf %97, %126 : vector<8x32xf32>
    %128 = vector.extract_strided_slice %27 {offsets = [0, 24], sizes = [8, 8], strides = [1, 1]} : vector<8x32xf32> to vector<8x8xf32>
    %129 = arith.truncf %128 : vector<8x8xf32> to vector<8x8xbf16>
    %130 = vector.extract_strided_slice %29 {offsets = [0, 24], sizes = [8, 8], strides = [1, 1]} : vector<8x32xf32> to vector<8x8xf32>
    %131 = arith.truncf %130 : vector<8x8xf32> to vector<8x8xbf16>
    %132 = vector.extract_strided_slice %31 {offsets = [0, 24], sizes = [8, 8], strides = [1, 1]} : vector<8x32xf32> to vector<8x8xf32>
    %133 = arith.truncf %132 : vector<8x8xf32> to vector<8x8xbf16>
    %cst_49 = arith.constant dense<0.000000e+00> : vector<8x8xf32>
    %134 = tpu.matmul %129, %131, %cst_49 {dimension_numbers = #tpu.dot_dimension_numbers<[1], [1], [0], [0], [0, 0, 1, 0], [], []>} : vector<8x8xbf16>, vector<8x8xbf16>, vector<8x8xf32> -> vector<8x8xf32>
    %cst_50 = arith.constant 0.353553385 : f32
    %135 = vector.broadcast %cst_50 : f32 to vector<8x8xf32>
    %136 = arith.mulf %134, %135 : vector<8x8xf32>
    %cst_51 = arith.constant 0.000000e+00 : f32
    %137 = vector.broadcast %cst_51 : f32 to vector<8x8xf32>
    %138 = arith.cmpf one, %136, %137 : vector<8x8xf32>
    %139 = arith.andi %138, %34 : vector<8x8xi1>
    %cst_52 = arith.constant 0xFF800000 : f32
    %140 = vector.broadcast %cst_52 : f32 to vector<8x8xf32>
    %141 = arith.select %139, %136, %140 : vector<8x8xi1>, vector<8x8xf32>
    %cst_53 = arith.constant dense<0xFF800000> : vector<8xf32>
    %142 = vector.multi_reduction <maximumf>, %141, %cst_53 [1] : vector<8x8xf32> to vector<8xf32>
    %143 = vector.shape_cast %142 : vector<8xf32> to vector<8x1xf32>
    %144 = vector.broadcast %143 : vector<8x1xf32> to vector<8x8xf32>
    %145 = arith.subf %141, %144 : vector<8x8xf32>
    %146 = math.exp %145 : vector<8x8xf32>
    %cst_54 = arith.constant dense<0.000000e+00> : vector<8xf32>
    %147 = vector.multi_reduction <add>, %146, %cst_54 [1] : vector<8x8xf32> to vector<8xf32>
    %148 = vector.shape_cast %147 : vector<8xf32> to vector<8x1xf32>
    %149 = tpu.reciprocal %148 {approx = true} : vector<8x1xf32> -> vector<8x1xf32>
    %150 = vector.broadcast %149 : vector<8x1xf32> to vector<8x8xf32>
    %151 = arith.mulf %146, %150 : vector<8x8xf32>
    %152 = arith.truncf %151 : vector<8x8xf32> to vector<8x8xbf16>
    %cst_55 = arith.constant dense<0.000000e+00> : vector<8x8xf32>
    %153 = tpu.matmul %152, %133, %cst_55 {dimension_numbers = #tpu.dot_dimension_numbers<[1], [0], [0], [1], [0, 0, 1, 1], [], []>} : vector<8x8xbf16>, vector<8x8xbf16>, vector<8x8xf32> -> vector<8x8xf32>
    %154 = arith.truncf %153 : vector<8x8xf32> to vector<8x8xbf16>
    %c24 = arith.constant 24 : index
    %c0_56 = arith.constant 0 : index
    %155 = vector.load %arg7[%c24, %c0_56] : memref<32x32xbf16, #tpu.memory_space<vmem>>, vector<8x32xbf16>
    %cst_57 = arith.constant dense<0.000000e+00> : vector<8x32xf32>
    %156 = tpu.matmul %154, %155, %cst_57 {dimension_numbers = #tpu.dot_dimension_numbers<[1], [0], [0], [1], [0, 0, 1, 1], [], []>} : vector<8x8xbf16>, vector<8x32xbf16>, vector<8x32xf32> -> vector<8x32xf32>
    %157 = arith.addf %127, %156 : vector<8x32xf32>
    %c0_58 = arith.constant 0 : index
    %c0_59 = arith.constant 0 : index
    %c0_60 = arith.constant 0 : index
    %158 = vector.load %arg9[%c0_58, %c0_59, %c0_60] : memref<1x8x32xf32, #tpu.memory_space<vmem>>, vector<1x8x32xf32>
    %159 = vector.shape_cast %158 : vector<1x8x32xf32> to vector<8x32xf32>
    %160 = vector.shape_cast %157 : vector<8x32xf32> to vector<1x8x32xf32>
    tpu.vector_store %arg9[%c0_58, %c0_59, %c0_60], %160 {strides = array<i32>} : memref<1x8x32xf32, #tpu.memory_space<vmem>>, vector<1x8x32xf32>,
    return
  }
  func.func @transform_0(%arg0: i32) -> (i32, i32, i32) {
    %c0_i32 = arith.constant 0 : i32
    %c0_i32_0 = arith.constant 0 : i32
    %c0_i32_1 = arith.constant 0 : i32
    return %arg0, %c0_i32, %c0_i32_0 : i32, i32, i32
  }
  func.func @transform_1(%arg0: i32) -> (i32, i32) {
    %c0_i32 = arith.constant 0 : i32
    %c0_i32_0 = arith.constant 0 : i32
    %c0_i32_1 = arith.constant 0 : i32
    return %c0_i32, %c0_i32_0 : i32, i32
  }
  func.func @transform_2(%arg0: i32) -> (i32, i32) {
    %c0_i32 = arith.constant 0 : i32
    %c0_i32_0 = arith.constant 0 : i32
    %c0_i32_1 = arith.constant 0 : i32
    return %c0_i32, %c0_i32_0 : i32, i32
  }
  func.func @transform_3(%arg0: i32) -> (i32, i32) {
    %c0_i32 = arith.constant 0 : i32
    %c0_i32_0 = arith.constant 0 : i32
    %c0_i32_1 = arith.constant 0 : i32
    return %c0_i32, %c0_i32_0 : i32, i32
  }
  func.func @transform_4(%arg0: i32) -> (i32, i32) {
    %c0_i32 = arith.constant 0 : i32
    %c0_i32_0 = arith.constant 0 : i32
    %c0_i32_1 = arith.constant 0 : i32
    return %c0_i32, %c0_i32_0 : i32, i32
  }
  func.func @transform_5(%arg0: i32) -> (i32, i32) {
    %c0_i32 = arith.constant 0 : i32
    %c0_i32_0 = arith.constant 0 : i32
    %c0_i32_1 = arith.constant 0 : i32
    return %c0_i32, %c0_i32_0 : i32, i32
  }
  func.func @transform_6(%arg0: i32) -> (i32, i32) {
    %c0_i32 = arith.constant 0 : i32
    %c0_i32_0 = arith.constant 0 : i32
    %c0_i32_1 = arith.constant 0 : i32
    return %c0_i32, %c0_i32_0 : i32, i32
  }
  func.func @transform_7(%arg0: i32) -> (i32, i32) {
    %c0_i32 = arith.constant 0 : i32
    %c0_i32_0 = arith.constant 0 : i32
    %c0_i32_1 = arith.constant 0 : i32
    return %c0_i32, %c0_i32_0 : i32, i32
  }
  func.func @transform_8(%arg0: i32) -> (i32, i32, i32) {
    %c0_i32 = arith.constant 0 : i32
    %c0_i32_0 = arith.constant 0 : i32
    %c0_i32_1 = arith.constant 0 : i32
    return %arg0, %c0_i32, %c0_i32_0 : i32, i32, i32
  }
}

</mosaic_0001>

<llo_original>
// kernel: decoder_layer.3
$region0: #{decoder_layer.3}
  #allocation0 [shape = 'u32[]', space=smem, size = 0x4, offset = 0x4, fixed_abs, tag = 'smem constant byte address 0x4 - core index']
  #allocation1 [shape = 'u32[144,128]{1,0:T(1,128)}', space=vmem, size = 0x12000, scoped, tag = 'internal scratch']
  %s0 = inlined_call_operand.vmem [shape: f32[2,8,32], index: 0, kind: input, shape index: {}]
  %s1 = inlined_call_operand.vmem [shape: f32[1,32], index: 1, kind: input, shape index: {}]
  %s2 = inlined_call_operand.vmem [shape: f32[1,32], index: 2, kind: input, shape index: {}]
  %s3 = inlined_call_operand.vmem [shape: bf16[32,32], index: 3, kind: input, shape index: {}]
  %s4 = inlined_call_operand.vmem [shape: bf16[32,32], index: 4, kind: input, shape index: {}]
  %s5 = inlined_call_operand.vmem [shape: bf16[32,32], index: 5, kind: input, shape index: {}]
  %s6 = inlined_call_operand.vmem [shape: bf16[32,32], index: 6, kind: input, shape index: {}]
  %s7 = inlined_call_operand.vmem [shape: f32[1,32], index: 7, kind: input, shape index: {}]
  %s8 = inlined_call_operand.vmem [shape: f32[2,8,32], index: 8, kind: output, shape index: {}]
  %s9 = sld [smem:[#allocation0]]
  $region65: #{decoder_layer.3} parent=0
    _
  %s11 = ssub.s32 1, %s9
  %s12 = scalar_select 0, %s11, %s9
  loop: start=0, step=1, limit=4
  $region2: #{decoder_layer.3} parent=0 // loop_pre_header
    _
  $region3: #{decoder_layer.3} parent=0 // loop_header
    %s14 = sphi 0, %s18
    %p15 = scmp.ge.s32.totalorder %s14, 4
    %s24 = sphi 0, %s26
    %s27 = sphi 0, %s24
    %s28 = sphi 0, %s27
    %s44 = sphi 0, %s28
    %s48 = sphi 0, %s48
    %s50 = sphi 0, %s48
    %s51 = sphi 0, %s50
    %s65 = sphi 0, %s51
    %s69 = sphi 0, %s69
    %s71 = sphi 0, %s69
    %s72 = sphi 0, %s71
    %s86 = sphi 0, %s72
    %s90 = sphi 0, %s90
    %s92 = sphi 0, %s90
    %s93 = sphi 0, %s92
    %s107 = sphi 0, %s93
    %s111 = sphi 0, %s111
    %s113 = sphi 0, %s111
    %s114 = sphi 0, %s113
    %s128 = sphi 0, %s114
    %s132 = sphi 0, %s132
    %s134 = sphi 0, %s132
    %s135 = sphi 0, %s134
    %s149 = sphi 0, %s135
    %s153 = sphi 0, %s153
    %s155 = sphi 0, %s153
    %s156 = sphi 0, %s155
    %s170 = sphi 0, %s156
    %s174 = sphi 0, %s174
    %s176 = sphi 0, %s174
    %s177 = sphi 0, %s176
    %s191 = sphi 0, %s177
    %s197 = sphi 0, %s199
    %s200 = sphi 0, %s197
    %s201 = sphi 0, %s200
    %s217 = sphi 0, %s201
  $region4: #{decoder_layer.3} parent=0 // loop_header_branch
    %17 = sbr.rel (%p15) target = $region8
  $region5: #{decoder_layer.3} parent=0 // loop_body
    %s19 = ssub.s32 %s14, 1
    %s20 = ssub.s32 %s14, 2
    %s21 = sadd.s32 %s14, 1
    %s22 = ssub.s32 %s14, %s21
    %p23 = scmp.eq.s32.totalorder %s22, 0
    %s25 = sadd.s32 %s24, 1
    %s26 = scalar_select %p23, %s24, %s25
    %p29 = pneg %p23
    %p30 = scmp.eq.s32.totalorder %s14, 1
    %p31 = por %p29, %p30
    %p32 = scmp.ne.s32.totalorder %s24, %s27
    %p33 = scmp.eq.s32.totalorder %s14, 0
    %p34 = por %p32, %p33
    %p35 = scmp.ne.s32.totalorder %s24, %s27
    %p36 = scmp.eq.s32.totalorder %s19, 1
    %p37 = por %p35, %p36
    %p38 = scmp.ne.s32.totalorder %s27, %s28
    %p39 = scmp.eq.s32.totalorder %s19, 0
    %p40 = por %p38, %p39
    %p41 = scmp.ne.s32.totalorder %s27, %s28
    %p42 = scmp.eq.s32.totalorder %s20, 1
    %p43 = por %p41, %p42
    %p45 = scmp.ne.s32.totalorder %s28, %s44
    %p46 = scmp.eq.s32.totalorder %s20, 0
    %p47 = por %p45, %p46
    %s49 = sadd.s32 %s48, 1
    %p52 = scmp.eq.s32.totalorder %s14, 1
    %p53 = scmp.ne.s32.totalorder %s48, %s50
    %p54 = scmp.eq.s32.totalorder %s14, 0
    %p55 = por %p53, %p54
    %p56 = scmp.ne.s32.totalorder %s48, %s50
    %p57 = scmp.eq.s32.totalorder %s19, 1
    %p58 = por %p56, %p57
    %p59 = scmp.ne.s32.totalorder %s50, %s51
    %p60 = scmp.eq.s32.totalorder %s19, 0
    %p61 = por %p59, %p60
    %p62 = scmp.ne.s32.totalorder %s50, %s51
    %p63 = scmp.eq.s32.totalorder %s20, 1
    %p64 = por %p62, %p63
    %p66 = scmp.ne.s32.totalorder %s51, %s65
    %p67 = scmp.eq.s32.totalorder %s20, 0
    %p68 = por %p66, %p67
    %s70 = sadd.s32 %s69, 1
    %p73 = scmp.eq.s32.totalorder %s14, 1
    %p74 = scmp.ne.s32.totalorder %s69, %s71
    %p75 = scmp.eq.s32.totalorder %s14, 0
    %p76 = por %p74, %p75
    %p77 = scmp.ne.s32.totalorder %s69, %s71
    %p78 = scmp.eq.s32.totalorder %s19, 1
    %p79 = por %p77, %p78
    %p80 = scmp.ne.s32.totalorder %s71, %s72
    %p81 = scmp.eq.s32.totalorder %s19, 0
    %p82 = por %p80, %p81
    %p83 = scmp.ne.s32.totalorder %s71, %s72
    %p84 = scmp.eq.s32.totalorder %s20, 1
    %p85 = por %p83, %p84
    %p87 = scmp.ne.s32.totalorder %s72, %s86
    %p88 = scmp.eq.s32.totalorder %s20, 0
    %p89 = por %p87, %p88
    %s91 = sadd.s32 %s90, 1
    %p94 = scmp.eq.s32.totalorder %s14, 1
    %p95 = scmp.ne.s32.totalorder %s90, %s92
    %p96 = scmp.eq.s32.totalorder %s14, 0
    %p97 = por %p95, %p96
    %p98 = scmp.ne.s32.totalorder %s90, %s92
    %p99 = scmp.eq.s32.totalorder %s19, 1
    %p100 = por %p98, %p99
    %p101 = scmp.ne.s32.totalorder %s92, %s93
    %p102 = scmp.eq.s32.totalorder %s19, 0
    %p103 = por %p101, %p102
    %p104 = scmp.ne.s32.totalorder %s92, %s93
    %p105 = scmp.eq.s32.totalorder %s20, 1
    %p106 = por %p104, %p105
    %p108 = scmp.ne.s32.totalorder %s93, %s107
    %p109 = scmp.eq.s32.totalorder %s20, 0
    %p110 = por %p108, %p109
    %s112 = sadd.s32 %s111, 1
    %p115 = scmp.eq.s32.totalorder %s14, 1
    %p116 = scmp.ne.s32.totalorder %s111, %s113
    %p117 = scmp.eq.s32.totalorder %s14, 0
    %p118 = por %p116, %p117
    %p119 = scmp.ne.s32.totalorder %s111, %s113
    %p120 = scmp.eq.s32.totalorder %s19, 1
    %p121 = por %p119, %p120
    %p122 = scmp.ne.s32.totalorder %s113, %s114
    %p123 = scmp.eq.s32.totalorder %s19, 0
    %p124 = por %p122, %p123
    %p125 = scmp.ne.s32.totalorder %s113, %s114
    %p126 = scmp.eq.s32.totalorder %s20, 1
    %p127 = por %p125, %p126
    %p129 = scmp.ne.s32.totalorder %s114, %s128
    %p130 = scmp.eq.s32.totalorder %s20, 0
    %p131 = por %p129, %p130
    %s133 = sadd.s32 %s132, 1
    %p136 = scmp.eq.s32.totalorder %s14, 1
    %p137 = scmp.ne.s32.totalorder %s132, %s134
    %p138 = scmp.eq.s32.totalorder %s14, 0
    %p139 = por %p137, %p138
    %p140 = scmp.ne.s32.totalorder %s132, %s134
    %p141 = scmp.eq.s32.totalorder %s19, 1
    %p142 = por %p140, %p141
    %p143 = scmp.ne.s32.totalorder %s134, %s135
    %p144 = scmp.eq.s32.totalorder %s19, 0
    %p145 = por %p143, %p144
    %p146 = scmp.ne.s32.totalorder %s134, %s135
    %p147 = scmp.eq.s32.totalorder %s20, 1
    %p148 = por %p146, %p147
    %p150 = scmp.ne.s32.totalorder %s135, %s149
    %p151 = scmp.eq.s32.totalorder %s20, 0
    %p152 = por %p150, %p151
    %s154 = sadd.s32 %s153, 1
    %p157 = scmp.eq.s32.totalorder %s14, 1
    %p158 = scmp.ne.s32.totalorder %s153, %s155
    %p159 = scmp.eq.s32.totalorder %s14, 0
    %p160 = por %p158, %p159
    %p161 = scmp.ne.s32.totalorder %s153, %s155
    %p162 = scmp.eq.s32.totalorder %s19, 1
    %p163 = por %p161, %p162
    %p164 = scmp.ne.s32.totalorder %s155, %s156
    %p165 = scmp.eq.s32.totalorder %s19, 0
    %p166 = por %p164, %p165
    %p167 = scmp.ne.s32.totalorder %s155, %s156
    %p168 = scmp.eq.s32.totalorder %s20, 1
    %p169 = por %p167, %p168
    %p171 = scmp.ne.s32.totalorder %s156, %s170
    %p172 = scmp.eq.s32.totalorder %s20, 0
    %p173 = por %p171, %p172
    %s175 = sadd.s32 %s174, 1
    %p178 = scmp.eq.s32.totalorder %s14, 1
    %p179 = scmp.ne.s32.totalorder %s174, %s176
    %p180 = scmp.eq.s32.totalorder %s14, 0
    %p181 = por %p179, %p180
    %p182 = scmp.ne.s32.totalorder %s174, %s176
    %p183 = scmp.eq.s32.totalorder %s19, 1
    %p184 = por %p182, %p183
    %p185 = scmp.ne.s32.totalorder %s176, %s177
    %p186 = scmp.eq.s32.totalorder %s19, 0
    %p187 = por %p185, %p186
    %p188 = scmp.ne.s32.totalorder %s176, %s177
    %p189 = scmp.eq.s32.totalorder %s20, 1
    %p190 = por %p188, %p189
    %p192 = scmp.ne.s32.totalorder %s177, %s191
    %p193 = scmp.eq.s32.totalorder %s20, 0
    %p194 = por %p192, %p193
    %s195 = ssub.s32 %s14, %s21
    %p196 = scmp.eq.s32.totalorder %s195, 0
    %s198 = sadd.s32 %s197, 1
    %s199 = scalar_select %p196, %s197, %s198
    %p202 = pneg %p196
    %p203 = scmp.eq.s32.totalorder %s14, 1
    %p204 = por %p202, %p203
    %p205 = scmp.ne.s32.totalorder %s197, %s200
    %p206 = scmp.eq.s32.totalorder %s14, 0
    %p207 = por %p205, %p206
    %p208 = scmp.ne.s32.totalorder %s197, %s200
    %p209 = scmp.eq.s32.totalorder %s19, 1
    %p210 = por %p208, %p209
    %p211 = scmp.ne.s32.totalorder %s200, %s201
    %p212 = scmp.eq.s32.totalorder %s19, 0
    %p213 = por %p211, %p212
    %p214 = scmp.ne.s32.totalorder %s200, %s201
    %p215 = scmp.eq.s32.totalorder %s20, 1
    %p216 = por %p214, %p215
    %p218 = scmp.ne.s32.totalorder %s201, %s217
    %p219 = scmp.eq.s32.totalorder %s20, 0
    %p220 = por %p218, %p219
    %p221 = scmp.le.s32.totalorder 1, %s14
    %p222 = scmp.lt.s32.totalorder %s14, 3
    %p223 = pnand %p221, %p222
    %p224 = pneg %p223
    // Predicated region
    $region9: #{decoder_layer.3} parent=5 // pred_check
      _
    $region10: #{decoder_layer.3} parent=5 // pred_check_branch
      %226 = sbr.rel (%p223) target = $region12
    $region11: #{decoder_layer.3} parent=5 // pred_region
      %s227 = ssub.s32 %s14, 1
      // Predicated region
      $region13: #{decoder_layer.3} parent=11 // pred_check
        %p228 = pneg %p61
      $region14: #{decoder_layer.3} parent=11 // pred_check_branch
        %230 = sbr.rel (%p228) target = $region16
      $region15: #{decoder_layer.3} parent=11 // pred_region
        _
      $region16: #{decoder_layer.3} parent=11 // pred_fallthru
        _
      // Predicated region
      $region17: #{decoder_layer.3} parent=11 // pred_check
        %p231 = pneg %p82
      $region18: #{decoder_layer.3} parent=11 // pred_check_branch
        %233 = sbr.rel (%p231) target = $region20
      $region19: #{decoder_layer.3} parent=11 // pred_region
        _
      $region20: #{decoder_layer.3} parent=11 // pred_fallthru
        _
      // Predicated region
      $region21: #{decoder_layer.3} parent=11 // pred_check
        %p234 = pneg %p103
      $region22: #{decoder_layer.3} parent=11 // pred_check_branch
        %236 = sbr.rel (%p234) target = $region24
      $region23: #{decoder_layer.3} parent=11 // pred_region
        _
      $region24: #{decoder_layer.3} parent=11 // pred_fallthru
        _
      // Predicated region
      $region25: #{decoder_layer.3} parent=11 // pred_check
        %p237 = pneg %p124
      $region26: #{decoder_layer.3} parent=11 // pred_check_branch
        %239 = sbr.rel (%p237) target = $region28
      $region27: #{decoder_layer.3} parent=11 // pred_region
        _
      $region28: #{decoder_layer.3} parent=11 // pred_fallthru
        _
      // Predicated region
      $region29: #{decoder_layer.3} parent=11 // pred_check
        %p240 = pneg %p145
      $region30: #{decoder_layer.3} parent=11 // pred_check_branch
        %242 = sbr.rel (%p240) target = $region32
      $region31: #{decoder_layer.3} parent=11 // pred_region
        _
      $region32: #{decoder_layer.3} parent=11 // pred_fallthru
        _
      // Predicated region
      $region33: #{decoder_layer.3} parent=11 // pred_check
        %p243 = pneg %p166
      $region34: #{decoder_layer.3} parent=11 // pred_check_branch
        %245 = sbr.rel (%p243) target = $region36
      $region35: #{decoder_layer.3} parent=11 // pred_region
        _
      $region36: #{decoder_layer.3} parent=11 // pred_fallthru
        _
      // Predicated region
      $region37: #{decoder_layer.3} parent=11 // pred_check
        %p246 = pneg %p187
      $region38: #{decoder_layer.3} parent=11 // pred_check_branch
        %248 = sbr.rel (%p246) target = $region40
      $region39: #{decoder_layer.3} parent=11 // pred_region
        _
      $region40: #{decoder_layer.3} parent=11 // pred_fallthru
        _
    $region12: #{decoder_layer.3} parent=5 // pred_fallthru
      _
    %p249 = scmp.lt.s32.totalorder %s14, 2
    // Predicated region
    $region41: #{decoder_layer.3} parent=5 // pred_check
      %p250 = pneg %p249
    $region42: #{decoder_layer.3} parent=5 // pred_check_branch
      %252 = sbr.rel (%p250) target = $region44
    $region43: #{decoder_layer.3} parent=5 // pred_region
      // Predicated region
      $region45: #{decoder_layer.3} parent=43 // pred_check
        %p253 = pneg %p34
      $region46: #{decoder_layer.3} parent=43 // pred_check_branch
        %255 = sbr.rel (%p253) target = $region48
      $region47: #{decoder_layer.3} parent=43 // pred_region
        %p256 = scmp.lt.s32.totalorder %s14, 1
        %s257 = scalar_select %p256, %s14, 1
        %s258 = smul.addr %s257, 8
        %s259 = scalar_lea.vmem %s0, %s258
      $region48: #{decoder_layer.3} parent=43 // pred_fallthru
        _
    $region44: #{decoder_layer.3} parent=5 // pred_fallthru
      _
    %p260 = scmp.le.s32.totalorder 1, %s14
    %p261 = scmp.lt.s32.totalorder %s14, 3
    %p262 = pnand %p260, %p261
    %p263 = pneg %p262
    // Predicated region
    $region49: #{decoder_layer.3} parent=5 // pred_check
      _
    $region50: #{decoder_layer.3} parent=5 // pred_check_branch
      %265 = sbr.rel (%p262) target = $region52
    $region51: #{decoder_layer.3} parent=5 // pred_region
      %s266 = ssub.s32 %s14, 1
      %p267 = scmp.lt.s32.totalorder %s19, 1
      %s268 = scalar_select %p267, %s19, 1
      %s269 = smul.addr %s268, 8
      %s270 = scalar_lea.vmem %s0, %s269
      %p271 = pneg %p40
      %p272 = pneg %p37
      %p273 = pneg %p61
      %p274 = pneg %p58
      %p275 = pneg %p82
      %p276 = pneg %p79
      %p277 = pneg %p103
      %p278 = pneg %p100
      %p279 = pneg %p124
      %p280 = pneg %p121
      %p281 = pneg %p145
      %p282 = pneg %p142
      %p283 = pneg %p166
      %p284 = pneg %p163
      %p285 = pneg %p187
      %p286 = pneg %p184
      %p287 = pneg %p213
      %p288 = pneg %p210
      %p289 = scmp.lt.s32.totalorder %s19, 1
      %s290 = scalar_select %p289, %s19, 1
      %s291 = smul.addr %s290, 8
      %s292 = scalar_lea.vmem %s8, %s291
      %p293 = scmp.lt.s32.totalorder %s19, 1
      %s294 = scalar_select %p293, %s19, 1
      %s295 = smul.addr %s294, 8
      %s296 = scalar_lea.vmem %s0, %s295
      %p297 = scmp.lt.s32.totalorder %s19, 1
      %s298 = scalar_select %p297, %s19, 1
      %s299 = smul.addr %s298, 8
      %s300 = scalar_lea.vmem %s8, %s299
      %v302 = vld [vmem:[%s296] sm:$0xff]
      %v303 = vld [vmem:[%s1] sm:$0x1]
      %v304 = vld [vmem:[%s2] sm:$0x1]
      %vm305 = vcmask 261120
      %v306 = vsel %vm305, %v302, 0.0
      %307 = vadd.xlane.f32.xlu0 %v306
      %v308 = vpop.xlane.xlu0 %307
      %v309 = vrcp.pop 32.0
      %v310 = vmul.f32 %v308, %v309
      %v311 = vsub.f32 %v302, %v310
      %v312 = vmul.f32 %v311, %v311
      %v313 = vsel %vm305, %v312, 0.0
      %314 = vadd.xlane.f32.xlu0 %v313
      %v315 = vpop.xlane.xlu0 %314
      %v316 = vrcp.pop 31.0
      %v317 = vmul.f32 %v315, %v316
      %v318 = vrsqrt.pop %v317
      %v319 = vmul.f32 %v317, %v318
      %vm320 = vcmp.eq.f32.partialorder %v317, inf
      %v321 = vsel %vm320, %v317, %v319
      %vm322 = vcmp.eq.f32.partialorder %v317, 0.0
      %v323 = vand.u32 %v317, 2147483648
      %v324 = vsel %vm322, %v323, %v321
      %v325 = vadd.f32 %v324, 1e-06
      %v326 = vrcp.pop %v325
      %v328 = vlaneseq
      %v329 = vshrl.u32 %v328, 7
      %v330 = vsub.s32 0, %v329
      %v331 = vrot.slane %v303, %v330
      %v333 = vmul.f32 %v331, %v311
      %v334 = vmul.f32 %v333, %v326
      %v336 = vlaneseq
      %v337 = vshrl.u32 %v336, 7
      %v338 = vsub.s32 0, %v337
      %v339 = vrot.slane %v304, %v338
      %v341 = vadd.f32 %v334, %v339
      %v342 = vpack.c.bf16 %v341, %v341
      %v343 = vld [vmem:[%s3] sm:$0xf]
      %v344 = vld [vmem:[%s3 + $0x4] sm:$0xf]
      %v345 = vld [vmem:[%s3 + $0x8] sm:$0xf]
      %v346 = vld [vmem:[%s3 + $0xc] sm:$0xf]
      %v351 = vunpack.c.l.b16 %v343
      %v352 = vunpack.c.l.b16 %v344
      %v353 = vunpack.c.l.b16 %v345
      %v354 = vunpack.c.l.b16 %v346
      %v355 = vpack.c.b16 %v352, %v351
      %v356 = vpack.c.b16 %v354, %v353
      %v360 = vsel %vm305, %v342, 0
      %362 = vmatprep.subr.bf16.mxu0 0
      %363 = vmatpush1.bf16.msra.mxu0 %v355
      %364 = vmatprep.subr.bf16.mxu0 0
      %365 = vmatpush1.bf16.msra.mxu0 %v356
      %366 = vmatprep.subr.bf16.mxu0 0
      %367 = vmatpush1.bf16.msra.mxu0 0
      %368 = vmatprep.subr.bf16.mxu0 0
      %369 = vmatpush1.bf16.msra.mxu0 0
      %370 = vmatprep.subr.bf16.mxu0 0
      %371 = vmatpush1.bf16.msra.mxu0 0
      %372 = vmatprep.subr.bf16.mxu0 0
      %373 = vmatpush1.bf16.msra.mxu0 0
      %374 = vmatprep.subr.bf16.mxu0 0
      %375 = vmatpush1.bf16.msra.mxu0 0
      %376 = vmatprep.subr.bf16.mxu0 0
      %377 = vmatpush1.bf16.msra.mxu0 0
      %378 = vmatprep.subr.bf16.mxu0 0
      %379 = vmatpush1.bf16.msra.mxu0 0
      %380 = vmatprep.subr.bf16.mxu0 0
      %381 = vmatpush1.bf16.msra.mxu0 0
      %382 = vmatprep.subr.bf16.mxu0 0
      %383 = vmatpush1.bf16.msra.mxu0 0
      %384 = vmatprep.subr.bf16.mxu0 0
      %385 = vmatpush1.bf16.msra.mxu0 0
      %386 = vmatprep.subr.bf16.mxu0 0
      %387 = vmatpush1.bf16.msra.mxu0 0
      %388 = vmatprep.subr.bf16.mxu0 0
      %389 = vmatpush1.bf16.msra.mxu0 0
      %390 = vmatprep.subr.bf16.mxu0 0
      %391 = vmatpush1.bf16.msra.mxu0 0
      %392 = vmatprep.subr.bf16.mxu0 0
      %393 = vmatpush1.bf16.msra.mxu0 0
      %394 = vmatprep.mubr.bf16.mxu0 0
      %395 = vmatmul.mubr.bf16.gmra.mrb[0].mxu0 %v360
      %v396 = vpop.f32.mrb[0].mxu0
      %v397 = vadd.f32 0.0, %v396
      %v398 = vpop.f32.mrb[0].mxu0
      %v399 = vpop.f32.mrb[0].mxu0
      %v400 = vpop.f32.mrb[0].mxu0
      %401 = vdwg.mxu0
      %v402 = vld [vmem:[%s4] sm:$0xf]
      %v403 = vld [vmem:[%s4 + $0x4] sm:$0xf]
      %v404 = vld [vmem:[%s4 + $0x8] sm:$0xf]
      %v405 = vld [vmem:[%s4 + $0xc] sm:$0xf]
      %v410 = vunpack.c.l.b16 %v402
      %v411 = vunpack.c.l.b16 %v403
      %v412 = vunpack.c.l.b16 %v404
      %v413 = vunpack.c.l.b16 %v405
      %v414 = vpack.c.b16 %v411, %v410
      %v415 = vpack.c.b16 %v413, %v412
      %418 = vmatprep.subr.bf16.mxu0 0
      %419 = vmatpush1.bf16.msra.mxu0 %v414
      %420 = vmatprep.subr.bf16.mxu0 0
      %421 = vmatpush1.bf16.msra.mxu0 %v415
      %422 = vmatprep.subr.bf16.mxu0 0
      %423 = vmatpush1.bf16.msra.mxu0 0
      %424 = vmatprep.subr.bf16.mxu0 0
      %425 = vmatpush1.bf16.msra.mxu0 0
      %426 = vmatprep.subr.bf16.mxu0 0
      %427 = vmatpush1.bf16.msra.mxu0 0
      %428 = vmatprep.subr.bf16.mxu0 0
      %429 = vmatpush1.bf16.msra.mxu0 0
      %430 = vmatprep.subr.bf16.mxu0 0
      %431 = vmatpush1.bf16.msra.mxu0 0
      %432 = vmatprep.subr.bf16.mxu0 0
      %433 = vmatpush1.bf16.msra.mxu0 0
      %434 = vmatprep.subr.bf16.mxu0 0
      %435 = vmatpush1.bf16.msra.mxu0 0
      %436 = vmatprep.subr.bf16.mxu0 0
      %437 = vmatpush1.bf16.msra.mxu0 0
      %438 = vmatprep.subr.bf16.mxu0 0
      %439 = vmatpush1.bf16.msra.mxu0 0
      %440 = vmatprep.subr.bf16.mxu0 0
      %441 = vmatpush1.bf16.msra.mxu0 0
      %442 = vmatprep.subr.bf16.mxu0 0
      %443 = vmatpush1.bf16.msra.mxu0 0
      %444 = vmatprep.subr.bf16.mxu0 0
      %445 = vmatpush1.bf16.msra.mxu0 0
      %446 = vmatprep.subr.bf16.mxu0 0
      %447 = vmatpush1.bf16.msra.mxu0 0
      %448 = vmatprep.subr.bf16.mxu0 0
      %449 = vmatpush1.bf16.msra.mxu0 0
      %450 = vmatprep.mubr.bf16.mxu0 0
      %451 = vmatmul.mubr.bf16.gmra.mrb[0].mxu0 %v360
      %v452 = vpop.f32.mrb[0].mxu0
      %v453 = vadd.f32 0.0, %v452
      %v454 = vpop.f32.mrb[0].mxu0
      %v455 = vpop.f32.mrb[0].mxu0
      %v456 = vpop.f32.mrb[0].mxu0
      %457 = vdwg.mxu0
      %v458 = vld [vmem:[%s5] sm:$0xf]
      %v459 = vld [vmem:[%s5 + $0x4] sm:$0xf]
      %v460 = vld [vmem:[%s5 + $0x8] sm:$0xf]
      %v461 = vld [vmem:[%s5 + $0xc] sm:$0xf]
      %v466 = vunpack.c.l.b16 %v458
      %v467 = vunpack.c.l.b16 %v459
      %v468 = vunpack.c.l.b16 %v460
      %v469 = vunpack.c.l.b16 %v461
      %v470 = vpack.c.b16 %v467, %v466
      %v471 = vpack.c.b16 %v469, %v468
      %474 = vmatprep.subr.bf16.mxu0 0
      %475 = vmatpush1.bf16.msra.mxu0 %v470
      %476 = vmatprep.subr.bf16.mxu0 0
      %477 = vmatpush1.bf16.msra.mxu0 %v471
      %478 = vmatprep.subr.bf16.mxu0 0
      %479 = vmatpush1.bf16.msra.mxu0 0
      %480 = vmatprep.subr.bf16.mxu0 0
      %481 = vmatpush1.bf16.msra.mxu0 0
      %482 = vmatprep.subr.bf16.mxu0 0
      %483 = vmatpush1.bf16.msra.mxu0 0
      %484 = vmatprep.subr.bf16.mxu0 0
      %485 = vmatpush1.bf16.msra.mxu0 0
      %486 = vmatprep.subr.bf16.mxu0 0
      %487 = vmatpush1.bf16.msra.mxu0 0
      %488 = vmatprep.subr.bf16.mxu0 0
      %489 = vmatpush1.bf16.msra.mxu0 0
      %490 = vmatprep.subr.bf16.mxu0 0
      %491 = vmatpush1.bf16.msra.mxu0 0
      %492 = vmatprep.subr.bf16.mxu0 0
      %493 = vmatpush1.bf16.msra.mxu0 0
      %494 = vmatprep.subr.bf16.mxu0 0
      %495 = vmatpush1.bf16.msra.mxu0 0
      %496 = vmatprep.subr.bf16.mxu0 0
      %497 = vmatpush1.bf16.msra.mxu0 0
      %498 = vmatprep.subr.bf16.mxu0 0
      %499 = vmatpush1.bf16.msra.mxu0 0
      %500 = vmatprep.subr.bf16.mxu0 0
      %501 = vmatpush1.bf16.msra.mxu0 0
      %502 = vmatprep.subr.bf16.mxu0 0
      %503 = vmatpush1.bf16.msra.mxu0 0
      %504 = vmatprep.subr.bf16.mxu0 0
      %505 = vmatpush1.bf16.msra.mxu0 0
      %506 = vmatprep.mubr.bf16.mxu0 0
      %507 = vmatmul.mubr.bf16.gmra.mrb[0].mxu0 %v360
      %v508 = vpop.f32.mrb[0].mxu0
      %v509 = vadd.f32 0.0, %v508
      %v510 = vpop.f32.mrb[0].mxu0
      %v511 = vpop.f32.mrb[0].mxu0
      %v512 = vpop.f32.mrb[0].mxu0
      %513 = vdwg.mxu0
      %v514 = vlaneseq
      %v515 = vshrl.u32 %v514, 7
      %v516 = vlaneseq
      %v517 = vand.u32 %v516, 127
      %vm518 = vcmp.le.s32.totalorder %v517, %v515
      %v519 = vld [vmem:[%s7] sm:$0x1]
      %v521 = vlaneseq
      %v522 = vshrl.u32 %v521, 7
      %v523 = vsub.s32 0, %v522
      %v524 = vrot.slane %v519, %v523
      %v526 = vadd.f32 %v302, %v524
      %v527 = vpack.c.bf16 %v397, %v397
      %v528 = vpack.c.bf16 %v453, %v453
      %v529 = vpack.c.bf16 %v509, %v509
      %vm530 = vcmask 64512
      %v532 = vsel %vm530, %v527, 0
      %v535 = vsel %vm530, %v528, 0
      %537 = vmatprep.subr.bf16.mxu0 0
      %538 = vmatpush1.bf16.xpose.msra.mxu0 %v535
      %539 = vmatprep.subr.bf16.mxu0 0
      %540 = vmatpush1.bf16.xpose.msra.mxu0 0
      %541 = vmatprep.subr.bf16.mxu0 0
      %542 = vmatpush1.bf16.xpose.msra.mxu0 0
      %543 = vmatprep.subr.bf16.mxu0 0
      %544 = vmatpush1.bf16.xpose.msra.mxu0 0
      %545 = vmatprep.subr.bf16.mxu0 0
      %546 = vmatpush1.bf16.xpose.msra.mxu0 0
      %547 = vmatprep.subr.bf16.mxu0 0
      %548 = vmatpush1.bf16.xpose.msra.mxu0 0
      %549 = vmatprep.subr.bf16.mxu0 0
      %550 = vmatpush1.bf16.xpose.msra.mxu0 0
      %551 = vmatprep.subr.bf16.mxu0 0
      %552 = vmatpush1.bf16.xpose.msra.mxu0 0
      %553 = vmatprep.subr.bf16.mxu0 0
      %554 = vmatpush1.bf16.xpose.msra.mxu0 0
      %555 = vmatprep.subr.bf16.mxu0 0
      %556 = vmatpush1.bf16.xpose.msra.mxu0 0
      %557 = vmatprep.subr.bf16.mxu0 0
      %558 = vmatpush1.bf16.xpose.msra.mxu0 0
      %559 = vmatprep.subr.bf16.mxu0 0
      %560 = vmatpush1.bf16.xpose.msra.mxu0 0
      %561 = vmatprep.subr.bf16.mxu0 0
      %562 = vmatpush1.bf16.xpose.msra.mxu0 0
      %563 = vmatprep.subr.bf16.mxu0 0
      %564 = vmatpush1.bf16.xpose.msra.mxu0 0
      %565 = vmatprep.subr.bf16.mxu0 0
      %566 = vmatpush1.bf16.xpose.msra.mxu0 0
      %567 = vmatprep.subr.bf16.mxu0 0
      %568 = vmatpush1.bf16.xpose.msra.mxu0 0
      %569 = vmatprep.mubr.bf16.mxu0 0
      %570 = vmatmul.mubr.bf16.gmra.mrb[0].mxu0 %v532
      %v571 = vpop.f32.mrb[0].mxu0
      %v572 = vadd.f32 0.0, %v571
      %v573 = vpop.f32.mrb[0].mxu0
      %v574 = vpop.f32.mrb[0].mxu0
      %v575 = vpop.f32.mrb[0].mxu0
      %576 = vdwg.mxu0
      %v577 = vmul.f32 %v572, 0.35355338
      %vm578 = vcmp.ne.f32.partialorder %v577, 0.0
      %vm579 = vmand %vm578, %vm518
      %v580 = vsel %vm579, %v577, -inf
      %v581 = vsel %vm530, %v580, -inf
      %582 = vmax.xlane.f32.xlu0 %v581
      %v583 = vpop.xlane.xlu0 %582
      %v584 = vsub.f32 %v580, %v583
      %v585 = vmul.f32 %v584, 1.442695
      %v586 = vpow.pop %v585
      %v587 = vsel %vm530, %v586, 0.0
      %588 = vadd.xlane.f32.xlu0 %v587
      %v589 = vpop.xlane.xlu0 %588
      %v590 = vrcp.pop %v589
      %v591 = vmul.f32 %v586, %v590
      %v592 = vpack.c.bf16 %v591, %v591
      %v594 = vsel %vm530, %v592, 0
      %vm596 = vcmask 1043456
      %v598 = vsel %vm596, %v529, 0
      %600 = vmatprep.subr.bf16.mxu0 0
      %601 = vmatpush1.bf16.msra.mxu0 %v598
      %602 = vmatprep.subr.bf16.mxu0 0
      %603 = vmatpush1.bf16.msra.mxu0 0
      %604 = vmatprep.subr.bf16.mxu0 0
      %605 = vmatpush1.bf16.msra.mxu0 0
      %606 = vmatprep.subr.bf16.mxu0 0
      %607 = vmatpush1.bf16.msra.mxu0 0
      %608 = vmatprep.subr.bf16.mxu0 0
      %609 = vmatpush1.bf16.msra.mxu0 0
      %610 = vmatprep.subr.bf16.mxu0 0
      %611 = vmatpush1.bf16.msra.mxu0 0
      %612 = vmatprep.subr.bf16.mxu0 0
      %613 = vmatpush1.bf16.msra.mxu0 0
      %614 = vmatprep.subr.bf16.mxu0 0
      %615 = vmatpush1.bf16.msra.mxu0 0
      %616 = vmatprep.subr.bf16.mxu0 0
      %617 = vmatpush1.bf16.msra.mxu0 0
      %618 = vmatprep.subr.bf16.mxu0 0
      %619 = vmatpush1.bf16.msra.mxu0 0
      %620 = vmatprep.subr.bf16.mxu0 0
      %621 = vmatpush1.bf16.msra.mxu0 0
      %622 = vmatprep.subr.bf16.mxu0 0
      %623 = vmatpush1.bf16.msra.mxu0 0
      %624 = vmatprep.subr.bf16.mxu0 0
      %625 = vmatpush1.bf16.msra.mxu0 0
      %626 = vmatprep.subr.bf16.mxu0 0
      %627 = vmatpush1.bf16.msra.mxu0 0
      %628 = vmatprep.subr.bf16.mxu0 0
      %629 = vmatpush1.bf16.msra.mxu0 0
      %630 = vmatprep.subr.bf16.mxu0 0
      %631 = vmatpush1.bf16.msra.mxu0 0
      %632 = vmatprep.mubr.bf16.mxu0 0
      %633 = vmatmul.mubr.bf16.gmra.mrb[0].mxu0 %v594
      %v634 = vpop.f32.mrb[0].mxu0
      %v635 = vadd.f32 0.0, %v634
      %v636 = vpop.f32.mrb[0].mxu0
      %v637 = vpop.f32.mrb[0].mxu0
      %v638 = vpop.f32.mrb[0].mxu0
      %639 = vdwg.mxu0
      %v640 = vpack.c.bf16 %v635, %v635
      %v641 = vld [vmem:[%s6] sm:$0xf]
      %v643 = vsel %vm530, %v640, 0
      %v646 = vsel %vm596, %v641, 0
      %648 = vmatprep.subr.bf16.mxu0 0
      %649 = vmatpush1.bf16.msra.mxu0 %v646
      %650 = vmatprep.subr.bf16.mxu0 0
      %651 = vmatpush1.bf16.msra.mxu0 0
      %652 = vmatprep.subr.bf16.mxu0 0
      %653 = vmatpush1.bf16.msra.mxu0 0
      %654 = vmatprep.subr.bf16.mxu0 0
      %655 = vmatpush1.bf16.msra.mxu0 0
      %656 = vmatprep.subr.bf16.mxu0 0
      %657 = vmatpush1.bf16.msra.mxu0 0
      %658 = vmatprep.subr.bf16.mxu0 0
      %659 = vmatpush1.bf16.msra.mxu0 0
      %660 = vmatprep.subr.bf16.mxu0 0
      %661 = vmatpush1.bf16.msra.mxu0 0
      %662 = vmatprep.subr.bf16.mxu0 0
      %663 = vmatpush1.bf16.msra.mxu0 0
      %664 = vmatprep.subr.bf16.mxu0 0
      %665 = vmatpush1.bf16.msra.mxu0 0
      %666 = vmatprep.subr.bf16.mxu0 0
      %667 = vmatpush1.bf16.msra.mxu0 0
      %668 = vmatprep.subr.bf16.mxu0 0
      %669 = vmatpush1.bf16.msra.mxu0 0
      %670 = vmatprep.subr.bf16.mxu0 0
      %671 = vmatpush1.bf16.msra.mxu0 0
      %672 = vmatprep.subr.bf16.mxu0 0
      %673 = vmatpush1.bf16.msra.mxu0 0
      %674 = vmatprep.subr.bf16.mxu0 0
      %675 = vmatpush1.bf16.msra.mxu0 0
      %676 = vmatprep.subr.bf16.mxu0 0
      %677 = vmatpush1.bf16.msra.mxu0 0
      %678 = vmatprep.subr.bf16.mxu0 0
      %679 = vmatpush1.bf16.msra.mxu0 0
      %680 = vmatprep.mubr.bf16.mxu0 0
      %681 = vmatmul.mubr.bf16.gmra.mrb[0].mxu0 %v643
      %v682 = vpop.f32.mrb[0].mxu0
      %v683 = vadd.f32 0.0, %v682
      %v684 = vpop.f32.mrb[0].mxu0
      %v685 = vpop.f32.mrb[0].mxu0
      %v686 = vpop.f32.mrb[0].mxu0
      %687 = vdwg.mxu0
      %v688 = vadd.f32 %v526, %v683
      %690 = vrot.lane.b32.xlu0 %v527, 120
      %v691 = vpop.permute.xlu0 %690
      %693 = vrot.lane.b32.xlu0 %v528, 120
      %v694 = vpop.permute.xlu0 %693
      %v696 = vsel %vm530, %v691, 0
      %v699 = vsel %vm530, %v694, 0
      %701 = vmatprep.subr.bf16.mxu0 0
      %702 = vmatpush1.bf16.xpose.msra.mxu0 %v699
      %703 = vmatprep.subr.bf16.mxu0 0
      %704 = vmatpush1.bf16.xpose.msra.mxu0 0
      %705 = vmatprep.subr.bf16.mxu0 0
      %706 = vmatpush1.bf16.xpose.msra.mxu0 0
      %707 = vmatprep.subr.bf16.mxu0 0
      %708 = vmatpush1.bf16.xpose.msra.mxu0 0
      %709 = vmatprep.subr.bf16.mxu0 0
      %710 = vmatpush1.bf16.xpose.msra.mxu0 0
      %711 = vmatprep.subr.bf16.mxu0 0
      %712 = vmatpush1.bf16.xpose.msra.mxu0 0
      %713 = vmatprep.subr.bf16.mxu0 0
      %714 = vmatpush1.bf16.xpose.msra.mxu0 0
      %715 = vmatprep.subr.bf16.mxu0 0
      %716 = vmatpush1.bf16.xpose.msra.mxu0 0
      %717 = vmatprep.subr.bf16.mxu0 0
      %718 = vmatpush1.bf16.xpose.msra.mxu0 0
      %719 = vmatprep.subr.bf16.mxu0 0
      %720 = vmatpush1.bf16.xpose.msra.mxu0 0
      %721 = vmatprep.subr.bf16.mxu0 0
      %722 = vmatpush1.bf16.xpose.msra.mxu0 0
      %723 = vmatprep.subr.bf16.mxu0 0
      %724 = vmatpush1.bf16.xpose.msra.mxu0 0
      %725 = vmatprep.subr.bf16.mxu0 0
      %726 = vmatpush1.bf16.xpose.msra.mxu0 0
      %727 = vmatprep.subr.bf16.mxu0 0
      %728 = vmatpush1.bf16.xpose.msra.mxu0 0
      %729 = vmatprep.subr.bf16.mxu0 0
      %730 = vmatpush1.bf16.xpose.msra.mxu0 0
      %731 = vmatprep.subr.bf16.mxu0 0
      %732 = vmatpush1.bf16.xpose.msra.mxu0 0
      %733 = vmatprep.mubr.bf16.mxu0 0
      %734 = vmatmul.mubr.bf16.gmra.mrb[0].mxu0 %v696
      %v735 = vpop.f32.mrb[0].mxu0
      %v736 = vadd.f32 0.0, %v735
      %v737 = vpop.f32.mrb[0].mxu0
      %v738 = vpop.f32.mrb[0].mxu0
      %v739 = vpop.f32.mrb[0].mxu0
      %740 = vdwg.mxu0
      %v741 = vmul.f32 %v736, 0.35355338
      %vm742 = vcmp.ne.f32.partialorder %v741, 0.0
      %vm743 = vmand %vm742, %vm518
      %v744 = vsel %vm743, %v741, -inf
      %v745 = vsel %vm530, %v744, -inf
      %746 = vmax.xlane.f32.xlu0 %v745
      %v747 = vpop.xlane.xlu0 %746
      %v748 = vsub.f32 %v744, %v747
      %v749 = vmul.f32 %v748, 1.442695
      %v750 = vpow.pop %v749
      %v751 = vsel %vm530, %v750, 0.0
      %752 = vadd.xlane.f32.xlu0 %v751
      %v753 = vpop.xlane.xlu0 %752
      %v754 = vrcp.pop %v753
      %v755 = vmul.f32 %v750, %v754
      %v756 = vpack.c.bf16 %v755, %v755
      %758 = vrot.lane.b32.xlu0 %v529, 120
      %v759 = vpop.permute.xlu0 %758
      %v761 = vsel %vm530, %v756, 0
      %v764 = vsel %vm596, %v759, 0
      %766 = vmatprep.subr.bf16.mxu0 0
      %767 = vmatpush1.bf16.msra.mxu0 %v764
      %768 = vmatprep.subr.bf16.mxu0 0
      %769 = vmatpush1.bf16.msra.mxu0 0
      %770 = vmatprep.subr.bf16.mxu0 0
      %771 = vmatpush1.bf16.msra.mxu0 0
      %772 = vmatprep.subr.bf16.mxu0 0
      %773 = vmatpush1.bf16.msra.mxu0 0
      %774 = vmatprep.subr.bf16.mxu0 0
      %775 = vmatpush1.bf16.msra.mxu0 0
      %776 = vmatprep.subr.bf16.mxu0 0
      %777 = vmatpush1.bf16.msra.mxu0 0
      %778 = vmatprep.subr.bf16.mxu0 0
      %779 = vmatpush1.bf16.msra.mxu0 0
      %780 = vmatprep.subr.bf16.mxu0 0
      %781 = vmatpush1.bf16.msra.mxu0 0
      %782 = vmatprep.subr.bf16.mxu0 0
      %783 = vmatpush1.bf16.msra.mxu0 0
      %784 = vmatprep.subr.bf16.mxu0 0
      %785 = vmatpush1.bf16.msra.mxu0 0
      %786 = vmatprep.subr.bf16.mxu0 0
      %787 = vmatpush1.bf16.msra.mxu0 0
      %788 = vmatprep.subr.bf16.mxu0 0
      %789 = vmatpush1.bf16.msra.mxu0 0
      %790 = vmatprep.subr.bf16.mxu0 0
      %791 = vmatpush1.bf16.msra.mxu0 0
      %792 = vmatprep.subr.bf16.mxu0 0
      %793 = vmatpush1.bf16.msra.mxu0 0
      %794 = vmatprep.subr.bf16.mxu0 0
      %795 = vmatpush1.bf16.msra.mxu0 0
      %796 = vmatprep.subr.bf16.mxu0 0
      %797 = vmatpush1.bf16.msra.mxu0 0
      %798 = vmatprep.mubr.bf16.mxu0 0
      %799 = vmatmul.mubr.bf16.gmra.mrb[0].mxu0 %v761
      %v800 = vpop.f32.mrb[0].mxu0
      %v801 = vadd.f32 0.0, %v800
      %v802 = vpop.f32.mrb[0].mxu0
      %v803 = vpop.f32.mrb[0].mxu0
      %v804 = vpop.f32.mrb[0].mxu0
      %805 = vdwg.mxu0
      %v806 = vpack.c.bf16 %v801, %v801
      %v807 = vld [vmem:[%s6 + $0x4] sm:$0xf]
      %v809 = vsel %vm530, %v806, 0
      %v812 = vsel %vm596, %v807, 0
      %814 = vmatprep.subr.bf16.mxu0 0
      %815 = vmatpush1.bf16.msra.mxu0 %v812
      %816 = vmatprep.subr.bf16.mxu0 0
      %817 = vmatpush1.bf16.msra.mxu0 0
      %818 = vmatprep.subr.bf16.mxu0 0
      %819 = vmatpush1.bf16.msra.mxu0 0
      %820 = vmatprep.subr.bf16.mxu0 0
      %821 = vmatpush1.bf16.msra.mxu0 0
      %822 = vmatprep.subr.bf16.mxu0 0
      %823 = vmatpush1.bf16.msra.mxu0 0
      %824 = vmatprep.subr.bf16.mxu0 0
      %825 = vmatpush1.bf16.msra.mxu0 0
      %826 = vmatprep.subr.bf16.mxu0 0
      %827 = vmatpush1.bf16.msra.mxu0 0
      %828 = vmatprep.subr.bf16.mxu0 0
      %829 = vmatpush1.bf16.msra.mxu0 0
      %830 = vmatprep.subr.bf16.mxu0 0
      %831 = vmatpush1.bf16.msra.mxu0 0
      %832 = vmatprep.subr.bf16.mxu0 0
      %833 = vmatpush1.bf16.msra.mxu0 0
      %834 = vmatprep.subr.bf16.mxu0 0
      %835 = vmatpush1.bf16.msra.mxu0 0
      %836 = vmatprep.subr.bf16.mxu0 0
      %837 = vmatpush1.bf16.msra.mxu0 0
      %838 = vmatprep.subr.bf16.mxu0 0
      %839 = vmatpush1.bf16.msra.mxu0 0
      %840 = vmatprep.subr.bf16.mxu0 0
      %841 = vmatpush1.bf16.msra.mxu0 0
      %842 = vmatprep.subr.bf16.mxu0 0
      %843 = vmatpush1.bf16.msra.mxu0 0
      %844 = vmatprep.subr.bf16.mxu0 0
      %845 = vmatpush1.bf16.msra.mxu0 0
      %846 = vmatprep.mubr.bf16.mxu0 0
      %847 = vmatmul.mubr.bf16.gmra.mrb[0].mxu0 %v809
      %v848 = vpop.f32.mrb[0].mxu0
      %v849 = vadd.f32 0.0, %v848
      %v850 = vpop.f32.mrb[0].mxu0
      %v851 = vpop.f32.mrb[0].mxu0
      %v852 = vpop.f32.mrb[0].mxu0
      %853 = vdwg.mxu0
      %v854 = vadd.f32 %v688, %v849
      %855 = vrot.lane.b32.xlu0 %v527, 112
      %v856 = vpop.permute.xlu0 %855
      %857 = vrot.lane.b32.xlu0 %v528, 112
      %v858 = vpop.permute.xlu0 %857
      %v860 = vsel %vm530, %v856, 0
      %v863 = vsel %vm530, %v858, 0
      %865 = vmatprep.subr.bf16.mxu0 0
      %866 = vmatpush1.bf16.xpose.msra.mxu0 %v863
      %867 = vmatprep.subr.bf16.mxu0 0
      %868 = vmatpush1.bf16.xpose.msra.mxu0 0
      %869 = vmatprep.subr.bf16.mxu0 0
      %870 = vmatpush1.bf16.xpose.msra.mxu0 0
      %871 = vmatprep.subr.bf16.mxu0 0
      %872 = vmatpush1.bf16.xpose.msra.mxu0 0
      %873 = vmatprep.subr.bf16.mxu0 0
      %874 = vmatpush1.bf16.xpose.msra.mxu0 0
      %875 = vmatprep.subr.bf16.mxu0 0
      %876 = vmatpush1.bf16.xpose.msra.mxu0 0
      %877 = vmatprep.subr.bf16.mxu0 0
      %878 = vmatpush1.bf16.xpose.msra.mxu0 0
      %879 = vmatprep.subr.bf16.mxu0 0
      %880 = vmatpush1.bf16.xpose.msra.mxu0 0
      %881 = vmatprep.subr.bf16.mxu0 0
      %882 = vmatpush1.bf16.xpose.msra.mxu0 0
      %883 = vmatprep.subr.bf16.mxu0 0
      %884 = vmatpush1.bf16.xpose.msra.mxu0 0
      %885 = vmatprep.subr.bf16.mxu0 0
      %886 = vmatpush1.bf16.xpose.msra.mxu0 0
      %887 = vmatprep.subr.bf16.mxu0 0
      %888 = vmatpush1.bf16.xpose.msra.mxu0 0
      %889 = vmatprep.subr.bf16.mxu0 0
      %890 = vmatpush1.bf16.xpose.msra.mxu0 0
      %891 = vmatprep.subr.bf16.mxu0 0
      %892 = vmatpush1.bf16.xpose.msra.mxu0 0
      %893 = vmatprep.subr.bf16.mxu0 0
      %894 = vmatpush1.bf16.xpose.msra.mxu0 0
      %895 = vmatprep.subr.bf16.mxu0 0
      %896 = vmatpush1.bf16.xpose.msra.mxu0 0
      %897 = vmatprep.mubr.bf16.mxu0 0
      %898 = vmatmul.mubr.bf16.gmra.mrb[0].mxu0 %v860
      %v899 = vpop.f32.mrb[0].mxu0
      %v900 = vadd.f32 0.0, %v899
      %v901 = vpop.f32.mrb[0].mxu0
      %v902 = vpop.f32.mrb[0].mxu0
      %v903 = vpop.f32.mrb[0].mxu0
      %904 = vdwg.mxu0
      %v905 = vmul.f32 %v900, 0.35355338
      %vm906 = vcmp.ne.f32.partialorder %v905, 0.0
      %vm907 = vmand %vm906, %vm518
      %v908 = vsel %vm907, %v905, -inf
      %v909 = vsel %vm530, %v908, -inf
      %910 = vmax.xlane.f32.xlu0 %v909
      %v911 = vpop.xlane.xlu0 %910
      %v912 = vsub.f32 %v908, %v911
      %v913 = vmul.f32 %v912, 1.442695
      %v914 = vpow.pop %v913
      %v915 = vsel %vm530, %v914, 0.0
      %916 = vadd.xlane.f32.xlu0 %v915
      %v917 = vpop.xlane.xlu0 %916
      %v918 = vrcp.pop %v917
      %v919 = vmul.f32 %v914, %v918
      %v920 = vpack.c.bf16 %v919, %v919
      %921 = vrot.lane.b32.xlu0 %v529, 112
      %v922 = vpop.permute.xlu0 %921
      %v924 = vsel %vm530, %v920, 0
      %v927 = vsel %vm596, %v922, 0
      %929 = vmatprep.subr.bf16.mxu0 0
      %930 = vmatpush1.bf16.msra.mxu0 %v927
      %931 = vmatprep.subr.bf16.mxu0 0
      %932 = vmatpush1.bf16.msra.mxu0 0
      %933 = vmatprep.subr.bf16.mxu0 0
      %934 = vmatpush1.bf16.msra.mxu0 0
      %935 = vmatprep.subr.bf16.mxu0 0
      %936 = vmatpush1.bf16.msra.mxu0 0
      %937 = vmatprep.subr.bf16.mxu0 0
      %938 = vmatpush1.bf16.msra.mxu0 0
      %939 = vmatprep.subr.bf16.mxu0 0
      %940 = vmatpush1.bf16.msra.mxu0 0
      %941 = vmatprep.subr.bf16.mxu0 0
      %942 = vmatpush1.bf16.msra.mxu0 0
      %943 = vmatprep.subr.bf16.mxu0 0
      %944 = vmatpush1.bf16.msra.mxu0 0
      %945 = vmatprep.subr.bf16.mxu0 0
      %946 = vmatpush1.bf16.msra.mxu0 0
      %947 = vmatprep.subr.bf16.mxu0 0
      %948 = vmatpush1.bf16.msra.mxu0 0
      %949 = vmatprep.subr.bf16.mxu0 0
      %950 = vmatpush1.bf16.msra.mxu0 0
      %951 = vmatprep.subr.bf16.mxu0 0
      %952 = vmatpush1.bf16.msra.mxu0 0
      %953 = vmatprep.subr.bf16.mxu0 0
      %954 = vmatpush1.bf16.msra.mxu0 0
      %955 = vmatprep.subr.bf16.mxu0 0
      %956 = vmatpush1.bf16.msra.mxu0 0
      %957 = vmatprep.subr.bf16.mxu0 0
      %958 = vmatpush1.bf16.msra.mxu0 0
      %959 = vmatprep.subr.bf16.mxu0 0
      %960 = vmatpush1.bf16.msra.mxu0 0
      %961 = vmatprep.mubr.bf16.mxu0 0
      %962 = vmatmul.mubr.bf16.gmra.mrb[0].mxu0 %v924
      %v963 = vpop.f32.mrb[0].mxu0
      %v964 = vadd.f32 0.0, %v963
      %v965 = vpop.f32.mrb[0].mxu0
      %v966 = vpop.f32.mrb[0].mxu0
      %v967 = vpop.f32.mrb[0].mxu0
      %968 = vdwg.mxu0
      %v969 = vpack.c.bf16 %v964, %v964
      %v970 = vld [vmem:[%s6 + $0x8] sm:$0xf]
      %v972 = vsel %vm530, %v969, 0
      %v975 = vsel %vm596, %v970, 0
      %977 = vmatprep.subr.bf16.mxu0 0
      %978 = vmatpush1.bf16.msra.mxu0 %v975
      %979 = vmatprep.subr.bf16.mxu0 0
      %980 = vmatpush1.bf16.msra.mxu0 0
      %981 = vmatprep.subr.bf16.mxu0 0
      %982 = vmatpush1.bf16.msra.mxu0 0
      %983 = vmatprep.subr.bf16.mxu0 0
      %984 = vmatpush1.bf16.msra.mxu0 0
      %985 = vmatprep.subr.bf16.mxu0 0
      %986 = vmatpush1.bf16.msra.mxu0 0
      %987 = vmatprep.subr.bf16.mxu0 0
      %988 = vmatpush1.bf16.msra.mxu0 0
      %989 = vmatprep.subr.bf16.mxu0 0
      %990 = vmatpush1.bf16.msra.mxu0 0
      %991 = vmatprep.subr.bf16.mxu0 0
      %992 = vmatpush1.bf16.msra.mxu0 0
      %993 = vmatprep.subr.bf16.mxu0 0
      %994 = vmatpush1.bf16.msra.mxu0 0
      %995 = vmatprep.subr.bf16.mxu0 0
      %996 = vmatpush1.bf16.msra.mxu0 0
      %997 = vmatprep.subr.bf16.mxu0 0
      %998 = vmatpush1.bf16.msra.mxu0 0
      %999 = vmatprep.subr.bf16.mxu0 0
      %1000 = vmatpush1.bf16.msra.mxu0 0
      %1001 = vmatprep.subr.bf16.mxu0 0
      %1002 = vmatpush1.bf16.msra.mxu0 0
      %1003 = vmatprep.subr.bf16.mxu0 0
      %1004 = vmatpush1.bf16.msra.mxu0 0
      %1005 = vmatprep.subr.bf16.mxu0 0
      %1006 = vmatpush1.bf16.msra.mxu0 0
      %1007 = vmatprep.subr.bf16.mxu0 0
      %1008 = vmatpush1.bf16.msra.mxu0 0
      %1009 = vmatprep.mubr.bf16.mxu0 0
      %1010 = vmatmul.mubr.bf16.gmra.mrb[0].mxu0 %v972
      %v1011 = vpop.f32.mrb[0].mxu0
      %v1012 = vadd.f32 0.0, %v1011
      %v1013 = vpop.f32.mrb[0].mxu0
      %v1014 = vpop.f32.mrb[0].mxu0
      %v1015 = vpop.f32.mrb[0].mxu0
      %1016 = vdwg.mxu0
      %v1017 = vadd.f32 %v854, %v1012
      %1018 = vrot.lane.b32.xlu0 %v527, 104
      %v1019 = vpop.permute.xlu0 %1018
      %1020 = vrot.lane.b32.xlu0 %v528, 104
      %v1021 = vpop.permute.xlu0 %1020
      %v1023 = vsel %vm530, %v1019, 0
      %v1026 = vsel %vm530, %v1021, 0
      %1028 = vmatprep.subr.bf16.mxu0 0
      %1029 = vmatpush1.bf16.xpose.msra.mxu0 %v1026
      %1030 = vmatprep.subr.bf16.mxu0 0
      %1031 = vmatpush1.bf16.xpose.msra.mxu0 0
      %1032 = vmatprep.subr.bf16.mxu0 0
      %1033 = vmatpush1.bf16.xpose.msra.mxu0 0
      %1034 = vmatprep.subr.bf16.mxu0 0
      %1035 = vmatpush1.bf16.xpose.msra.mxu0 0
      %1036 = vmatprep.subr.bf16.mxu0 0
      %1037 = vmatpush1.bf16.xpose.msra.mxu0 0
      %1038 = vmatprep.subr.bf16.mxu0 0
      %1039 = vmatpush1.bf16.xpose.msra.mxu0 0
      %1040 = vmatprep.subr.bf16.mxu0 0
      %1041 = vmatpush1.bf16.xpose.msra.mxu0 0
      %1042 = vmatprep.subr.bf16.mxu0 0
      %1043 = vmatpush1.bf16.xpose.msra.mxu0 0
      %1044 = vmatprep.subr.bf16.mxu0 0
      %1045 = vmatpush1.bf16.xpose.msra.mxu0 0
      %1046 = vmatprep.subr.bf16.mxu0 0
      %1047 = vmatpush1.bf16.xpose.msra.mxu0 0
      %1048 = vmatprep.subr.bf16.mxu0 0
      %1049 = vmatpush1.bf16.xpose.msra.mxu0 0
      %1050 = vmatprep.subr.bf16.mxu0 0
      %1051 = vmatpush1.bf16.xpose.msra.mxu0 0
      %1052 = vmatprep.subr.bf16.mxu0 0
      %1053 = vmatpush1.bf16.xpose.msra.mxu0 0
      %1054 = vmatprep.subr.bf16.mxu0 0
      %1055 = vmatpush1.bf16.xpose.msra.mxu0 0
      %1056 = vmatprep.subr.bf16.mxu0 0
      %1057 = vmatpush1.bf16.xpose.msra.mxu0 0
      %1058 = vmatprep.subr.bf16.mxu0 0
      %1059 = vmatpush1.bf16.xpose.msra.mxu0 0
      %1060 = vmatprep.mubr.bf16.mxu0 0
      %1061 = vmatmul.mubr.bf16.gmra.mrb[0].mxu0 %v1023
      %v1062 = vpop.f32.mrb[0].mxu0
      %v1063 = vadd.f32 0.0, %v1062
      %v1064 = vpop.f32.mrb[0].mxu0
      %v1065 = vpop.f32.mrb[0].mxu0
      %v1066 = vpop.f32.mrb[0].mxu0
      %1067 = vdwg.mxu0
      %v1068 = vmul.f32 %v1063, 0.35355338
      %vm1069 = vcmp.ne.f32.partialorder %v1068, 0.0
      %vm1070 = vmand %vm1069, %vm518
      %v1071 = vsel %vm1070, %v1068, -inf
      %v1072 = vsel %vm530, %v1071, -inf
      %1073 = vmax.xlane.f32.xlu0 %v1072
      %v1074 = vpop.xlane.xlu0 %1073
      %v1075 = vsub.f32 %v1071, %v1074
      %v1076 = vmul.f32 %v1075, 1.442695
      %v1077 = vpow.pop %v1076
      %v1078 = vsel %vm530, %v1077, 0.0
      %1079 = vadd.xlane.f32.xlu0 %v1078
      %v1080 = vpop.xlane.xlu0 %1079
      %v1081 = vrcp.pop %v1080
      %v1082 = vmul.f32 %v1077, %v1081
      %v1083 = vpack.c.bf16 %v1082, %v1082
      %1084 = vrot.lane.b32.xlu0 %v529, 104
      %v1085 = vpop.permute.xlu0 %1084
      %v1087 = vsel %vm530, %v1083, 0
      %v1090 = vsel %vm596, %v1085, 0
      %1092 = vmatprep.subr.bf16.mxu0 0
      %1093 = vmatpush1.bf16.msra.mxu0 %v1090
      %1094 = vmatprep.subr.bf16.mxu0 0
      %1095 = vmatpush1.bf16.msra.mxu0 0
      %1096 = vmatprep.subr.bf16.mxu0 0
      %1097 = vmatpush1.bf16.msra.mxu0 0
      %1098 = vmatprep.subr.bf16.mxu0 0
      %1099 = vmatpush1.bf16.msra.mxu0 0
      %1100 = vmatprep.subr.bf16.mxu0 0
      %1101 = vmatpush1.bf16.msra.mxu0 0
      %1102 = vmatprep.subr.bf16.mxu0 0
      %1103 = vmatpush1.bf16.msra.mxu0 0
      %1104 = vmatprep.subr.bf16.mxu0 0
      %1105 = vmatpush1.bf16.msra.mxu0 0
      %1106 = vmatprep.subr.bf16.mxu0 0
      %1107 = vmatpush1.bf16.msra.mxu0 0
      %1108 = vmatprep.subr.bf16.mxu0 0
      %1109 = vmatpush1.bf16.msra.mxu0 0
      %1110 = vmatprep.subr.bf16.mxu0 0
      %1111 = vmatpush1.bf16.msra.mxu0 0
      %1112 = vmatprep.subr.bf16.mxu0 0
      %1113 = vmatpush1.bf16.msra.mxu0 0
      %1114 = vmatprep.subr.bf16.mxu0 0
      %1115 = vmatpush1.bf16.msra.mxu0 0
      %1116 = vmatprep.subr.bf16.mxu0 0
      %1117 = vmatpush1.bf16.msra.mxu0 0
      %1118 = vmatprep.subr.bf16.mxu0 0
      %1119 = vmatpush1.bf16.msra.mxu0 0
      %1120 = vmatprep.subr.bf16.mxu0 0
      %1121 = vmatpush1.bf16.msra.mxu0 0
      %1122 = vmatprep.subr.bf16.mxu0 0
      %1123 = vmatpush1.bf16.msra.mxu0 0
      %1124 = vmatprep.mubr.bf16.mxu0 0
      %1125 = vmatmul.mubr.bf16.gmra.mrb[0].mxu0 %v1087
      %v1126 = vpop.f32.mrb[0].mxu0
      %v1127 = vadd.f32 0.0, %v1126
      %v1128 = vpop.f32.mrb[0].mxu0
      %v1129 = vpop.f32.mrb[0].mxu0
      %v1130 = vpop.f32.mrb[0].mxu0
      %1131 = vdwg.mxu0
      %v1132 = vpack.c.bf16 %v1127, %v1127
      %v1133 = vld [vmem:[%s6 + $0xc] sm:$0xf]
      %v1135 = vsel %vm530, %v1132, 0
      %v1138 = vsel %vm596, %v1133, 0
      %1140 = vmatprep.subr.bf16.mxu0 0
      %1141 = vmatpush1.bf16.msra.mxu0 %v1138
      %1142 = vmatprep.subr.bf16.mxu0 0
      %1143 = vmatpush1.bf16.msra.mxu0 0
      %1144 = vmatprep.subr.bf16.mxu0 0
      %1145 = vmatpush1.bf16.msra.mxu0 0
      %1146 = vmatprep.subr.bf16.mxu0 0
      %1147 = vmatpush1.bf16.msra.mxu0 0
      %1148 = vmatprep.subr.bf16.mxu0 0
      %1149 = vmatpush1.bf16.msra.mxu0 0
      %1150 = vmatprep.subr.bf16.mxu0 0
      %1151 = vmatpush1.bf16.msra.mxu0 0
      %1152 = vmatprep.subr.bf16.mxu0 0
      %1153 = vmatpush1.bf16.msra.mxu0 0
      %1154 = vmatprep.subr.bf16.mxu0 0
      %1155 = vmatpush1.bf16.msra.mxu0 0
      %1156 = vmatprep.subr.bf16.mxu0 0
      %1157 = vmatpush1.bf16.msra.mxu0 0
      %1158 = vmatprep.subr.bf16.mxu0 0
      %1159 = vmatpush1.bf16.msra.mxu0 0
      %1160 = vmatprep.subr.bf16.mxu0 0
      %1161 = vmatpush1.bf16.msra.mxu0 0
      %1162 = vmatprep.subr.bf16.mxu0 0
      %1163 = vmatpush1.bf16.msra.mxu0 0
      %1164 = vmatprep.subr.bf16.mxu0 0
      %1165 = vmatpush1.bf16.msra.mxu0 0
      %1166 = vmatprep.subr.bf16.mxu0 0
      %1167 = vmatpush1.bf16.msra.mxu0 0
      %1168 = vmatprep.subr.bf16.mxu0 0
      %1169 = vmatpush1.bf16.msra.mxu0 0
      %1170 = vmatprep.subr.bf16.mxu0 0
      %1171 = vmatpush1.bf16.msra.mxu0 0
      %1172 = vmatprep.mubr.bf16.mxu0 0
      %1173 = vmatmul.mubr.bf16.gmra.mrb[0].mxu0 %v1135
      %v1174 = vpop.f32.mrb[0].mxu0
      %v1175 = vadd.f32 0.0, %v1174
      %v1176 = vpop.f32.mrb[0].mxu0
      %v1177 = vpop.f32.mrb[0].mxu0
      %v1178 = vpop.f32.mrb[0].mxu0
      %1179 = vdwg.mxu0
      %v1180 = vadd.f32 %v1017, %v1175
      %1181 = vst.msk [vmem:[%s300] sm:$0xff] %vm305, %v1180
      %p1182 = scmp.lt.s32.totalorder %s19, 1
      %s1183 = scalar_select %p1182, %s19, 1
      %s1184 = smul.addr %s1183, 8
      %s1185 = scalar_lea.vmem %s8, %s1184
      // Predicated region
      $region53: #{decoder_layer.3} parent=51 // pred_check
        %p1186 = pneg %p210
      $region54: #{decoder_layer.3} parent=51 // pred_check_branch
        %1188 = sbr.rel (%p1186) target = $region56
      $region55: #{decoder_layer.3} parent=51 // pred_region
        _
      $region56: #{decoder_layer.3} parent=51 // pred_fallthru
        _
    $region52: #{decoder_layer.3} parent=5 // pred_fallthru
      _
    %p1189 = scmp.le.s32.totalorder 2, %s14
    // Predicated region
    $region57: #{decoder_layer.3} parent=5 // pred_check
      %p1190 = pneg %p1189
    $region58: #{decoder_layer.3} parent=5 // pred_check_branch
      %1192 = sbr.rel (%p1190) target = $region60
    $region59: #{decoder_layer.3} parent=5 // pred_region
      %s1193 = ssub.s32 %s14, 2
      // Predicated region
      $region61: #{decoder_layer.3} parent=59 // pred_check
        %p1194 = pneg %p216
      $region62: #{decoder_layer.3} parent=59 // pred_check_branch
        %1196 = sbr.rel (%p1194) target = $region64
      $region63: #{decoder_layer.3} parent=59 // pred_region
        %p1197 = scmp.lt.s32.totalorder %s20, 1
        %s1198 = scalar_select %p1197, %s20, 1
        %s1199 = smul.addr %s1198, 8
        %s1200 = scalar_lea.vmem %s8, %s1199
      $region64: #{decoder_layer.3} parent=59 // pred_fallthru
        _
    $region60: #{decoder_layer.3} parent=5 // pred_fallthru
      _
  $region6: #{decoder_layer.3} parent=0 // loop_footer
    %s18 = sadd.s32 1, %s14
  $region7: #{decoder_layer.3} parent=0 // loop_footer_branch
    %13 = sbr.rel target = $region3
  $region8: #{decoder_layer.3} parent=0 // loop_exit
    _

// kernel: decoder_layer.4
$region0: #{decoder_layer.4}
  #allocation0 [shape = 'u32[]', space=smem, size = 0x4, offset = 0x4, fixed_abs, tag = 'smem constant byte address 0x4 - core index']
  #allocation1 [shape = 'u32[144,128]{1,0:T(1,128)}', space=vmem, size = 0x12000, scoped, tag = 'internal scratch']
  %s0 = inlined_call_operand.vmem [shape: f32[2,8,32], index: 0, kind: input, shape index: {}]
  %s1 = inlined_call_operand.vmem [shape: f32[2,8,32], index: 1, kind: input, shape index: {}]
  %s2 = inlined_call_operand.vmem [shape: f32[1,32], index: 2, kind: input, shape index: {}]
  %s3 = inlined_call_operand.vmem [shape: f32[1,32], index: 3, kind: input, shape index: {}]
  %s4 = inlined_call_operand.vmem [shape: bf16[32,32], index: 4, kind: input, shape index: {}]
  %s5 = inlined_call_operand.vmem [shape: bf16[32,32], index: 5, kind: input, shape index: {}]
  %s6 = inlined_call_operand.vmem [shape: bf16[32,32], index: 6, kind: input, shape index: {}]
  %s7 = inlined_call_operand.vmem [shape: bf16[32,32], index: 7, kind: input, shape index: {}]
  %s8 = inlined_call_operand.vmem [shape: f32[1,32], index: 8, kind: input, shape index: {}]
  %s9 = inlined_call_operand.vmem [shape: f32[2,8,32], index: 9, kind: output, shape index: {}]
  %s10 = sld [smem:[#allocation0]]
  $region69: #{decoder_layer.4} parent=0
    _
  %s12 = ssub.s32 1, %s10
  %s13 = scalar_select 0, %s12, %s10
  loop: start=0, step=1, limit=4
  $region2: #{decoder_layer.4} parent=0 // loop_pre_header
    _
  $region3: #{decoder_layer.4} parent=0 // loop_header
    %s15 = sphi 0, %s19
    %p16 = scmp.ge.s32.totalorder %s15, 4
    %s25 = sphi 0, %s27
    %s28 = sphi 0, %s25
    %s29 = sphi 0, %s28
    %s45 = sphi 0, %s29
    %s51 = sphi 0, %s53
    %s54 = sphi 0, %s51
    %s55 = sphi 0, %s54
    %s71 = sphi 0, %s55
    %s75 = sphi 0, %s75
    %s77 = sphi 0, %s75
    %s78 = sphi 0, %s77
    %s92 = sphi 0, %s78
    %s96 = sphi 0, %s96
    %s98 = sphi 0, %s96
    %s99 = sphi 0, %s98
    %s113 = sphi 0, %s99
    %s117 = sphi 0, %s117
    %s119 = sphi 0, %s117
    %s120 = sphi 0, %s119
    %s134 = sphi 0, %s120
    %s138 = sphi 0, %s138
    %s140 = sphi 0, %s138
    %s141 = sphi 0, %s140
    %s155 = sphi 0, %s141
    %s159 = sphi 0, %s159
    %s161 = sphi 0, %s159
    %s162 = sphi 0, %s161
    %s176 = sphi 0, %s162
    %s180 = sphi 0, %s180
    %s182 = sphi 0, %s180
    %s183 = sphi 0, %s182
    %s197 = sphi 0, %s183
    %s201 = sphi 0, %s201
    %s203 = sphi 0, %s201
    %s204 = sphi 0, %s203
    %s218 = sphi 0, %s204
    %s224 = sphi 0, %s226
    %s227 = sphi 0, %s224
    %s228 = sphi 0, %s227
    %s244 = sphi 0, %s228
  $region4: #{decoder_layer.4} parent=0 // loop_header_branch
    %18 = sbr.rel (%p16) target = $region8
  $region5: #{decoder_layer.4} parent=0 // loop_body
    %s20 = ssub.s32 %s15, 1
    %s21 = ssub.s32 %s15, 2
    %s22 = sadd.s32 %s15, 1
    %s23 = ssub.s32 %s15, %s22
    %p24 = scmp.eq.s32.totalorder %s23, 0
    %s26 = sadd.s32 %s25, 1
    %s27 = scalar_select %p24, %s25, %s26
    %p30 = pneg %p24
    %p31 = scmp.eq.s32.totalorder %s15, 1
    %p32 = por %p30, %p31
    %p33 = scmp.ne.s32.totalorder %s25, %s28
    %p34 = scmp.eq.s32.totalorder %s15, 0
    %p35 = por %p33, %p34
    %p36 = scmp.ne.s32.totalorder %s25, %s28
    %p37 = scmp.eq.s32.totalorder %s20, 1
    %p38 = por %p36, %p37
    %p39 = scmp.ne.s32.totalorder %s28, %s29
    %p40 = scmp.eq.s32.totalorder %s20, 0
    %p41 = por %p39, %p40
    %p42 = scmp.ne.s32.totalorder %s28, %s29
    %p43 = scmp.eq.s32.totalorder %s21, 1
    %p44 = por %p42, %p43
    %p46 = scmp.ne.s32.totalorder %s29, %s45
    %p47 = scmp.eq.s32.totalorder %s21, 0
    %p48 = por %p46, %p47
    %s49 = ssub.s32 %s15, %s22
    %p50 = scmp.eq.s32.totalorder %s49, 0
    %s52 = sadd.s32 %s51, 1
    %s53 = scalar_select %p50, %s51, %s52
    %p56 = pneg %p50
    %p57 = scmp.eq.s32.totalorder %s15, 1
    %p58 = por %p56, %p57
    %p59 = scmp.ne.s32.totalorder %s51, %s54
    %p60 = scmp.eq.s32.totalorder %s15, 0
    %p61 = por %p59, %p60
    %p62 = scmp.ne.s32.totalorder %s51, %s54
    %p63 = scmp.eq.s32.totalorder %s20, 1
    %p64 = por %p62, %p63
    %p65 = scmp.ne.s32.totalorder %s54, %s55
    %p66 = scmp.eq.s32.totalorder %s20, 0
    %p67 = por %p65, %p66
    %p68 = scmp.ne.s32.totalorder %s54, %s55
    %p69 = scmp.eq.s32.totalorder %s21, 1
    %p70 = por %p68, %p69
    %p72 = scmp.ne.s32.totalorder %s55, %s71
    %p73 = scmp.eq.s32.totalorder %s21, 0
    %p74 = por %p72, %p73
    %s76 = sadd.s32 %s75, 1
    %p79 = scmp.eq.s32.totalorder %s15, 1
    %p80 = scmp.ne.s32.totalorder %s75, %s77
    %p81 = scmp.eq.s32.totalorder %s15, 0
    %p82 = por %p80, %p81
    %p83 = scmp.ne.s32.totalorder %s75, %s77
    %p84 = scmp.eq.s32.totalorder %s20, 1
    %p85 = por %p83, %p84
    %p86 = scmp.ne.s32.totalorder %s77, %s78
    %p87 = scmp.eq.s32.totalorder %s20, 0
    %p88 = por %p86, %p87
    %p89 = scmp.ne.s32.totalorder %s77, %s78
    %p90 = scmp.eq.s32.totalorder %s21, 1
    %p91 = por %p89, %p90
    %p93 = scmp.ne.s32.totalorder %s78, %s92
    %p94 = scmp.eq.s32.totalorder %s21, 0
    %p95 = por %p93, %p94
    %s97 = sadd.s32 %s96, 1
    %p100 = scmp.eq.s32.totalorder %s15, 1
    %p101 = scmp.ne.s32.totalorder %s96, %s98
    %p102 = scmp.eq.s32.totalorder %s15, 0
    %p103 = por %p101, %p102
    %p104 = scmp.ne.s32.totalorder %s96, %s98
    %p105 = scmp.eq.s32.totalorder %s20, 1
    %p106 = por %p104, %p105
    %p107 = scmp.ne.s32.totalorder %s98, %s99
    %p108 = scmp.eq.s32.totalorder %s20, 0
    %p109 = por %p107, %p108
    %p110 = scmp.ne.s32.totalorder %s98, %s99
    %p111 = scmp.eq.s32.totalorder %s21, 1
    %p112 = por %p110, %p111
    %p114 = scmp.ne.s32.totalorder %s99, %s113
    %p115 = scmp.eq.s32.totalorder %s21, 0
    %p116 = por %p114, %p115
    %s118 = sadd.s32 %s117, 1
    %p121 = scmp.eq.s32.totalorder %s15, 1
    %p122 = scmp.ne.s32.totalorder %s117, %s119
    %p123 = scmp.eq.s32.totalorder %s15, 0
    %p124 = por %p122, %p123
    %p125 = scmp.ne.s32.totalorder %s117, %s119
    %p126 = scmp.eq.s32.totalorder %s20, 1
    %p127 = por %p125, %p126
    %p128 = scmp.ne.s32.totalorder %s119, %s120
    %p129 = scmp.eq.s32.totalorder %s20, 0
    %p130 = por %p128, %p129
    %p131 = scmp.ne.s32.totalorder %s119, %s120
    %p132 = scmp.eq.s32.totalorder %s21, 1
    %p133 = por %p131, %p132
    %p135 = scmp.ne.s32.totalorder %s120, %s134
    %p136 = scmp.eq.s32.totalorder %s21, 0
    %p137 = por %p135, %p136
    %s139 = sadd.s32 %s138, 1
    %p142 = scmp.eq.s32.totalorder %s15, 1
    %p143 = scmp.ne.s32.totalorder %s138, %s140
    %p144 = scmp.eq.s32.totalorder %s15, 0
    %p145 = por %p143, %p144
    %p146 = scmp.ne.s32.totalorder %s138, %s140
    %p147 = scmp.eq.s32.totalorder %s20, 1
    %p148 = por %p146, %p147
    %p149 = scmp.ne.s32.totalorder %s140, %s141
    %p150 = scmp.eq.s32.totalorder %s20, 0
    %p151 = por %p149, %p150
    %p152 = scmp.ne.s32.totalorder %s140, %s141
    %p153 = scmp.eq.s32.totalorder %s21, 1
    %p154 = por %p152, %p153
    %p156 = scmp.ne.s32.totalorder %s141, %s155
    %p157 = scmp.eq.s32.totalorder %s21, 0
    %p158 = por %p156, %p157
    %s160 = sadd.s32 %s159, 1
    %p163 = scmp.eq.s32.totalorder %s15, 1
    %p164 = scmp.ne.s32.totalorder %s159, %s161
    %p165 = scmp.eq.s32.totalorder %s15, 0
    %p166 = por %p164, %p165
    %p167 = scmp.ne.s32.totalorder %s159, %s161
    %p168 = scmp.eq.s32.totalorder %s20, 1
    %p169 = por %p167, %p168
    %p170 = scmp.ne.s32.totalorder %s161, %s162
    %p171 = scmp.eq.s32.totalorder %s20, 0
    %p172 = por %p170, %p171
    %p173 = scmp.ne.s32.totalorder %s161, %s162
    %p174 = scmp.eq.s32.totalorder %s21, 1
    %p175 = por %p173, %p174
    %p177 = scmp.ne.s32.totalorder %s162, %s176
    %p178 = scmp.eq.s32.totalorder %s21, 0
    %p179 = por %p177, %p178
    %s181 = sadd.s32 %s180, 1
    %p184 = scmp.eq.s32.totalorder %s15, 1
    %p185 = scmp.ne.s32.totalorder %s180, %s182
    %p186 = scmp.eq.s32.totalorder %s15, 0
    %p187 = por %p185, %p186
    %p188 = scmp.ne.s32.totalorder %s180, %s182
    %p189 = scmp.eq.s32.totalorder %s20, 1
    %p190 = por %p188, %p189
    %p191 = scmp.ne.s32.totalorder %s182, %s183
    %p192 = scmp.eq.s32.totalorder %s20, 0
    %p193 = por %p191, %p192
    %p194 = scmp.ne.s32.totalorder %s182, %s183
    %p195 = scmp.eq.s32.totalorder %s21, 1
    %p196 = por %p194, %p195
    %p198 = scmp.ne.s32.totalorder %s183, %s197
    %p199 = scmp.eq.s32.totalorder %s21, 0
    %p200 = por %p198, %p199
    %s202 = sadd.s32 %s201, 1
    %p205 = scmp.eq.s32.totalorder %s15, 1
    %p206 = scmp.ne.s32.totalorder %s201, %s203
    %p207 = scmp.eq.s32.totalorder %s15, 0
    %p208 = por %p206, %p207
    %p209 = scmp.ne.s32.totalorder %s201, %s203
    %p210 = scmp.eq.s32.totalorder %s20, 1
    %p211 = por %p209, %p210
    %p212 = scmp.ne.s32.totalorder %s203, %s204
    %p213 = scmp.eq.s32.totalorder %s20, 0
    %p214 = por %p212, %p213
    %p215 = scmp.ne.s32.totalorder %s203, %s204
    %p216 = scmp.eq.s32.totalorder %s21, 1
    %p217 = por %p215, %p216
    %p219 = scmp.ne.s32.totalorder %s204, %s218
    %p220 = scmp.eq.s32.totalorder %s21, 0
    %p221 = por %p219, %p220
    %s222 = ssub.s32 %s15, %s22
    %p223 = scmp.eq.s32.totalorder %s222, 0
    %s225 = sadd.s32 %s224, 1
    %s226 = scalar_select %p223, %s224, %s225
    %p229 = pneg %p223
    %p230 = scmp.eq.s32.totalorder %s15, 1
    %p231 = por %p229, %p230
    %p232 = scmp.ne.s32.totalorder %s224, %s227
    %p233 = scmp.eq.s32.totalorder %s15, 0
    %p234 = por %p232, %p233
    %p235 = scmp.ne.s32.totalorder %s224, %s227
    %p236 = scmp.eq.s32.totalorder %s20, 1
    %p237 = por %p235, %p236
    %p238 = scmp.ne.s32.totalorder %s227, %s228
    %p239 = scmp.eq.s32.totalorder %s20, 0
    %p240 = por %p238, %p239
    %p241 = scmp.ne.s32.totalorder %s227, %s228
    %p242 = scmp.eq.s32.totalorder %s21, 1
    %p243 = por %p241, %p242
    %p245 = scmp.ne.s32.totalorder %s228, %s244
    %p246 = scmp.eq.s32.totalorder %s21, 0
    %p247 = por %p245, %p246
    %p248 = scmp.le.s32.totalorder 1, %s15
    %p249 = scmp.lt.s32.totalorder %s15, 3
    %p250 = pnand %p248, %p249
    %p251 = pneg %p250
    // Predicated region
    $region9: #{decoder_layer.4} parent=5 // pred_check
      _
    $region10: #{decoder_layer.4} parent=5 // pred_check_branch
      %253 = sbr.rel (%p250) target = $region12
    $region11: #{decoder_layer.4} parent=5 // pred_region
      %s254 = ssub.s32 %s15, 1
      // Predicated region
      $region13: #{decoder_layer.4} parent=11 // pred_check
        %p255 = pneg %p88
      $region14: #{decoder_layer.4} parent=11 // pred_check_branch
        %257 = sbr.rel (%p255) target = $region16
      $region15: #{decoder_layer.4} parent=11 // pred_region
        _
      $region16: #{decoder_layer.4} parent=11 // pred_fallthru
        _
      // Predicated region
      $region17: #{decoder_layer.4} parent=11 // pred_check
        %p258 = pneg %p109
      $region18: #{decoder_layer.4} parent=11 // pred_check_branch
        %260 = sbr.rel (%p258) target = $region20
      $region19: #{decoder_layer.4} parent=11 // pred_region
        _
      $region20: #{decoder_layer.4} parent=11 // pred_fallthru
        _
      // Predicated region
      $region21: #{decoder_layer.4} parent=11 // pred_check
        %p261 = pneg %p130
      $region22: #{decoder_layer.4} parent=11 // pred_check_branch
        %263 = sbr.rel (%p261) target = $region24
      $region23: #{decoder_layer.4} parent=11 // pred_region
        _
      $region24: #{decoder_layer.4} parent=11 // pred_fallthru
        _
      // Predicated region
      $region25: #{decoder_layer.4} parent=11 // pred_check
        %p264 = pneg %p151
      $region26: #{decoder_layer.4} parent=11 // pred_check_branch
        %266 = sbr.rel (%p264) target = $region28
      $region27: #{decoder_layer.4} parent=11 // pred_region
        _
      $region28: #{decoder_layer.4} parent=11 // pred_fallthru
        _
      // Predicated region
      $region29: #{decoder_layer.4} parent=11 // pred_check
        %p267 = pneg %p172
      $region30: #{decoder_layer.4} parent=11 // pred_check_branch
        %269 = sbr.rel (%p267) target = $region32
      $region31: #{decoder_layer.4} parent=11 // pred_region
        _
      $region32: #{decoder_layer.4} parent=11 // pred_fallthru
        _
      // Predicated region
      $region33: #{decoder_layer.4} parent=11 // pred_check
        %p270 = pneg %p193
      $region34: #{decoder_layer.4} parent=11 // pred_check_branch
        %272 = sbr.rel (%p270) target = $region36
      $region35: #{decoder_layer.4} parent=11 // pred_region
        _
      $region36: #{decoder_layer.4} parent=11 // pred_fallthru
        _
      // Predicated region
      $region37: #{decoder_layer.4} parent=11 // pred_check
        %p273 = pneg %p214
      $region38: #{decoder_layer.4} parent=11 // pred_check_branch
        %275 = sbr.rel (%p273) target = $region40
      $region39: #{decoder_layer.4} parent=11 // pred_region
        _
      $region40: #{decoder_layer.4} parent=11 // pred_fallthru
        _
    $region12: #{decoder_layer.4} parent=5 // pred_fallthru
      _
    %p276 = scmp.lt.s32.totalorder %s15, 2
    // Predicated region
    $region41: #{decoder_layer.4} parent=5 // pred_check
      %p277 = pneg %p276
    $region42: #{decoder_layer.4} parent=5 // pred_check_branch
      %279 = sbr.rel (%p277) target = $region44
    $region43: #{decoder_layer.4} parent=5 // pred_region
      // Predicated region
      $region45: #{decoder_layer.4} parent=43 // pred_check
        %p280 = pneg %p35
      $region46: #{decoder_layer.4} parent=43 // pred_check_branch
        %282 = sbr.rel (%p280) target = $region48
      $region47: #{decoder_layer.4} parent=43 // pred_region
        %p283 = scmp.lt.s32.totalorder %s15, 1
        %s284 = scalar_select %p283, %s15, 1
        %s285 = smul.addr %s284, 8
        %s286 = scalar_lea.vmem %s0, %s285
      $region48: #{decoder_layer.4} parent=43 // pred_fallthru
        _
      // Predicated region
      $region49: #{decoder_layer.4} parent=43 // pred_check
        %p287 = pneg %p61
      $region50: #{decoder_layer.4} parent=43 // pred_check_branch
        %289 = sbr.rel (%p287) target = $region52
      $region51: #{decoder_layer.4} parent=43 // pred_region
        %p290 = scmp.lt.s32.totalorder %s15, 1
        %s291 = scalar_select %p290, %s15, 1
        %s292 = smul.addr %s291, 8
        %s293 = scalar_lea.vmem %s1, %s292
      $region52: #{decoder_layer.4} parent=43 // pred_fallthru
        _
    $region44: #{decoder_layer.4} parent=5 // pred_fallthru
      _
    %p294 = scmp.le.s32.totalorder 1, %s15
    %p295 = scmp.lt.s32.totalorder %s15, 3
    %p296 = pnand %p294, %p295
    %p297 = pneg %p296
    // Predicated region
    $region53: #{decoder_layer.4} parent=5 // pred_check
      _
    $region54: #{decoder_layer.4} parent=5 // pred_check_branch
      %299 = sbr.rel (%p296) target = $region56
    $region55: #{decoder_layer.4} parent=5 // pred_region
      %s300 = ssub.s32 %s15, 1
      %p301 = scmp.lt.s32.totalorder %s20, 1
      %s302 = scalar_select %p301, %s20, 1
      %s303 = smul.addr %s302, 8
      %s304 = scalar_lea.vmem %s0, %s303
      %p305 = pneg %p41
      %p306 = pneg %p38
      %p307 = scmp.lt.s32.totalorder %s20, 1
      %s308 = scalar_select %p307, %s20, 1
      %s309 = smul.addr %s308, 8
      %s310 = scalar_lea.vmem %s1, %s309
      %p311 = pneg %p67
      %p312 = pneg %p64
      %p313 = pneg %p88
      %p314 = pneg %p85
      %p315 = pneg %p109
      %p316 = pneg %p106
      %p317 = pneg %p130
      %p318 = pneg %p127
      %p319 = pneg %p151
      %p320 = pneg %p148
      %p321 = pneg %p172
      %p322 = pneg %p169
      %p323 = pneg %p193
      %p324 = pneg %p190
      %p325 = pneg %p214
      %p326 = pneg %p211
      %p327 = pneg %p240
      %p328 = pneg %p237
      %p329 = scmp.lt.s32.totalorder %s20, 1
      %s330 = scalar_select %p329, %s20, 1
      %s331 = smul.addr %s330, 8
      %s332 = scalar_lea.vmem %s9, %s331
      %p333 = scmp.lt.s32.totalorder %s20, 1
      %s334 = scalar_select %p333, %s20, 1
      %s335 = smul.addr %s334, 8
      %s336 = scalar_lea.vmem %s0, %s335
      %p337 = scmp.lt.s32.totalorder %s20, 1
      %s338 = scalar_select %p337, %s20, 1
      %s339 = smul.addr %s338, 8
      %s340 = scalar_lea.vmem %s1, %s339
      %p341 = scmp.lt.s32.totalorder %s20, 1
      %s342 = scalar_select %p341, %s20, 1
      %s343 = smul.addr %s342, 8
      %s344 = scalar_lea.vmem %s9, %s343
      %v346 = vld [vmem:[%s336] sm:$0xff]
      %v347 = vld [vmem:[%s2] sm:$0x1]
      %v348 = vld [vmem:[%s3] sm:$0x1]
      %vm349 = vcmask 261120
      %v350 = vsel %vm349, %v346, 0.0
      %351 = vadd.xlane.f32.xlu0 %v350
      %v352 = vpop.xlane.xlu0 %351
      %v353 = vrcp.pop 32.0
      %v354 = vmul.f32 %v352, %v353
      %v355 = vsub.f32 %v346, %v354
      %v356 = vmul.f32 %v355, %v355
      %v357 = vsel %vm349, %v356, 0.0
      %358 = vadd.xlane.f32.xlu0 %v357
      %v359 = vpop.xlane.xlu0 %358
      %v360 = vrcp.pop 31.0
      %v361 = vmul.f32 %v359, %v360
      %v362 = vrsqrt.pop %v361
      %v363 = vmul.f32 %v361, %v362
      %vm364 = vcmp.eq.f32.partialorder %v361, inf
      %v365 = vsel %vm364, %v361, %v363
      %vm366 = vcmp.eq.f32.partialorder %v361, 0.0
      %v367 = vand.u32 %v361, 2147483648
      %v368 = vsel %vm366, %v367, %v365
      %v369 = vadd.f32 %v368, 1e-06
      %v370 = vrcp.pop %v369
      %v372 = vlaneseq
      %v373 = vshrl.u32 %v372, 7
      %v374 = vsub.s32 0, %v373
      %v375 = vrot.slane %v347, %v374
      %v377 = vmul.f32 %v375, %v355
      %v378 = vmul.f32 %v377, %v370
      %v380 = vlaneseq
      %v381 = vshrl.u32 %v380, 7
      %v382 = vsub.s32 0, %v381
      %v383 = vrot.slane %v348, %v382
      %v385 = vadd.f32 %v378, %v383
      %v386 = vpack.c.bf16 %v385, %v385
      %v387 = vld [vmem:[%s340] sm:$0xff]
      %v388 = vpack.c.bf16 %v387, %v387
      %v389 = vld [vmem:[%s4] sm:$0xf]
      %v390 = vld [vmem:[%s4 + $0x4] sm:$0xf]
      %v391 = vld [vmem:[%s4 + $0x8] sm:$0xf]
      %v392 = vld [vmem:[%s4 + $0xc] sm:$0xf]
      %v397 = vunpack.c.l.b16 %v389
      %v398 = vunpack.c.l.b16 %v390
      %v399 = vunpack.c.l.b16 %v391
      %v400 = vunpack.c.l.b16 %v392
      %v401 = vpack.c.b16 %v398, %v397
      %v402 = vpack.c.b16 %v400, %v399
      %v406 = vsel %vm349, %v386, 0
      %408 = vmatprep.subr.bf16.mxu0 0
      %409 = vmatpush1.bf16.msra.mxu0 %v401
      %410 = vmatprep.subr.bf16.mxu0 0
      %411 = vmatpush1.bf16.msra.mxu0 %v402
      %412 = vmatprep.subr.bf16.mxu0 0
      %413 = vmatpush1.bf16.msra.mxu0 0
      %414 = vmatprep.subr.bf16.mxu0 0
      %415 = vmatpush1.bf16.msra.mxu0 0
      %416 = vmatprep.subr.bf16.mxu0 0
      %417 = vmatpush1.bf16.msra.mxu0 0
      %418 = vmatprep.subr.bf16.mxu0 0
      %419 = vmatpush1.bf16.msra.mxu0 0
      %420 = vmatprep.subr.bf16.mxu0 0
      %421 = vmatpush1.bf16.msra.mxu0 0
      %422 = vmatprep.subr.bf16.mxu0 0
      %423 = vmatpush1.bf16.msra.mxu0 0
      %424 = vmatprep.subr.bf16.mxu0 0
      %425 = vmatpush1.bf16.msra.mxu0 0
      %426 = vmatprep.subr.bf16.mxu0 0
      %427 = vmatpush1.bf16.msra.mxu0 0
      %428 = vmatprep.subr.bf16.mxu0 0
      %429 = vmatpush1.bf16.msra.mxu0 0
      %430 = vmatprep.subr.bf16.mxu0 0
      %431 = vmatpush1.bf16.msra.mxu0 0
      %432 = vmatprep.subr.bf16.mxu0 0
      %433 = vmatpush1.bf16.msra.mxu0 0
      %434 = vmatprep.subr.bf16.mxu0 0
      %435 = vmatpush1.bf16.msra.mxu0 0
      %436 = vmatprep.subr.bf16.mxu0 0
      %437 = vmatpush1.bf16.msra.mxu0 0
      %438 = vmatprep.subr.bf16.mxu0 0
      %439 = vmatpush1.bf16.msra.mxu0 0
      %440 = vmatprep.mubr.bf16.mxu0 0
      %441 = vmatmul.mubr.bf16.gmra.mrb[0].mxu0 %v406
      %v442 = vpop.f32.mrb[0].mxu0
      %v443 = vadd.f32 0.0, %v442
      %v444 = vpop.f32.mrb[0].mxu0
      %v445 = vpop.f32.mrb[0].mxu0
      %v446 = vpop.f32.mrb[0].mxu0
      %447 = vdwg.mxu0
      %v448 = vld [vmem:[%s5] sm:$0xf]
      %v449 = vld [vmem:[%s5 + $0x4] sm:$0xf]
      %v450 = vld [vmem:[%s5 + $0x8] sm:$0xf]
      %v451 = vld [vmem:[%s5 + $0xc] sm:$0xf]
      %v456 = vunpack.c.l.b16 %v448
      %v457 = vunpack.c.l.b16 %v449
      %v458 = vunpack.c.l.b16 %v450
      %v459 = vunpack.c.l.b16 %v451
      %v460 = vpack.c.b16 %v457, %v456
      %v461 = vpack.c.b16 %v459, %v458
      %v465 = vsel %vm349, %v388, 0
      %467 = vmatprep.subr.bf16.mxu0 0
      %468 = vmatpush1.bf16.msra.mxu0 %v460
      %469 = vmatprep.subr.bf16.mxu0 0
      %470 = vmatpush1.bf16.msra.mxu0 %v461
      %471 = vmatprep.subr.bf16.mxu0 0
      %472 = vmatpush1.bf16.msra.mxu0 0
      %473 = vmatprep.subr.bf16.mxu0 0
      %474 = vmatpush1.bf16.msra.mxu0 0
      %475 = vmatprep.subr.bf16.mxu0 0
      %476 = vmatpush1.bf16.msra.mxu0 0
      %477 = vmatprep.subr.bf16.mxu0 0
      %478 = vmatpush1.bf16.msra.mxu0 0
      %479 = vmatprep.subr.bf16.mxu0 0
      %480 = vmatpush1.bf16.msra.mxu0 0
      %481 = vmatprep.subr.bf16.mxu0 0
      %482 = vmatpush1.bf16.msra.mxu0 0
      %483 = vmatprep.subr.bf16.mxu0 0
      %484 = vmatpush1.bf16.msra.mxu0 0
      %485 = vmatprep.subr.bf16.mxu0 0
      %486 = vmatpush1.bf16.msra.mxu0 0
      %487 = vmatprep.subr.bf16.mxu0 0
      %488 = vmatpush1.bf16.msra.mxu0 0
      %489 = vmatprep.subr.bf16.mxu0 0
      %490 = vmatpush1.bf16.msra.mxu0 0
      %491 = vmatprep.subr.bf16.mxu0 0
      %492 = vmatpush1.bf16.msra.mxu0 0
      %493 = vmatprep.subr.bf16.mxu0 0
      %494 = vmatpush1.bf16.msra.mxu0 0
      %495 = vmatprep.subr.bf16.mxu0 0
      %496 = vmatpush1.bf16.msra.mxu0 0
      %497 = vmatprep.subr.bf16.mxu0 0
      %498 = vmatpush1.bf16.msra.mxu0 0
      %499 = vmatprep.mubr.bf16.mxu0 0
      %500 = vmatmul.mubr.bf16.gmra.mrb[0].mxu0 %v465
      %v501 = vpop.f32.mrb[0].mxu0
      %v502 = vadd.f32 0.0, %v501
      %v503 = vpop.f32.mrb[0].mxu0
      %v504 = vpop.f32.mrb[0].mxu0
      %v505 = vpop.f32.mrb[0].mxu0
      %506 = vdwg.mxu0
      %v507 = vld [vmem:[%s6] sm:$0xf]
      %v508 = vld [vmem:[%s6 + $0x4] sm:$0xf]
      %v509 = vld [vmem:[%s6 + $0x8] sm:$0xf]
      %v510 = vld [vmem:[%s6 + $0xc] sm:$0xf]
      %v515 = vunpack.c.l.b16 %v507
      %v516 = vunpack.c.l.b16 %v508
      %v517 = vunpack.c.l.b16 %v509
      %v518 = vunpack.c.l.b16 %v510
      %v519 = vpack.c.b16 %v516, %v515
      %v520 = vpack.c.b16 %v518, %v517
      %523 = vmatprep.subr.bf16.mxu0 0
      %524 = vmatpush1.bf16.msra.mxu0 %v519
      %525 = vmatprep.subr.bf16.mxu0 0
      %526 = vmatpush1.bf16.msra.mxu0 %v520
      %527 = vmatprep.subr.bf16.mxu0 0
      %528 = vmatpush1.bf16.msra.mxu0 0
      %529 = vmatprep.subr.bf16.mxu0 0
      %530 = vmatpush1.bf16.msra.mxu0 0
      %531 = vmatprep.subr.bf16.mxu0 0
      %532 = vmatpush1.bf16.msra.mxu0 0
      %533 = vmatprep.subr.bf16.mxu0 0
      %534 = vmatpush1.bf16.msra.mxu0 0
      %535 = vmatprep.subr.bf16.mxu0 0
      %536 = vmatpush1.bf16.msra.mxu0 0
      %537 = vmatprep.subr.bf16.mxu0 0
      %538 = vmatpush1.bf16.msra.mxu0 0
      %539 = vmatprep.subr.bf16.mxu0 0
      %540 = vmatpush1.bf16.msra.mxu0 0
      %541 = vmatprep.subr.bf16.mxu0 0
      %542 = vmatpush1.bf16.msra.mxu0 0
      %543 = vmatprep.subr.bf16.mxu0 0
      %544 = vmatpush1.bf16.msra.mxu0 0
      %545 = vmatprep.subr.bf16.mxu0 0
      %546 = vmatpush1.bf16.msra.mxu0 0
      %547 = vmatprep.subr.bf16.mxu0 0
      %548 = vmatpush1.bf16.msra.mxu0 0
      %549 = vmatprep.subr.bf16.mxu0 0
      %550 = vmatpush1.bf16.msra.mxu0 0
      %551 = vmatprep.subr.bf16.mxu0 0
      %552 = vmatpush1.bf16.msra.mxu0 0
      %553 = vmatprep.subr.bf16.mxu0 0
      %554 = vmatpush1.bf16.msra.mxu0 0
      %555 = vmatprep.mubr.bf16.mxu0 0
      %556 = vmatmul.mubr.bf16.gmra.mrb[0].mxu0 %v465
      %v557 = vpop.f32.mrb[0].mxu0
      %v558 = vadd.f32 0.0, %v557
      %v559 = vpop.f32.mrb[0].mxu0
      %v560 = vpop.f32.mrb[0].mxu0
      %v561 = vpop.f32.mrb[0].mxu0
      %562 = vdwg.mxu0
      %v563 = vld [vmem:[%s8] sm:$0x1]
      %v565 = vlaneseq
      %v566 = vshrl.u32 %v565, 7
      %v567 = vsub.s32 0, %v566
      %v568 = vrot.slane %v563, %v567
      %v570 = vadd.f32 %v346, %v568
      %v571 = vpack.c.bf16 %v443, %v443
      %v572 = vpack.c.bf16 %v502, %v502
      %v573 = vpack.c.bf16 %v558, %v558
      %vm574 = vcmask 64512
      %v576 = vsel %vm574, %v571, 0
      %v579 = vsel %vm574, %v572, 0
      %581 = vmatprep.subr.bf16.mxu0 0
      %582 = vmatpush1.bf16.xpose.msra.mxu0 %v579
      %583 = vmatprep.subr.bf16.mxu0 0
      %584 = vmatpush1.bf16.xpose.msra.mxu0 0
      %585 = vmatprep.subr.bf16.mxu0 0
      %586 = vmatpush1.bf16.xpose.msra.mxu0 0
      %587 = vmatprep.subr.bf16.mxu0 0
      %588 = vmatpush1.bf16.xpose.msra.mxu0 0
      %589 = vmatprep.subr.bf16.mxu0 0
      %590 = vmatpush1.bf16.xpose.msra.mxu0 0
      %591 = vmatprep.subr.bf16.mxu0 0
      %592 = vmatpush1.bf16.xpose.msra.mxu0 0
      %593 = vmatprep.subr.bf16.mxu0 0
      %594 = vmatpush1.bf16.xpose.msra.mxu0 0
      %595 = vmatprep.subr.bf16.mxu0 0
      %596 = vmatpush1.bf16.xpose.msra.mxu0 0
      %597 = vmatprep.subr.bf16.mxu0 0
      %598 = vmatpush1.bf16.xpose.msra.mxu0 0
      %599 = vmatprep.subr.bf16.mxu0 0
      %600 = vmatpush1.bf16.xpose.msra.mxu0 0
      %601 = vmatprep.subr.bf16.mxu0 0
      %602 = vmatpush1.bf16.xpose.msra.mxu0 0
      %603 = vmatprep.subr.bf16.mxu0 0
      %604 = vmatpush1.bf16.xpose.msra.mxu0 0
      %605 = vmatprep.subr.bf16.mxu0 0
      %606 = vmatpush1.bf16.xpose.msra.mxu0 0
      %607 = vmatprep.subr.bf16.mxu0 0
      %608 = vmatpush1.bf16.xpose.msra.mxu0 0
      %609 = vmatprep.subr.bf16.mxu0 0
      %610 = vmatpush1.bf16.xpose.msra.mxu0 0
      %611 = vmatprep.subr.bf16.mxu0 0
      %612 = vmatpush1.bf16.xpose.msra.mxu0 0
      %613 = vmatprep.mubr.bf16.mxu0 0
      %614 = vmatmul.mubr.bf16.gmra.mrb[0].mxu0 %v576
      %v615 = vpop.f32.mrb[0].mxu0
      %v616 = vadd.f32 0.0, %v615
      %v617 = vpop.f32.mrb[0].mxu0
      %v618 = vpop.f32.mrb[0].mxu0
      %v619 = vpop.f32.mrb[0].mxu0
      %620 = vdwg.mxu0
      %v621 = vmul.f32 %v616, 0.35355338
      %vm622 = vcmp.ne.f32.partialorder %v621, 0.0
      %v623 = vsel %vm622, %v621, -inf
      %v624 = vsel %vm574, %v623, -inf
      %625 = vmax.xlane.f32.xlu0 %v624
      %v626 = vpop.xlane.xlu0 %625
      %v627 = vsub.f32 %v623, %v626
      %v628 = vmul.f32 %v627, 1.442695
      %v629 = vpow.pop %v628
      %v630 = vsel %vm574, %v629, 0.0
      %631 = vadd.xlane.f32.xlu0 %v630
      %v632 = vpop.xlane.xlu0 %631
      %v633 = vrcp.pop %v632
      %v634 = vmul.f32 %v629, %v633
      %v635 = vpack.c.bf16 %v634, %v634
      %v637 = vsel %vm574, %v635, 0
      %vm639 = vcmask 1043456
      %v641 = vsel %vm639, %v573, 0
      %643 = vmatprep.subr.bf16.mxu0 0
      %644 = vmatpush1.bf16.msra.mxu0 %v641
      %645 = vmatprep.subr.bf16.mxu0 0
      %646 = vmatpush1.bf16.msra.mxu0 0
      %647 = vmatprep.subr.bf16.mxu0 0
      %648 = vmatpush1.bf16.msra.mxu0 0
      %649 = vmatprep.subr.bf16.mxu0 0
      %650 = vmatpush1.bf16.msra.mxu0 0
      %651 = vmatprep.subr.bf16.mxu0 0
      %652 = vmatpush1.bf16.msra.mxu0 0
      %653 = vmatprep.subr.bf16.mxu0 0
      %654 = vmatpush1.bf16.msra.mxu0 0
      %655 = vmatprep.subr.bf16.mxu0 0
      %656 = vmatpush1.bf16.msra.mxu0 0
      %657 = vmatprep.subr.bf16.mxu0 0
      %658 = vmatpush1.bf16.msra.mxu0 0
      %659 = vmatprep.subr.bf16.mxu0 0
      %660 = vmatpush1.bf16.msra.mxu0 0
      %661 = vmatprep.subr.bf16.mxu0 0
      %662 = vmatpush1.bf16.msra.mxu0 0
      %663 = vmatprep.subr.bf16.mxu0 0
      %664 = vmatpush1.bf16.msra.mxu0 0
      %665 = vmatprep.subr.bf16.mxu0 0
      %666 = vmatpush1.bf16.msra.mxu0 0
      %667 = vmatprep.subr.bf16.mxu0 0
      %668 = vmatpush1.bf16.msra.mxu0 0
      %669 = vmatprep.subr.bf16.mxu0 0
      %670 = vmatpush1.bf16.msra.mxu0 0
      %671 = vmatprep.subr.bf16.mxu0 0
      %672 = vmatpush1.bf16.msra.mxu0 0
      %673 = vmatprep.subr.bf16.mxu0 0
      %674 = vmatpush1.bf16.msra.mxu0 0
      %675 = vmatprep.mubr.bf16.mxu0 0
      %676 = vmatmul.mubr.bf16.gmra.mrb[0].mxu0 %v637
      %v677 = vpop.f32.mrb[0].mxu0
      %v678 = vadd.f32 0.0, %v677
      %v679 = vpop.f32.mrb[0].mxu0
      %v680 = vpop.f32.mrb[0].mxu0
      %v681 = vpop.f32.mrb[0].mxu0
      %682 = vdwg.mxu0
      %v683 = vpack.c.bf16 %v678, %v678
      %v684 = vld [vmem:[%s7] sm:$0xf]
      %v686 = vsel %vm574, %v683, 0
      %v689 = vsel %vm639, %v684, 0
      %691 = vmatprep.subr.bf16.mxu0 0
      %692 = vmatpush1.bf16.msra.mxu0 %v689
      %693 = vmatprep.subr.bf16.mxu0 0
      %694 = vmatpush1.bf16.msra.mxu0 0
      %695 = vmatprep.subr.bf16.mxu0 0
      %696 = vmatpush1.bf16.msra.mxu0 0
      %697 = vmatprep.subr.bf16.mxu0 0
      %698 = vmatpush1.bf16.msra.mxu0 0
      %699 = vmatprep.subr.bf16.mxu0 0
      %700 = vmatpush1.bf16.msra.mxu0 0
      %701 = vmatprep.subr.bf16.mxu0 0
      %702 = vmatpush1.bf16.msra.mxu0 0
      %703 = vmatprep.subr.bf16.mxu0 0
      %704 = vmatpush1.bf16.msra.mxu0 0
      %705 = vmatprep.subr.bf16.mxu0 0
      %706 = vmatpush1.bf16.msra.mxu0 0
      %707 = vmatprep.subr.bf16.mxu0 0
      %708 = vmatpush1.bf16.msra.mxu0 0
      %709 = vmatprep.subr.bf16.mxu0 0
      %710 = vmatpush1.bf16.msra.mxu0 0
      %711 = vmatprep.subr.bf16.mxu0 0
      %712 = vmatpush1.bf16.msra.mxu0 0
      %713 = vmatprep.subr.bf16.mxu0 0
      %714 = vmatpush1.bf16.msra.mxu0 0
      %715 = vmatprep.subr.bf16.mxu0 0
      %716 = vmatpush1.bf16.msra.mxu0 0
      %717 = vmatprep.subr.bf16.mxu0 0
      %718 = vmatpush1.bf16.msra.mxu0 0
      %719 = vmatprep.subr.bf16.mxu0 0
      %720 = vmatpush1.bf16.msra.mxu0 0
      %721 = vmatprep.subr.bf16.mxu0 0
      %722 = vmatpush1.bf16.msra.mxu0 0
      %723 = vmatprep.mubr.bf16.mxu0 0
      %724 = vmatmul.mubr.bf16.gmra.mrb[0].mxu0 %v686
      %v725 = vpop.f32.mrb[0].mxu0
      %v726 = vadd.f32 0.0, %v725
      %v727 = vpop.f32.mrb[0].mxu0
      %v728 = vpop.f32.mrb[0].mxu0
      %v729 = vpop.f32.mrb[0].mxu0
      %730 = vdwg.mxu0
      %v731 = vadd.f32 %v570, %v726
      %733 = vrot.lane.b32.xlu0 %v571, 120
      %v734 = vpop.permute.xlu0 %733
      %736 = vrot.lane.b32.xlu0 %v572, 120
      %v737 = vpop.permute.xlu0 %736
      %v739 = vsel %vm574, %v734, 0
      %v742 = vsel %vm574, %v737, 0
      %744 = vmatprep.subr.bf16.mxu0 0
      %745 = vmatpush1.bf16.xpose.msra.mxu0 %v742
      %746 = vmatprep.subr.bf16.mxu0 0
      %747 = vmatpush1.bf16.xpose.msra.mxu0 0
      %748 = vmatprep.subr.bf16.mxu0 0
      %749 = vmatpush1.bf16.xpose.msra.mxu0 0
      %750 = vmatprep.subr.bf16.mxu0 0
      %751 = vmatpush1.bf16.xpose.msra.mxu0 0
      %752 = vmatprep.subr.bf16.mxu0 0
      %753 = vmatpush1.bf16.xpose.msra.mxu0 0
      %754 = vmatprep.subr.bf16.mxu0 0
      %755 = vmatpush1.bf16.xpose.msra.mxu0 0
      %756 = vmatprep.subr.bf16.mxu0 0
      %757 = vmatpush1.bf16.xpose.msra.mxu0 0
      %758 = vmatprep.subr.bf16.mxu0 0
      %759 = vmatpush1.bf16.xpose.msra.mxu0 0
      %760 = vmatprep.subr.bf16.mxu0 0
      %761 = vmatpush1.bf16.xpose.msra.mxu0 0
      %762 = vmatprep.subr.bf16.mxu0 0
      %763 = vmatpush1.bf16.xpose.msra.mxu0 0
      %764 = vmatprep.subr.bf16.mxu0 0
      %765 = vmatpush1.bf16.xpose.msra.mxu0 0
      %766 = vmatprep.subr.bf16.mxu0 0
      %767 = vmatpush1.bf16.xpose.msra.mxu0 0
      %768 = vmatprep.subr.bf16.mxu0 0
      %769 = vmatpush1.bf16.xpose.msra.mxu0 0
      %770 = vmatprep.subr.bf16.mxu0 0
      %771 = vmatpush1.bf16.xpose.msra.mxu0 0
      %772 = vmatprep.subr.bf16.mxu0 0
      %773 = vmatpush1.bf16.xpose.msra.mxu0 0
      %774 = vmatprep.subr.bf16.mxu0 0
      %775 = vmatpush1.bf16.xpose.msra.mxu0 0
      %776 = vmatprep.mubr.bf16.mxu0 0
      %777 = vmatmul.mubr.bf16.gmra.mrb[0].mxu0 %v739
      %v778 = vpop.f32.mrb[0].mxu0
      %v779 = vadd.f32 0.0, %v778
      %v780 = vpop.f32.mrb[0].mxu0
      %v781 = vpop.f32.mrb[0].mxu0
      %v782 = vpop.f32.mrb[0].mxu0
      %783 = vdwg.mxu0
      %v784 = vmul.f32 %v779, 0.35355338
      %vm785 = vcmp.ne.f32.partialorder %v784, 0.0
      %v786 = vsel %vm785, %v784, -inf
      %v787 = vsel %vm574, %v786, -inf
      %788 = vmax.xlane.f32.xlu0 %v787
      %v789 = vpop.xlane.xlu0 %788
      %v790 = vsub.f32 %v786, %v789
      %v791 = vmul.f32 %v790, 1.442695
      %v792 = vpow.pop %v791
      %v793 = vsel %vm574, %v792, 0.0
      %794 = vadd.xlane.f32.xlu0 %v793
      %v795 = vpop.xlane.xlu0 %794
      %v796 = vrcp.pop %v795
      %v797 = vmul.f32 %v792, %v796
      %v798 = vpack.c.bf16 %v797, %v797
      %800 = vrot.lane.b32.xlu0 %v573, 120
      %v801 = vpop.permute.xlu0 %800
      %v803 = vsel %vm574, %v798, 0
      %v806 = vsel %vm639, %v801, 0
      %808 = vmatprep.subr.bf16.mxu0 0
      %809 = vmatpush1.bf16.msra.mxu0 %v806
      %810 = vmatprep.subr.bf16.mxu0 0
      %811 = vmatpush1.bf16.msra.mxu0 0
      %812 = vmatprep.subr.bf16.mxu0 0
      %813 = vmatpush1.bf16.msra.mxu0 0
      %814 = vmatprep.subr.bf16.mxu0 0
      %815 = vmatpush1.bf16.msra.mxu0 0
      %816 = vmatprep.subr.bf16.mxu0 0
      %817 = vmatpush1.bf16.msra.mxu0 0
      %818 = vmatprep.subr.bf16.mxu0 0
      %819 = vmatpush1.bf16.msra.mxu0 0
      %820 = vmatprep.subr.bf16.mxu0 0
      %821 = vmatpush1.bf16.msra.mxu0 0
      %822 = vmatprep.subr.bf16.mxu0 0
      %823 = vmatpush1.bf16.msra.mxu0 0
      %824 = vmatprep.subr.bf16.mxu0 0
      %825 = vmatpush1.bf16.msra.mxu0 0
      %826 = vmatprep.subr.bf16.mxu0 0
      %827 = vmatpush1.bf16.msra.mxu0 0
      %828 = vmatprep.subr.bf16.mxu0 0
      %829 = vmatpush1.bf16.msra.mxu0 0
      %830 = vmatprep.subr.bf16.mxu0 0
      %831 = vmatpush1.bf16.msra.mxu0 0
      %832 = vmatprep.subr.bf16.mxu0 0
      %833 = vmatpush1.bf16.msra.mxu0 0
      %834 = vmatprep.subr.bf16.mxu0 0
      %835 = vmatpush1.bf16.msra.mxu0 0
      %836 = vmatprep.subr.bf16.mxu0 0
      %837 = vmatpush1.bf16.msra.mxu0 0
      %838 = vmatprep.subr.bf16.mxu0 0
      %839 = vmatpush1.bf16.msra.mxu0 0
      %840 = vmatprep.mubr.bf16.mxu0 0
      %841 = vmatmul.mubr.bf16.gmra.mrb[0].mxu0 %v803
      %v842 = vpop.f32.mrb[0].mxu0
      %v843 = vadd.f32 0.0, %v842
      %v844 = vpop.f32.mrb[0].mxu0
      %v845 = vpop.f32.mrb[0].mxu0
      %v846 = vpop.f32.mrb[0].mxu0
      %847 = vdwg.mxu0
      %v848 = vpack.c.bf16 %v843, %v843
      %v849 = vld [vmem:[%s7 + $0x4] sm:$0xf]
      %v851 = vsel %vm574, %v848, 0
      %v854 = vsel %vm639, %v849, 0
      %856 = vmatprep.subr.bf16.mxu0 0
      %857 = vmatpush1.bf16.msra.mxu0 %v854
      %858 = vmatprep.subr.bf16.mxu0 0
      %859 = vmatpush1.bf16.msra.mxu0 0
      %860 = vmatprep.subr.bf16.mxu0 0
      %861 = vmatpush1.bf16.msra.mxu0 0
      %862 = vmatprep.subr.bf16.mxu0 0
      %863 = vmatpush1.bf16.msra.mxu0 0
      %864 = vmatprep.subr.bf16.mxu0 0
      %865 = vmatpush1.bf16.msra.mxu0 0
      %866 = vmatprep.subr.bf16.mxu0 0
      %867 = vmatpush1.bf16.msra.mxu0 0
      %868 = vmatprep.subr.bf16.mxu0 0
      %869 = vmatpush1.bf16.msra.mxu0 0
      %870 = vmatprep.subr.bf16.mxu0 0
      %871 = vmatpush1.bf16.msra.mxu0 0
      %872 = vmatprep.subr.bf16.mxu0 0
      %873 = vmatpush1.bf16.msra.mxu0 0
      %874 = vmatprep.subr.bf16.mxu0 0
      %875 = vmatpush1.bf16.msra.mxu0 0
      %876 = vmatprep.subr.bf16.mxu0 0
      %877 = vmatpush1.bf16.msra.mxu0 0
      %878 = vmatprep.subr.bf16.mxu0 0
      %879 = vmatpush1.bf16.msra.mxu0 0
      %880 = vmatprep.subr.bf16.mxu0 0
      %881 = vmatpush1.bf16.msra.mxu0 0
      %882 = vmatprep.subr.bf16.mxu0 0
      %883 = vmatpush1.bf16.msra.mxu0 0
      %884 = vmatprep.subr.bf16.mxu0 0
      %885 = vmatpush1.bf16.msra.mxu0 0
      %886 = vmatprep.subr.bf16.mxu0 0
      %887 = vmatpush1.bf16.msra.mxu0 0
      %888 = vmatprep.mubr.bf16.mxu0 0
      %889 = vmatmul.mubr.bf16.gmra.mrb[0].mxu0 %v851
      %v890 = vpop.f32.mrb[0].mxu0
      %v891 = vadd.f32 0.0, %v890
      %v892 = vpop.f32.mrb[0].mxu0
      %v893 = vpop.f32.mrb[0].mxu0
      %v894 = vpop.f32.mrb[0].mxu0
      %895 = vdwg.mxu0
      %v896 = vadd.f32 %v731, %v891
      %897 = vrot.lane.b32.xlu0 %v571, 112
      %v898 = vpop.permute.xlu0 %897
      %899 = vrot.lane.b32.xlu0 %v572, 112
      %v900 = vpop.permute.xlu0 %899
      %v902 = vsel %vm574, %v898, 0
      %v905 = vsel %vm574, %v900, 0
      %907 = vmatprep.subr.bf16.mxu0 0
      %908 = vmatpush1.bf16.xpose.msra.mxu0 %v905
      %909 = vmatprep.subr.bf16.mxu0 0
      %910 = vmatpush1.bf16.xpose.msra.mxu0 0
      %911 = vmatprep.subr.bf16.mxu0 0
      %912 = vmatpush1.bf16.xpose.msra.mxu0 0
      %913 = vmatprep.subr.bf16.mxu0 0
      %914 = vmatpush1.bf16.xpose.msra.mxu0 0
      %915 = vmatprep.subr.bf16.mxu0 0
      %916 = vmatpush1.bf16.xpose.msra.mxu0 0
      %917 = vmatprep.subr.bf16.mxu0 0
      %918 = vmatpush1.bf16.xpose.msra.mxu0 0
      %919 = vmatprep.subr.bf16.mxu0 0
      %920 = vmatpush1.bf16.xpose.msra.mxu0 0
      %921 = vmatprep.subr.bf16.mxu0 0
      %922 = vmatpush1.bf16.xpose.msra.mxu0 0
      %923 = vmatprep.subr.bf16.mxu0 0
      %924 = vmatpush1.bf16.xpose.msra.mxu0 0
      %925 = vmatprep.subr.bf16.mxu0 0
      %926 = vmatpush1.bf16.xpose.msra.mxu0 0
      %927 = vmatprep.subr.bf16.mxu0 0
      %928 = vmatpush1.bf16.xpose.msra.mxu0 0
      %929 = vmatprep.subr.bf16.mxu0 0
      %930 = vmatpush1.bf16.xpose.msra.mxu0 0
      %931 = vmatprep.subr.bf16.mxu0 0
      %932 = vmatpush1.bf16.xpose.msra.mxu0 0
      %933 = vmatprep.subr.bf16.mxu0 0
      %934 = vmatpush1.bf16.xpose.msra.mxu0 0
      %935 = vmatprep.subr.bf16.mxu0 0
      %936 = vmatpush1.bf16.xpose.msra.mxu0 0
      %937 = vmatprep.subr.bf16.mxu0 0
      %938 = vmatpush1.bf16.xpose.msra.mxu0 0
      %939 = vmatprep.mubr.bf16.mxu0 0
      %940 = vmatmul.mubr.bf16.gmra.mrb[0].mxu0 %v902
      %v941 = vpop.f32.mrb[0].mxu0
      %v942 = vadd.f32 0.0, %v941
      %v943 = vpop.f32.mrb[0].mxu0
      %v944 = vpop.f32.mrb[0].mxu0
      %v945 = vpop.f32.mrb[0].mxu0
      %946 = vdwg.mxu0
      %v947 = vmul.f32 %v942, 0.35355338
      %vm948 = vcmp.ne.f32.partialorder %v947, 0.0
      %v949 = vsel %vm948, %v947, -inf
      %v950 = vsel %vm574, %v949, -inf
      %951 = vmax.xlane.f32.xlu0 %v950
      %v952 = vpop.xlane.xlu0 %951
      %v953 = vsub.f32 %v949, %v952
      %v954 = vmul.f32 %v953, 1.442695
      %v955 = vpow.pop %v954
      %v956 = vsel %vm574, %v955, 0.0
      %957 = vadd.xlane.f32.xlu0 %v956
      %v958 = vpop.xlane.xlu0 %957
      %v959 = vrcp.pop %v958
      %v960 = vmul.f32 %v955, %v959
      %v961 = vpack.c.bf16 %v960, %v960
      %962 = vrot.lane.b32.xlu0 %v573, 112
      %v963 = vpop.permute.xlu0 %962
      %v965 = vsel %vm574, %v961, 0
      %v968 = vsel %vm639, %v963, 0
      %970 = vmatprep.subr.bf16.mxu0 0
      %971 = vmatpush1.bf16.msra.mxu0 %v968
      %972 = vmatprep.subr.bf16.mxu0 0
      %973 = vmatpush1.bf16.msra.mxu0 0
      %974 = vmatprep.subr.bf16.mxu0 0
      %975 = vmatpush1.bf16.msra.mxu0 0
      %976 = vmatprep.subr.bf16.mxu0 0
      %977 = vmatpush1.bf16.msra.mxu0 0
      %978 = vmatprep.subr.bf16.mxu0 0
      %979 = vmatpush1.bf16.msra.mxu0 0
      %980 = vmatprep.subr.bf16.mxu0 0
      %981 = vmatpush1.bf16.msra.mxu0 0
      %982 = vmatprep.subr.bf16.mxu0 0
      %983 = vmatpush1.bf16.msra.mxu0 0
      %984 = vmatprep.subr.bf16.mxu0 0
      %985 = vmatpush1.bf16.msra.mxu0 0
      %986 = vmatprep.subr.bf16.mxu0 0
      %987 = vmatpush1.bf16.msra.mxu0 0
      %988 = vmatprep.subr.bf16.mxu0 0
      %989 = vmatpush1.bf16.msra.mxu0 0
      %990 = vmatprep.subr.bf16.mxu0 0
      %991 = vmatpush1.bf16.msra.mxu0 0
      %992 = vmatprep.subr.bf16.mxu0 0
      %993 = vmatpush1.bf16.msra.mxu0 0
      %994 = vmatprep.subr.bf16.mxu0 0
      %995 = vmatpush1.bf16.msra.mxu0 0
      %996 = vmatprep.subr.bf16.mxu0 0
      %997 = vmatpush1.bf16.msra.mxu0 0
      %998 = vmatprep.subr.bf16.mxu0 0
      %999 = vmatpush1.bf16.msra.mxu0 0
      %1000 = vmatprep.subr.bf16.mxu0 0
      %1001 = vmatpush1.bf16.msra.mxu0 0
      %1002 = vmatprep.mubr.bf16.mxu0 0
      %1003 = vmatmul.mubr.bf16.gmra.mrb[0].mxu0 %v965
      %v1004 = vpop.f32.mrb[0].mxu0
      %v1005 = vadd.f32 0.0, %v1004
      %v1006 = vpop.f32.mrb[0].mxu0
      %v1007 = vpop.f32.mrb[0].mxu0
      %v1008 = vpop.f32.mrb[0].mxu0
      %1009 = vdwg.mxu0
      %v1010 = vpack.c.bf16 %v1005, %v1005
      %v1011 = vld [vmem:[%s7 + $0x8] sm:$0xf]
      %v1013 = vsel %vm574, %v1010, 0
      %v1016 = vsel %vm639, %v1011, 0
      %1018 = vmatprep.subr.bf16.mxu0 0
      %1019 = vmatpush1.bf16.msra.mxu0 %v1016
      %1020 = vmatprep.subr.bf16.mxu0 0
      %1021 = vmatpush1.bf16.msra.mxu0 0
      %1022 = vmatprep.subr.bf16.mxu0 0
      %1023 = vmatpush1.bf16.msra.mxu0 0
      %1024 = vmatprep.subr.bf16.mxu0 0
      %1025 = vmatpush1.bf16.msra.mxu0 0
      %1026 = vmatprep.subr.bf16.mxu0 0
      %1027 = vmatpush1.bf16.msra.mxu0 0
      %1028 = vmatprep.subr.bf16.mxu0 0
      %1029 = vmatpush1.bf16.msra.mxu0 0
      %1030 = vmatprep.subr.bf16.mxu0 0
      %1031 = vmatpush1.bf16.msra.mxu0 0
      %1032 = vmatprep.subr.bf16.mxu0 0
      %1033 = vmatpush1.bf16.msra.mxu0 0
      %1034 = vmatprep.subr.bf16.mxu0 0
      %1035 = vmatpush1.bf16.msra.mxu0 0
      %1036 = vmatprep.subr.bf16.mxu0 0
      %1037 = vmatpush1.bf16.msra.mxu0 0
      %1038 = vmatprep.subr.bf16.mxu0 0
      %1039 = vmatpush1.bf16.msra.mxu0 0
      %1040 = vmatprep.subr.bf16.mxu0 0
      %1041 = vmatpush1.bf16.msra.mxu0 0
      %1042 = vmatprep.subr.bf16.mxu0 0
      %1043 = vmatpush1.bf16.msra.mxu0 0
      %1044 = vmatprep.subr.bf16.mxu0 0
      %1045 = vmatpush1.bf16.msra.mxu0 0
      %1046 = vmatprep.subr.bf16.mxu0 0
      %1047 = vmatpush1.bf16.msra.mxu0 0
      %1048 = vmatprep.subr.bf16.mxu0 0
      %1049 = vmatpush1.bf16.msra.mxu0 0
      %1050 = vmatprep.mubr.bf16.mxu0 0
      %1051 = vmatmul.mubr.bf16.gmra.mrb[0].mxu0 %v1013
      %v1052 = vpop.f32.mrb[0].mxu0
      %v1053 = vadd.f32 0.0, %v1052
      %v1054 = vpop.f32.mrb[0].mxu0
      %v1055 = vpop.f32.mrb[0].mxu0
      %v1056 = vpop.f32.mrb[0].mxu0
      %1057 = vdwg.mxu0
      %v1058 = vadd.f32 %v896, %v1053
      %1059 = vrot.lane.b32.xlu0 %v571, 104
      %v1060 = vpop.permute.xlu0 %1059
      %1061 = vrot.lane.b32.xlu0 %v572, 104
      %v1062 = vpop.permute.xlu0 %1061
      %v1064 = vsel %vm574, %v1060, 0
      %v1067 = vsel %vm574, %v1062, 0
      %1069 = vmatprep.subr.bf16.mxu0 0
      %1070 = vmatpush1.bf16.xpose.msra.mxu0 %v1067
      %1071 = vmatprep.subr.bf16.mxu0 0
      %1072 = vmatpush1.bf16.xpose.msra.mxu0 0
      %1073 = vmatprep.subr.bf16.mxu0 0
      %1074 = vmatpush1.bf16.xpose.msra.mxu0 0
      %1075 = vmatprep.subr.bf16.mxu0 0
      %1076 = vmatpush1.bf16.xpose.msra.mxu0 0
      %1077 = vmatprep.subr.bf16.mxu0 0
      %1078 = vmatpush1.bf16.xpose.msra.mxu0 0
      %1079 = vmatprep.subr.bf16.mxu0 0
      %1080 = vmatpush1.bf16.xpose.msra.mxu0 0
      %1081 = vmatprep.subr.bf16.mxu0 0
      %1082 = vmatpush1.bf16.xpose.msra.mxu0 0
      %1083 = vmatprep.subr.bf16.mxu0 0
      %1084 = vmatpush1.bf16.xpose.msra.mxu0 0
      %1085 = vmatprep.subr.bf16.mxu0 0
      %1086 = vmatpush1.bf16.xpose.msra.mxu0 0
      %1087 = vmatprep.subr.bf16.mxu0 0
      %1088 = vmatpush1.bf16.xpose.msra.mxu0 0
      %1089 = vmatprep.subr.bf16.mxu0 0
      %1090 = vmatpush1.bf16.xpose.msra.mxu0 0
      %1091 = vmatprep.subr.bf16.mxu0 0
      %1092 = vmatpush1.bf16.xpose.msra.mxu0 0
      %1093 = vmatprep.subr.bf16.mxu0 0
      %1094 = vmatpush1.bf16.xpose.msra.mxu0 0
      %1095 = vmatprep.subr.bf16.mxu0 0
      %1096 = vmatpush1.bf16.xpose.msra.mxu0 0
      %1097 = vmatprep.subr.bf16.mxu0 0
      %1098 = vmatpush1.bf16.xpose.msra.mxu0 0
      %1099 = vmatprep.subr.bf16.mxu0 0
      %1100 = vmatpush1.bf16.xpose.msra.mxu0 0
      %1101 = vmatprep.mubr.bf16.mxu0 0
      %1102 = vmatmul.mubr.bf16.gmra.mrb[0].mxu0 %v1064
      %v1103 = vpop.f32.mrb[0].mxu0
      %v1104 = vadd.f32 0.0, %v1103
      %v1105 = vpop.f32.mrb[0].mxu0
      %v1106 = vpop.f32.mrb[0].mxu0
      %v1107 = vpop.f32.mrb[0].mxu0
      %1108 = vdwg.mxu0
      %v1109 = vmul.f32 %v1104, 0.35355338
      %vm1110 = vcmp.ne.f32.partialorder %v1109, 0.0
      %v1111 = vsel %vm1110, %v1109, -inf
      %v1112 = vsel %vm574, %v1111, -inf
      %1113 = vmax.xlane.f32.xlu0 %v1112
      %v1114 = vpop.xlane.xlu0 %1113
      %v1115 = vsub.f32 %v1111, %v1114
      %v1116 = vmul.f32 %v1115, 1.442695
      %v1117 = vpow.pop %v1116
      %v1118 = vsel %vm574, %v1117, 0.0
      %1119 = vadd.xlane.f32.xlu0 %v1118
      %v1120 = vpop.xlane.xlu0 %1119
      %v1121 = vrcp.pop %v1120
      %v1122 = vmul.f32 %v1117, %v1121
      %v1123 = vpack.c.bf16 %v1122, %v1122
      %1124 = vrot.lane.b32.xlu0 %v573, 104
      %v1125 = vpop.permute.xlu0 %1124
      %v1127 = vsel %vm574, %v1123, 0
      %v1130 = vsel %vm639, %v1125, 0
      %1132 = vmatprep.subr.bf16.mxu0 0
      %1133 = vmatpush1.bf16.msra.mxu0 %v1130
      %1134 = vmatprep.subr.bf16.mxu0 0
      %1135 = vmatpush1.bf16.msra.mxu0 0
      %1136 = vmatprep.subr.bf16.mxu0 0
      %1137 = vmatpush1.bf16.msra.mxu0 0
      %1138 = vmatprep.subr.bf16.mxu0 0
      %1139 = vmatpush1.bf16.msra.mxu0 0
      %1140 = vmatprep.subr.bf16.mxu0 0
      %1141 = vmatpush1.bf16.msra.mxu0 0
      %1142 = vmatprep.subr.bf16.mxu0 0
      %1143 = vmatpush1.bf16.msra.mxu0 0
      %1144 = vmatprep.subr.bf16.mxu0 0
      %1145 = vmatpush1.bf16.msra.mxu0 0
      %1146 = vmatprep.subr.bf16.mxu0 0
      %1147 = vmatpush1.bf16.msra.mxu0 0
      %1148 = vmatprep.subr.bf16.mxu0 0
      %1149 = vmatpush1.bf16.msra.mxu0 0
      %1150 = vmatprep.subr.bf16.mxu0 0
      %1151 = vmatpush1.bf16.msra.mxu0 0
      %1152 = vmatprep.subr.bf16.mxu0 0
      %1153 = vmatpush1.bf16.msra.mxu0 0
      %1154 = vmatprep.subr.bf16.mxu0 0
      %1155 = vmatpush1.bf16.msra.mxu0 0
      %1156 = vmatprep.subr.bf16.mxu0 0
      %1157 = vmatpush1.bf16.msra.mxu0 0
      %1158 = vmatprep.subr.bf16.mxu0 0
      %1159 = vmatpush1.bf16.msra.mxu0 0
      %1160 = vmatprep.subr.bf16.mxu0 0
      %1161 = vmatpush1.bf16.msra.mxu0 0
      %1162 = vmatprep.subr.bf16.mxu0 0
      %1163 = vmatpush1.bf16.msra.mxu0 0
      %1164 = vmatprep.mubr.bf16.mxu0 0
      %1165 = vmatmul.mubr.bf16.gmra.mrb[0].mxu0 %v1127
      %v1166 = vpop.f32.mrb[0].mxu0
      %v1167 = vadd.f32 0.0, %v1166
      %v1168 = vpop.f32.mrb[0].mxu0
      %v1169 = vpop.f32.mrb[0].mxu0
      %v1170 = vpop.f32.mrb[0].mxu0
      %1171 = vdwg.mxu0
      %v1172 = vpack.c.bf16 %v1167, %v1167
      %v1173 = vld [vmem:[%s7 + $0xc] sm:$0xf]
      %v1175 = vsel %vm574, %v1172, 0
      %v1178 = vsel %vm639, %v1173, 0
      %1180 = vmatprep.subr.bf16.mxu0 0
      %1181 = vmatpush1.bf16.msra.mxu0 %v1178
      %1182 = vmatprep.subr.bf16.mxu0 0
      %1183 = vmatpush1.bf16.msra.mxu0 0
      %1184 = vmatprep.subr.bf16.mxu0 0
      %1185 = vmatpush1.bf16.msra.mxu0 0
      %1186 = vmatprep.subr.bf16.mxu0 0
      %1187 = vmatpush1.bf16.msra.mxu0 0
      %1188 = vmatprep.subr.bf16.mxu0 0
      %1189 = vmatpush1.bf16.msra.mxu0 0
      %1190 = vmatprep.subr.bf16.mxu0 0
      %1191 = vmatpush1.bf16.msra.mxu0 0
      %1192 = vmatprep.subr.bf16.mxu0 0
      %1193 = vmatpush1.bf16.msra.mxu0 0
      %1194 = vmatprep.subr.bf16.mxu0 0
      %1195 = vmatpush1.bf16.msra.mxu0 0
      %1196 = vmatprep.subr.bf16.mxu0 0
      %1197 = vmatpush1.bf16.msra.mxu0 0
      %1198 = vmatprep.subr.bf16.mxu0 0
      %1199 = vmatpush1.bf16.msra.mxu0 0
      %1200 = vmatprep.subr.bf16.mxu0 0
      %1201 = vmatpush1.bf16.msra.mxu0 0
      %1202 = vmatprep.subr.bf16.mxu0 0
      %1203 = vmatpush1.bf16.msra.mxu0 0
      %1204 = vmatprep.subr.bf16.mxu0 0
      %1205 = vmatpush1.bf16.msra.mxu0 0
      %1206 = vmatprep.subr.bf16.mxu0 0
      %1207 = vmatpush1.bf16.msra.mxu0 0
      %1208 = vmatprep.subr.bf16.mxu0 0
      %1209 = vmatpush1.bf16.msra.mxu0 0
      %1210 = vmatprep.subr.bf16.mxu0 0
      %1211 = vmatpush1.bf16.msra.mxu0 0
      %1212 = vmatprep.mubr.bf16.mxu0 0
      %1213 = vmatmul.mubr.bf16.gmra.mrb[0].mxu0 %v1175
      %v1214 = vpop.f32.mrb[0].mxu0
      %v1215 = vadd.f32 0.0, %v1214
      %v1216 = vpop.f32.mrb[0].mxu0
      %v1217 = vpop.f32.mrb[0].mxu0
      %v1218 = vpop.f32.mrb[0].mxu0
      %1219 = vdwg.mxu0
      %v1220 = vadd.f32 %v1058, %v1215
      %1221 = vst.msk [vmem:[%s344] sm:$0xff] %vm349, %v1220
      %p1222 = scmp.lt.s32.totalorder %s20, 1
      %s1223 = scalar_select %p1222, %s20, 1
      %s1224 = smul.addr %s1223, 8
      %s1225 = scalar_lea.vmem %s9, %s1224
      // Predicated region
      $region57: #{decoder_layer.4} parent=55 // pred_check
        %p1226 = pneg %p237
      $region58: #{decoder_layer.4} parent=55 // pred_check_branch
        %1228 = sbr.rel (%p1226) target = $region60
      $region59: #{decoder_layer.4} parent=55 // pred_region
        _
      $region60: #{decoder_layer.4} parent=55 // pred_fallthru
        _
    $region56: #{decoder_layer.4} parent=5 // pred_fallthru
      _
    %p1229 = scmp.le.s32.totalorder 2, %s15
    // Predicated region
    $region61: #{decoder_layer.4} parent=5 // pred_check
      %p1230 = pneg %p1229
    $region62: #{decoder_layer.4} parent=5 // pred_check_branch
      %1232 = sbr.rel (%p1230) target = $region64
    $region63: #{decoder_layer.4} parent=5 // pred_region
      %s1233 = ssub.s32 %s15, 2
      // Predicated region
      $region65: #{decoder_layer.4} parent=63 // pred_check
        %p1234 = pneg %p243
      $region66: #{decoder_layer.4} parent=63 // pred_check_branch
        %1236 = sbr.rel (%p1234) target = $region68
      $region67: #{decoder_layer.4} parent=63 // pred_region
        %p1237 = scmp.lt.s32.totalorder %s21, 1
        %s1238 = scalar_select %p1237, %s21, 1
        %s1239 = smul.addr %s1238, 8
        %s1240 = scalar_lea.vmem %s9, %s1239
      $region68: #{decoder_layer.4} parent=63 // pred_fallthru
        _
    $region64: #{decoder_layer.4} parent=5 // pred_fallthru
      _
  $region6: #{decoder_layer.4} parent=0 // loop_footer
    %s19 = sadd.s32 1, %s15
  $region7: #{decoder_layer.4} parent=0 // loop_footer_branch
    %14 = sbr.rel target = $region3
  $region8: #{decoder_layer.4} parent=0 // loop_exit
    _

// kernel: decoder_layer.5
$region0: #{decoder_layer.5}
  #allocation0 [shape = 'u32[]', space=smem, size = 0x4, offset = 0x4, fixed_abs, tag = 'smem constant byte address 0x4 - core index']
  #allocation1 [shape = 'u32[144,128]{1,0:T(1,128)}', space=vmem, size = 0x12000, scoped, tag = 'internal scratch']
  %s0 = inlined_call_operand.vmem [shape: f32[2,8,32], index: 0, kind: input, shape index: {}]
  %s1 = inlined_call_operand.vmem [shape: f32[1,32], index: 1, kind: input, shape index: {}]
  %s2 = inlined_call_operand.vmem [shape: f32[1,32], index: 2, kind: input, shape index: {}]
  %s3 = inlined_call_operand.vmem [shape: bf16[32,2048], index: 3, kind: input, shape index: {}]
  %s4 = inlined_call_operand.vmem [shape: f32[1,2048], index: 4, kind: input, shape index: {}]
  %s5 = inlined_call_operand.vmem [shape: bf16[2048,32], index: 5, kind: input, shape index: {}]
  %s6 = inlined_call_operand.vmem [shape: f32[1,32], index: 6, kind: input, shape index: {}]
  %s7 = inlined_call_operand.hbm [shape: f32[2,8,32], index: 7, kind: output, shape index: {}]
  %s8 = sld [smem:[#allocation0]]
  $region61: #{decoder_layer.5} parent=0
    _
  %s10 = ssub.s32 1, %s8
  %s11 = scalar_select 0, %s10, %s8
  $region1: #{decoder_layer.5} parent=0
    #allocation2 [shape = 'u8[8192]{0}', space=vmem, size = 0x2000, scoped, tag = 'output window, operand 0']
    #allocation3 [shape = 's32[2]{0}', space=sflag, size = 0x8, scoped, tag = 'scoped memory for decoder_layer.5']
    %12 = vsyncpa [#allocation3], 0
    %s13 = scalar_lea.sflag [#allocation3], 1
    %14 = vsyncpa %s13, 0
    loop: start=0, step=1, limit=4
    $region2: #{decoder_layer.5} parent=1 // loop_pre_header
      _
    $region3: #{decoder_layer.5} parent=1 // loop_header
      %s16 = sphi 0, %s20
      %p17 = scmp.ge.s32.totalorder %s16, 4
      %s26 = sphi 0, %s28
      %s29 = sphi 0, %s26
      %s30 = sphi 0, %s29
      %s46 = sphi 0, %s30
      %s50 = sphi 0, %s50
      %s52 = sphi 0, %s50
      %s53 = sphi 0, %s52
      %s67 = sphi 0, %s53
      %s71 = sphi 0, %s71
      %s73 = sphi 0, %s71
      %s74 = sphi 0, %s73
      %s88 = sphi 0, %s74
      %s92 = sphi 0, %s92
      %s94 = sphi 0, %s92
      %s95 = sphi 0, %s94
      %s109 = sphi 0, %s95
      %s113 = sphi 0, %s113
      %s115 = sphi 0, %s113
      %s116 = sphi 0, %s115
      %s130 = sphi 0, %s116
      %s134 = sphi 0, %s134
      %s136 = sphi 0, %s134
      %s137 = sphi 0, %s136
      %s151 = sphi 0, %s137
      %s155 = sphi 0, %s155
      %s157 = sphi 0, %s155
      %s158 = sphi 0, %s157
      %s172 = sphi 0, %s158
      %s178 = sphi 0, %s180
      %s181 = sphi 0, %s178
      %s182 = sphi 0, %s181
      %s198 = sphi 0, %s182
    $region4: #{decoder_layer.5} parent=1 // loop_header_branch
      %19 = sbr.rel (%p17) target = $region8
    $region5: #{decoder_layer.5} parent=1 // loop_body
      %s21 = ssub.s32 %s16, 1
      %s22 = ssub.s32 %s16, 2
      %s23 = sadd.s32 %s16, 1
      %s24 = ssub.s32 %s16, %s23
      %p25 = scmp.eq.s32.totalorder %s24, 0
      %s27 = sadd.s32 %s26, 1
      %s28 = scalar_select %p25, %s26, %s27
      %p31 = pneg %p25
      %p32 = scmp.eq.s32.totalorder %s16, 1
      %p33 = por %p31, %p32
      %p34 = scmp.ne.s32.totalorder %s26, %s29
      %p35 = scmp.eq.s32.totalorder %s16, 0
      %p36 = por %p34, %p35
      %p37 = scmp.ne.s32.totalorder %s26, %s29
      %p38 = scmp.eq.s32.totalorder %s21, 1
      %p39 = por %p37, %p38
      %p40 = scmp.ne.s32.totalorder %s29, %s30
      %p41 = scmp.eq.s32.totalorder %s21, 0
      %p42 = por %p40, %p41
      %p43 = scmp.ne.s32.totalorder %s29, %s30
      %p44 = scmp.eq.s32.totalorder %s22, 1
      %p45 = por %p43, %p44
      %p47 = scmp.ne.s32.totalorder %s30, %s46
      %p48 = scmp.eq.s32.totalorder %s22, 0
      %p49 = por %p47, %p48
      %s51 = sadd.s32 %s50, 1
      %p54 = scmp.eq.s32.totalorder %s16, 1
      %p55 = scmp.ne.s32.totalorder %s50, %s52
      %p56 = scmp.eq.s32.totalorder %s16, 0
      %p57 = por %p55, %p56
      %p58 = scmp.ne.s32.totalorder %s50, %s52
      %p59 = scmp.eq.s32.totalorder %s21, 1
      %p60 = por %p58, %p59
      %p61 = scmp.ne.s32.totalorder %s52, %s53
      %p62 = scmp.eq.s32.totalorder %s21, 0
      %p63 = por %p61, %p62
      %p64 = scmp.ne.s32.totalorder %s52, %s53
      %p65 = scmp.eq.s32.totalorder %s22, 1
      %p66 = por %p64, %p65
      %p68 = scmp.ne.s32.totalorder %s53, %s67
      %p69 = scmp.eq.s32.totalorder %s22, 0
      %p70 = por %p68, %p69
      %s72 = sadd.s32 %s71, 1
      %p75 = scmp.eq.s32.totalorder %s16, 1
      %p76 = scmp.ne.s32.totalorder %s71, %s73
      %p77 = scmp.eq.s32.totalorder %s16, 0
      %p78 = por %p76, %p77
      %p79 = scmp.ne.s32.totalorder %s71, %s73
      %p80 = scmp.eq.s32.totalorder %s21, 1
      %p81 = por %p79, %p80
      %p82 = scmp.ne.s32.totalorder %s73, %s74
      %p83 = scmp.eq.s32.totalorder %s21, 0
      %p84 = por %p82, %p83
      %p85 = scmp.ne.s32.totalorder %s73, %s74
      %p86 = scmp.eq.s32.totalorder %s22, 1
      %p87 = por %p85, %p86
      %p89 = scmp.ne.s32.totalorder %s74, %s88
      %p90 = scmp.eq.s32.totalorder %s22, 0
      %p91 = por %p89, %p90
      %s93 = sadd.s32 %s92, 1
      %p96 = scmp.eq.s32.totalorder %s16, 1
      %p97 = scmp.ne.s32.totalorder %s92, %s94
      %p98 = scmp.eq.s32.totalorder %s16, 0
      %p99 = por %p97, %p98
      %p100 = scmp.ne.s32.totalorder %s92, %s94
      %p101 = scmp.eq.s32.totalorder %s21, 1
      %p102 = por %p100, %p101
      %p103 = scmp.ne.s32.totalorder %s94, %s95
      %p104 = scmp.eq.s32.totalorder %s21, 0
      %p105 = por %p103, %p104
      %p106 = scmp.ne.s32.totalorder %s94, %s95
      %p107 = scmp.eq.s32.totalorder %s22, 1
      %p108 = por %p106, %p107
      %p110 = scmp.ne.s32.totalorder %s95, %s109
      %p111 = scmp.eq.s32.totalorder %s22, 0
      %p112 = por %p110, %p111
      %s114 = sadd.s32 %s113, 1
      %p117 = scmp.eq.s32.totalorder %s16, 1
      %p118 = scmp.ne.s32.totalorder %s113, %s115
      %p119 = scmp.eq.s32.totalorder %s16, 0
      %p120 = por %p118, %p119
      %p121 = scmp.ne.s32.totalorder %s113, %s115
      %p122 = scmp.eq.s32.totalorder %s21, 1
      %p123 = por %p121, %p122
      %p124 = scmp.ne.s32.totalorder %s115, %s116
      %p125 = scmp.eq.s32.totalorder %s21, 0
      %p126 = por %p124, %p125
      %p127 = scmp.ne.s32.totalorder %s115, %s116
      %p128 = scmp.eq.s32.totalorder %s22, 1
      %p129 = por %p127, %p128
      %p131 = scmp.ne.s32.totalorder %s116, %s130
      %p132 = scmp.eq.s32.totalorder %s22, 0
      %p133 = por %p131, %p132
      %s135 = sadd.s32 %s134, 1
      %p138 = scmp.eq.s32.totalorder %s16, 1
      %p139 = scmp.ne.s32.totalorder %s134, %s136
      %p140 = scmp.eq.s32.totalorder %s16, 0
      %p141 = por %p139, %p140
      %p142 = scmp.ne.s32.totalorder %s134, %s136
      %p143 = scmp.eq.s32.totalorder %s21, 1
      %p144 = por %p142, %p143
      %p145 = scmp.ne.s32.totalorder %s136, %s137
      %p146 = scmp.eq.s32.totalorder %s21, 0
      %p147 = por %p145, %p146
      %p148 = scmp.ne.s32.totalorder %s136, %s137
      %p149 = scmp.eq.s32.totalorder %s22, 1
      %p150 = por %p148, %p149
      %p152 = scmp.ne.s32.totalorder %s137, %s151
      %p153 = scmp.eq.s32.totalorder %s22, 0
      %p154 = por %p152, %p153
      %s156 = sadd.s32 %s155, 1
      %p159 = scmp.eq.s32.totalorder %s16, 1
      %p160 = scmp.ne.s32.totalorder %s155, %s157
      %p161 = scmp.eq.s32.totalorder %s16, 0
      %p162 = por %p160, %p161
      %p163 = scmp.ne.s32.totalorder %s155, %s157
      %p164 = scmp.eq.s32.totalorder %s21, 1
      %p165 = por %p163, %p164
      %p166 = scmp.ne.s32.totalorder %s157, %s158
      %p167 = scmp.eq.s32.totalorder %s21, 0
      %p168 = por %p166, %p167
      %p169 = scmp.ne.s32.totalorder %s157, %s158
      %p170 = scmp.eq.s32.totalorder %s22, 1
      %p171 = por %p169, %p170
      %p173 = scmp.ne.s32.totalorder %s158, %s172
      %p174 = scmp.eq.s32.totalorder %s22, 0
      %p175 = por %p173, %p174
      %s176 = ssub.s32 %s16, %s23
      %p177 = scmp.eq.s32.totalorder %s176, 0
      %s179 = sadd.s32 %s178, 1
      %s180 = scalar_select %p177, %s178, %s179
      %p183 = pneg %p177
      %p184 = scmp.eq.s32.totalorder %s16, 1
      %p185 = por %p183, %p184
      %p186 = scmp.ne.s32.totalorder %s178, %s181
      %p187 = scmp.eq.s32.totalorder %s16, 0
      %p188 = por %p186, %p187
      %p189 = scmp.ne.s32.totalorder %s178, %s181
      %p190 = scmp.eq.s32.totalorder %s21, 1
      %p191 = por %p189, %p190
      %p192 = scmp.ne.s32.totalorder %s181, %s182
      %p193 = scmp.eq.s32.totalorder %s21, 0
      %p194 = por %p192, %p193
      %p195 = scmp.ne.s32.totalorder %s181, %s182
      %p196 = scmp.eq.s32.totalorder %s22, 1
      %p197 = por %p195, %p196
      %p199 = scmp.ne.s32.totalorder %s182, %s198
      %p200 = scmp.eq.s32.totalorder %s22, 0
      %p201 = por %p199, %p200
      %p202 = scmp.le.s32.totalorder 1, %s16
      %p203 = scmp.lt.s32.totalorder %s16, 3
      %p204 = pnand %p202, %p203
      %p205 = pneg %p204
      // Predicated region
      $region9: #{decoder_layer.5} parent=5 // pred_check
        _
      $region10: #{decoder_layer.5} parent=5 // pred_check_branch
        %207 = sbr.rel (%p204) target = $region12
      $region11: #{decoder_layer.5} parent=5 // pred_region
        %s208 = ssub.s32 %s16, 1
        // Predicated region
        $region13: #{decoder_layer.5} parent=11 // pred_check
          %p209 = pneg %p63
        $region14: #{decoder_layer.5} parent=11 // pred_check_branch
          %211 = sbr.rel (%p209) target = $region16
        $region15: #{decoder_layer.5} parent=11 // pred_region
          _
        $region16: #{decoder_layer.5} parent=11 // pred_fallthru
          _
        // Predicated region
        $region17: #{decoder_layer.5} parent=11 // pred_check
          %p212 = pneg %p84
        $region18: #{decoder_layer.5} parent=11 // pred_check_branch
          %214 = sbr.rel (%p212) target = $region20
        $region19: #{decoder_layer.5} parent=11 // pred_region
          _
        $region20: #{decoder_layer.5} parent=11 // pred_fallthru
          _
        // Predicated region
        $region21: #{decoder_layer.5} parent=11 // pred_check
          %p215 = pneg %p105
        $region22: #{decoder_layer.5} parent=11 // pred_check_branch
          %217 = sbr.rel (%p215) target = $region24
        $region23: #{decoder_layer.5} parent=11 // pred_region
          _
        $region24: #{decoder_layer.5} parent=11 // pred_fallthru
          _
        // Predicated region
        $region25: #{decoder_layer.5} parent=11 // pred_check
          %p218 = pneg %p126
        $region26: #{decoder_layer.5} parent=11 // pred_check_branch
          %220 = sbr.rel (%p218) target = $region28
        $region27: #{decoder_layer.5} parent=11 // pred_region
          _
        $region28: #{decoder_layer.5} parent=11 // pred_fallthru
          _
        // Predicated region
        $region29: #{decoder_layer.5} parent=11 // pred_check
          %p221 = pneg %p147
        $region30: #{decoder_layer.5} parent=11 // pred_check_branch
          %223 = sbr.rel (%p221) target = $region32
        $region31: #{decoder_layer.5} parent=11 // pred_region
          _
        $region32: #{decoder_layer.5} parent=11 // pred_fallthru
          _
        // Predicated region
        $region33: #{decoder_layer.5} parent=11 // pred_check
          %p224 = pneg %p168
        $region34: #{decoder_layer.5} parent=11 // pred_check_branch
          %226 = sbr.rel (%p224) target = $region36
        $region35: #{decoder_layer.5} parent=11 // pred_region
          _
        $region36: #{decoder_layer.5} parent=11 // pred_fallthru
          _
      $region12: #{decoder_layer.5} parent=5 // pred_fallthru
        _
      %p227 = scmp.lt.s32.totalorder %s16, 2
      // Predicated region
      $region37: #{decoder_layer.5} parent=5 // pred_check
        %p228 = pneg %p227
      $region38: #{decoder_layer.5} parent=5 // pred_check_branch
        %230 = sbr.rel (%p228) target = $region40
      $region39: #{decoder_layer.5} parent=5 // pred_region
        // Predicated region
        $region41: #{decoder_layer.5} parent=39 // pred_check
          %p231 = pneg %p36
        $region42: #{decoder_layer.5} parent=39 // pred_check_branch
          %233 = sbr.rel (%p231) target = $region44
        $region43: #{decoder_layer.5} parent=39 // pred_region
          %p234 = scmp.lt.s32.totalorder %s16, 1
          %s235 = scalar_select %p234, %s16, 1
          %s236 = smul.addr %s235, 8
          %s237 = scalar_lea.vmem %s0, %s236
        $region44: #{decoder_layer.5} parent=39 // pred_fallthru
          _
      $region40: #{decoder_layer.5} parent=5 // pred_fallthru
        _
      %p238 = scmp.le.s32.totalorder 1, %s16
      %p239 = scmp.lt.s32.totalorder %s16, 3
      %p240 = pnand %p238, %p239
      %p241 = pneg %p240
      // Predicated region
      $region45: #{decoder_layer.5} parent=5 // pred_check
        _
      $region46: #{decoder_layer.5} parent=5 // pred_check_branch
        %243 = sbr.rel (%p240) target = $region48
      $region47: #{decoder_layer.5} parent=5 // pred_region
        %s244 = ssub.s32 %s16, 1
        %p245 = scmp.lt.s32.totalorder %s21, 1
        %s246 = scalar_select %p245, %s21, 1
        %s247 = smul.addr %s246, 8
        %s248 = scalar_lea.vmem %s0, %s247
        %p249 = pneg %p42
        %p250 = pneg %p39
        %p251 = pneg %p63
        %p252 = pneg %p60
        %p253 = pneg %p84
        %p254 = pneg %p81
        %p255 = pneg %p105
        %p256 = pneg %p102
        %p257 = pneg %p126
        %p258 = pneg %p123
        %p259 = pneg %p147
        %p260 = pneg %p144
        %p261 = pneg %p168
        %p262 = pneg %p165
        %p263 = pneg %p194
        %p264 = pneg %p191
        %s265 = sand.u32 %s181, 1
        %s266 = scalar_lea.sflag [#allocation3], %s265
        %s267 = sand.u32 %s181, 1
        %s268 = smul.addr %s267, 8
        %s269 = scalar_lea.vmem [#allocation2], %s268
        %p270 = scmp.lt.s32.totalorder %s21, 1
        %s271 = scalar_select %p270, %s21, 1
        %s272 = smul.addr %s271, 8
        %s273 = scalar_lea.vmem %s0, %s272
        %v275 = vld [vmem:[%s273] sm:$0xff]
        %v276 = vld [vmem:[%s1] sm:$0x1]
        %v277 = vld [vmem:[%s2] sm:$0x1]
        %vm278 = vcmask 261120
        %v279 = vsel %vm278, %v275, 0.0
        %280 = vadd.xlane.f32.xlu0 %v279
        %v281 = vpop.xlane.xlu0 %280
        %v282 = vrcp.pop 32.0
        %v283 = vmul.f32 %v281, %v282
        %v284 = vsub.f32 %v275, %v283
        %v285 = vmul.f32 %v284, %v284
        %v286 = vsel %vm278, %v285, 0.0
        %287 = vadd.xlane.f32.xlu0 %v286
        %v288 = vpop.xlane.xlu0 %287
        %v289 = vrcp.pop 31.0
        %v290 = vmul.f32 %v288, %v289
        %v291 = vrsqrt.pop %v290
        %v292 = vmul.f32 %v290, %v291
        %vm293 = vcmp.eq.f32.partialorder %v290, inf
        %v294 = vsel %vm293, %v290, %v292
        %vm295 = vcmp.eq.f32.partialorder %v290, 0.0
        %v296 = vand.u32 %v290, 2147483648
        %v297 = vsel %vm295, %v296, %v294
        %v298 = vadd.f32 %v297, 1e-06
        %v299 = vrcp.pop %v298
        %v301 = vlaneseq
        %v302 = vshrl.u32 %v301, 7
        %v303 = vsub.s32 0, %v302
        %v304 = vrot.slane %v276, %v303
        %v306 = vmul.f32 %v304, %v284
        %v307 = vmul.f32 %v306, %v299
        %v309 = vlaneseq
        %v310 = vshrl.u32 %v309, 7
        %v311 = vsub.s32 0, %v310
        %v312 = vrot.slane %v277, %v311
        %v314 = vadd.f32 %v307, %v312
        %v315 = vpack.c.bf16 %v314, %v314
        %v316 = vld [vmem:[%s3] sm:$0xff]
        %v317 = vld [vmem:[%s3 + $0x8] sm:$0xff]
        %v318 = vld [vmem:[%s3 + $0x10] sm:$0xff]
        %v319 = vld [vmem:[%s3 + $0x18] sm:$0xff]
        %v320 = vld [vmem:[%s3 + $0x20] sm:$0xff]
        %v321 = vld [vmem:[%s3 + $0x28] sm:$0xff]
        %v322 = vld [vmem:[%s3 + $0x30] sm:$0xff]
        %v323 = vld [vmem:[%s3 + $0x38] sm:$0xff]
        %v324 = vld [vmem:[%s3 + $0x40] sm:$0xff]
        %v325 = vld [vmem:[%s3 + $0x48] sm:$0xff]
        %v326 = vld [vmem:[%s3 + $0x50] sm:$0xff]
        %v327 = vld [vmem:[%s3 + $0x58] sm:$0xff]
        %v328 = vld [vmem:[%s3 + $0x60] sm:$0xff]
        %v329 = vld [vmem:[%s3 + $0x68] sm:$0xff]
        %v330 = vld [vmem:[%s3 + $0x70] sm:$0xff]
        %v331 = vld [vmem:[%s3 + $0x78] sm:$0xff]
        %v332 = vld [vmem:[%s3 + $0x80] sm:$0xff]
        %v333 = vld [vmem:[%s3 + $0x88] sm:$0xff]
        %v334 = vld [vmem:[%s3 + $0x90] sm:$0xff]
        %v335 = vld [vmem:[%s3 + $0x98] sm:$0xff]
        %v336 = vld [vmem:[%s3 + $0xa0] sm:$0xff]
        %v337 = vld [vmem:[%s3 + $0xa8] sm:$0xff]
        %v338 = vld [vmem:[%s3 + $0xb0] sm:$0xff]
        %v339 = vld [vmem:[%s3 + $0xb8] sm:$0xff]
        %v340 = vld [vmem:[%s3 + $0xc0] sm:$0xff]
        %v341 = vld [vmem:[%s3 + $0xc8] sm:$0xff]
        %v342 = vld [vmem:[%s3 + $0xd0] sm:$0xff]
        %v343 = vld [vmem:[%s3 + $0xd8] sm:$0xff]
        %v344 = vld [vmem:[%s3 + $0xe0] sm:$0xff]
        %v345 = vld [vmem:[%s3 + $0xe8] sm:$0xff]
        %v346 = vld [vmem:[%s3 + $0xf0] sm:$0xff]
        %v347 = vld [vmem:[%s3 + $0xf8] sm:$0xff]
        %v348 = vld [vmem:[%s4] sm:$0xff]
        %v349 = vld [vmem:[%s4 + $0x8] sm:$0xff]
        %v352 = vlaneseq
        %v353 = vshrl.u32 %v352, 7
        %v354 = vsub.s32 0, %v353
        %v355 = vrot.slane %v348, %v354
        %v356 = vlaneseq
        %v357 = vshrl.u32 %v356, 7
        %v358 = vsub.s32 1, %v357
        %v359 = vrot.slane %v348, %v358
        %v360 = vlaneseq
        %v361 = vshrl.u32 %v360, 7
        %v362 = vsub.s32 2, %v361
        %v363 = vrot.slane %v348, %v362
        %v364 = vlaneseq
        %v365 = vshrl.u32 %v364, 7
        %v366 = vsub.s32 3, %v365
        %v367 = vrot.slane %v348, %v366
        %v368 = vlaneseq
        %v369 = vshrl.u32 %v368, 7
        %v370 = vsub.s32 4, %v369
        %v371 = vrot.slane %v348, %v370
        %v372 = vlaneseq
        %v373 = vshrl.u32 %v372, 7
        %v374 = vsub.s32 5, %v373
        %v375 = vrot.slane %v348, %v374
        %v376 = vlaneseq
        %v377 = vshrl.u32 %v376, 7
        %v378 = vsub.s32 6, %v377
        %v379 = vrot.slane %v348, %v378
        %v380 = vlaneseq
        %v381 = vshrl.u32 %v380, 7
        %v382 = vsub.s32 7, %v381
        %v383 = vrot.slane %v348, %v382
        %v384 = vlaneseq
        %v385 = vshrl.u32 %v384, 7
        %v386 = vsub.s32 0, %v385
        %v387 = vrot.slane %v349, %v386
        %v388 = vlaneseq
        %v389 = vshrl.u32 %v388, 7
        %v390 = vsub.s32 1, %v389
        %v391 = vrot.slane %v349, %v390
        %v392 = vlaneseq
        %v393 = vshrl.u32 %v392, 7
        %v394 = vsub.s32 2, %v393
        %v395 = vrot.slane %v349, %v394
        %v396 = vlaneseq
        %v397 = vshrl.u32 %v396, 7
        %v398 = vsub.s32 3, %v397
        %v399 = vrot.slane %v349, %v398
        %v400 = vlaneseq
        %v401 = vshrl.u32 %v400, 7
        %v402 = vsub.s32 4, %v401
        %v403 = vrot.slane %v349, %v402
        %v404 = vlaneseq
        %v405 = vshrl.u32 %v404, 7
        %v406 = vsub.s32 5, %v405
        %v407 = vrot.slane %v349, %v406
        %v408 = vlaneseq
        %v409 = vshrl.u32 %v408, 7
        %v410 = vsub.s32 6, %v409
        %v411 = vrot.slane %v349, %v410
        %v412 = vlaneseq
        %v413 = vshrl.u32 %v412, 7
        %v414 = vsub.s32 7, %v413
        %v415 = vrot.slane %v349, %v414
        %v464 = vunpack.c.l.b16 %v316
        %v465 = vunpack.c.h.b16 %v316
        %v466 = vunpack.c.l.b16 %v317
        %v467 = vunpack.c.h.b16 %v317
        %v468 = vunpack.c.l.b16 %v318
        %v469 = vunpack.c.h.b16 %v318
        %v470 = vunpack.c.l.b16 %v319
        %v471 = vunpack.c.h.b16 %v319
        %v472 = vunpack.c.l.b16 %v320
        %v473 = vunpack.c.h.b16 %v320
        %v474 = vunpack.c.l.b16 %v321
        %v475 = vunpack.c.h.b16 %v321
        %v476 = vunpack.c.l.b16 %v322
        %v477 = vunpack.c.h.b16 %v322
        %v478 = vunpack.c.l.b16 %v323
        %v479 = vunpack.c.h.b16 %v323
        %v480 = vunpack.c.l.b16 %v324
        %v481 = vunpack.c.h.b16 %v324
        %v482 = vunpack.c.l.b16 %v325
        %v483 = vunpack.c.h.b16 %v325
        %v484 = vunpack.c.l.b16 %v326
        %v485 = vunpack.c.h.b16 %v326
        %v486 = vunpack.c.l.b16 %v327
        %v487 = vunpack.c.h.b16 %v327
        %v488 = vunpack.c.l.b16 %v328
        %v489 = vunpack.c.h.b16 %v328
        %v490 = vunpack.c.l.b16 %v329
        %v491 = vunpack.c.h.b16 %v329
        %v492 = vunpack.c.l.b16 %v330
        %v493 = vunpack.c.h.b16 %v330
        %v494 = vunpack.c.l.b16 %v331
        %v495 = vunpack.c.h.b16 %v331
        %v496 = vunpack.c.l.b16 %v332
        %v497 = vunpack.c.h.b16 %v332
        %v498 = vunpack.c.l.b16 %v333
        %v499 = vunpack.c.h.b16 %v333
        %v500 = vunpack.c.l.b16 %v334
        %v501 = vunpack.c.h.b16 %v334
        %v502 = vunpack.c.l.b16 %v335
        %v503 = vunpack.c.h.b16 %v335
        %v504 = vunpack.c.l.b16 %v336
        %v505 = vunpack.c.h.b16 %v336
        %v506 = vunpack.c.l.b16 %v337
        %v507 = vunpack.c.h.b16 %v337
        %v508 = vunpack.c.l.b16 %v338
        %v509 = vunpack.c.h.b16 %v338
        %v510 = vunpack.c.l.b16 %v339
        %v511 = vunpack.c.h.b16 %v339
        %v512 = vunpack.c.l.b16 %v340
        %v513 = vunpack.c.h.b16 %v340
        %v514 = vunpack.c.l.b16 %v341
        %v515 = vunpack.c.h.b16 %v341
        %v516 = vunpack.c.l.b16 %v342
        %v517 = vunpack.c.h.b16 %v342
        %v518 = vunpack.c.l.b16 %v343
        %v519 = vunpack.c.h.b16 %v343
        %v520 = vunpack.c.l.b16 %v344
        %v521 = vunpack.c.h.b16 %v344
        %v522 = vunpack.c.l.b16 %v345
        %v523 = vunpack.c.h.b16 %v345
        %v524 = vunpack.c.l.b16 %v346
        %v525 = vunpack.c.h.b16 %v346
        %v526 = vunpack.c.l.b16 %v347
        %v527 = vunpack.c.h.b16 %v347
        %v528 = vpack.c.b16 %v480, %v464
        %v529 = vpack.c.b16 %v481, %v465
        %v530 = vpack.c.b16 %v482, %v466
        %v531 = vpack.c.b16 %v483, %v467
        %v532 = vpack.c.b16 %v484, %v468
        %v533 = vpack.c.b16 %v485, %v469
        %v534 = vpack.c.b16 %v486, %v470
        %v535 = vpack.c.b16 %v487, %v471
        %v536 = vpack.c.b16 %v488, %v472
        %v537 = vpack.c.b16 %v489, %v473
        %v538 = vpack.c.b16 %v490, %v474
        %v539 = vpack.c.b16 %v491, %v475
        %v540 = vpack.c.b16 %v492, %v476
        %v541 = vpack.c.b16 %v493, %v477
        %v542 = vpack.c.b16 %v494, %v478
        %v543 = vpack.c.b16 %v495, %v479
        %v544 = vpack.c.b16 %v512, %v496
        %v545 = vpack.c.b16 %v513, %v497
        %v546 = vpack.c.b16 %v514, %v498
        %v547 = vpack.c.b16 %v515, %v499
        %v548 = vpack.c.b16 %v516, %v500
        %v549 = vpack.c.b16 %v517, %v501
        %v550 = vpack.c.b16 %v518, %v502
        %v551 = vpack.c.b16 %v519, %v503
        %v552 = vpack.c.b16 %v520, %v504
        %v553 = vpack.c.b16 %v521, %v505
        %v554 = vpack.c.b16 %v522, %v506
        %v555 = vpack.c.b16 %v523, %v507
        %v556 = vpack.c.b16 %v524, %v508
        %v557 = vpack.c.b16 %v525, %v509
        %v558 = vpack.c.b16 %v526, %v510
        %v559 = vpack.c.b16 %v527, %v511
        %v593 = vsel %vm278, %v315, 0
        %595 = vmatprep.subr.bf16.mxu0 %v529
        %596 = vmatpush1.bf16.msra.mxu0 %v528
        %597 = vmatprep.subr.bf16.mxu0 %v545
        %598 = vmatpush1.bf16.msra.mxu0 %v544
        %599 = vmatprep.subr.bf16.mxu0 0
        %600 = vmatpush1.bf16.msra.mxu0 0
        %601 = vmatprep.subr.bf16.mxu0 0
        %602 = vmatpush1.bf16.msra.mxu0 0
        %603 = vmatprep.subr.bf16.mxu0 0
        %604 = vmatpush1.bf16.msra.mxu0 0
        %605 = vmatprep.subr.bf16.mxu0 0
        %606 = vmatpush1.bf16.msra.mxu0 0
        %607 = vmatprep.subr.bf16.mxu0 0
        %608 = vmatpush1.bf16.msra.mxu0 0
        %609 = vmatprep.subr.bf16.mxu0 0
        %610 = vmatpush1.bf16.msra.mxu0 0
        %611 = vmatprep.subr.bf16.mxu0 0
        %612 = vmatpush1.bf16.msra.mxu0 0
        %613 = vmatprep.subr.bf16.mxu0 0
        %614 = vmatpush1.bf16.msra.mxu0 0
        %615 = vmatprep.subr.bf16.mxu0 0
        %616 = vmatpush1.bf16.msra.mxu0 0
        %617 = vmatprep.subr.bf16.mxu0 0
        %618 = vmatpush1.bf16.msra.mxu0 0
        %619 = vmatprep.subr.bf16.mxu0 0
        %620 = vmatpush1.bf16.msra.mxu0 0
        %621 = vmatprep.subr.bf16.mxu0 0
        %622 = vmatpush1.bf16.msra.mxu0 0
        %623 = vmatprep.subr.bf16.mxu0 0
        %624 = vmatpush1.bf16.msra.mxu0 0
        %625 = vmatprep.subr.bf16.mxu0 0
        %626 = vmatpush1.bf16.msra.mxu0 0
        %627 = vmatprep.mubr.bf16.mxu0 0
        %628 = vmatmul.mubr.bf16.gmra.mrb[0].mxu0 %v593
        %v629 = vpop.f32.mrb[0].mxu0
        %v630 = vadd.f32 %v355, %v629
        %v631 = vpop.f32.mrb[0].mxu0
        %v632 = vadd.f32 %v359, %v631
        %v633 = vpop.f32.mrb[0].mxu0
        %v634 = vpop.f32.mrb[0].mxu0
        %635 = vdwg.mxu0
        %636 = vmatprep.subr.bf16.mxu0 %v531
        %637 = vmatpush1.bf16.msra.mxu0 %v530
        %638 = vmatprep.subr.bf16.mxu0 %v547
        %639 = vmatpush1.bf16.msra.mxu0 %v546
        %640 = vmatprep.subr.bf16.mxu0 0
        %641 = vmatpush1.bf16.msra.mxu0 0
        %642 = vmatprep.subr.bf16.mxu0 0
        %643 = vmatpush1.bf16.msra.mxu0 0
        %644 = vmatprep.subr.bf16.mxu0 0
        %645 = vmatpush1.bf16.msra.mxu0 0
        %646 = vmatprep.subr.bf16.mxu0 0
        %647 = vmatpush1.bf16.msra.mxu0 0
        %648 = vmatprep.subr.bf16.mxu0 0
        %649 = vmatpush1.bf16.msra.mxu0 0
        %650 = vmatprep.subr.bf16.mxu0 0
        %651 = vmatpush1.bf16.msra.mxu0 0
        %652 = vmatprep.subr.bf16.mxu0 0
        %653 = vmatpush1.bf16.msra.mxu0 0
        %654 = vmatprep.subr.bf16.mxu0 0
        %655 = vmatpush1.bf16.msra.mxu0 0
        %656 = vmatprep.subr.bf16.mxu0 0
        %657 = vmatpush1.bf16.msra.mxu0 0
        %658 = vmatprep.subr.bf16.mxu0 0
        %659 = vmatpush1.bf16.msra.mxu0 0
        %660 = vmatprep.subr.bf16.mxu0 0
        %661 = vmatpush1.bf16.msra.mxu0 0
        %662 = vmatprep.subr.bf16.mxu0 0
        %663 = vmatpush1.bf16.msra.mxu0 0
        %664 = vmatprep.subr.bf16.mxu0 0
        %665 = vmatpush1.bf16.msra.mxu0 0
        %666 = vmatprep.subr.bf16.mxu0 0
        %667 = vmatpush1.bf16.msra.mxu0 0
        %668 = vmatprep.mubr.bf16.mxu0 0
        %669 = vmatmul.mubr.bf16.gmra.mrb[0].mxu0 %v593
        %v670 = vpop.f32.mrb[0].mxu0
        %v671 = vadd.f32 %v363, %v670
        %v672 = vpop.f32.mrb[0].mxu0
        %v673 = vadd.f32 %v367, %v672
        %v674 = vpop.f32.mrb[0].mxu0
        %v675 = vpop.f32.mrb[0].mxu0
        %676 = vdwg.mxu0
        %677 = vmatprep.subr.bf16.mxu0 %v533
        %678 = vmatpush1.bf16.msra.mxu0 %v532
        %679 = vmatprep.subr.bf16.mxu0 %v549
        %680 = vmatpush1.bf16.msra.mxu0 %v548
        %681 = vmatprep.subr.bf16.mxu0 0
        %682 = vmatpush1.bf16.msra.mxu0 0
        %683 = vmatprep.subr.bf16.mxu0 0
        %684 = vmatpush1.bf16.msra.mxu0 0
        %685 = vmatprep.subr.bf16.mxu0 0
        %686 = vmatpush1.bf16.msra.mxu0 0
        %687 = vmatprep.subr.bf16.mxu0 0
        %688 = vmatpush1.bf16.msra.mxu0 0
        %689 = vmatprep.subr.bf16.mxu0 0
        %690 = vmatpush1.bf16.msra.mxu0 0
        %691 = vmatprep.subr.bf16.mxu0 0
        %692 = vmatpush1.bf16.msra.mxu0 0
        %693 = vmatprep.subr.bf16.mxu0 0
        %694 = vmatpush1.bf16.msra.mxu0 0
        %695 = vmatprep.subr.bf16.mxu0 0
        %696 = vmatpush1.bf16.msra.mxu0 0
        %697 = vmatprep.subr.bf16.mxu0 0
        %698 = vmatpush1.bf16.msra.mxu0 0
        %699 = vmatprep.subr.bf16.mxu0 0
        %700 = vmatpush1.bf16.msra.mxu0 0
        %701 = vmatprep.subr.bf16.mxu0 0
        %702 = vmatpush1.bf16.msra.mxu0 0
        %703 = vmatprep.subr.bf16.mxu0 0
        %704 = vmatpush1.bf16.msra.mxu0 0
        %705 = vmatprep.subr.bf16.mxu0 0
        %706 = vmatpush1.bf16.msra.mxu0 0
        %707 = vmatprep.subr.bf16.mxu0 0
        %708 = vmatpush1.bf16.msra.mxu0 0
        %709 = vmatprep.mubr.bf16.mxu0 0
        %710 = vmatmul.mubr.bf16.gmra.mrb[0].mxu0 %v593
        %v711 = vpop.f32.mrb[0].mxu0
        %v712 = vadd.f32 %v371, %v711
        %v713 = vpop.f32.mrb[0].mxu0
        %v714 = vadd.f32 %v375, %v713
        %v715 = vpop.f32.mrb[0].mxu0
        %v716 = vpop.f32.mrb[0].mxu0
        %717 = vdwg.mxu0
        %718 = vmatprep.subr.bf16.mxu0 %v535
        %719 = vmatpush1.bf16.msra.mxu0 %v534
        %720 = vmatprep.subr.bf16.mxu0 %v551
        %721 = vmatpush1.bf16.msra.mxu0 %v550
        %722 = vmatprep.subr.bf16.mxu0 0
        %723 = vmatpush1.bf16.msra.mxu0 0
        %724 = vmatprep.subr.bf16.mxu0 0
        %725 = vmatpush1.bf16.msra.mxu0 0
        %726 = vmatprep.subr.bf16.mxu0 0
        %727 = vmatpush1.bf16.msra.mxu0 0
        %728 = vmatprep.subr.bf16.mxu0 0
        %729 = vmatpush1.bf16.msra.mxu0 0
        %730 = vmatprep.subr.bf16.mxu0 0
        %731 = vmatpush1.bf16.msra.mxu0 0
        %732 = vmatprep.subr.bf16.mxu0 0
        %733 = vmatpush1.bf16.msra.mxu0 0
        %734 = vmatprep.subr.bf16.mxu0 0
        %735 = vmatpush1.bf16.msra.mxu0 0
        %736 = vmatprep.subr.bf16.mxu0 0
        %737 = vmatpush1.bf16.msra.mxu0 0
        %738 = vmatprep.subr.bf16.mxu0 0
        %739 = vmatpush1.bf16.msra.mxu0 0
        %740 = vmatprep.subr.bf16.mxu0 0
        %741 = vmatpush1.bf16.msra.mxu0 0
        %742 = vmatprep.subr.bf16.mxu0 0
        %743 = vmatpush1.bf16.msra.mxu0 0
        %744 = vmatprep.subr.bf16.mxu0 0
        %745 = vmatpush1.bf16.msra.mxu0 0
        %746 = vmatprep.subr.bf16.mxu0 0
        %747 = vmatpush1.bf16.msra.mxu0 0
        %748 = vmatprep.subr.bf16.mxu0 0
        %749 = vmatpush1.bf16.msra.mxu0 0
        %750 = vmatprep.mubr.bf16.mxu0 0
        %751 = vmatmul.mubr.bf16.gmra.mrb[0].mxu0 %v593
        %v752 = vpop.f32.mrb[0].mxu0
        %v753 = vadd.f32 %v379, %v752
        %v754 = vpop.f32.mrb[0].mxu0
        %v755 = vadd.f32 %v383, %v754
        %v756 = vpop.f32.mrb[0].mxu0
        %v757 = vpop.f32.mrb[0].mxu0
        %758 = vdwg.mxu0
        %759 = vmatprep.subr.bf16.mxu0 %v537
        %760 = vmatpush1.bf16.msra.mxu0 %v536
        %761 = vmatprep.subr.bf16.mxu0 %v553
        %762 = vmatpush1.bf16.msra.mxu0 %v552
        %763 = vmatprep.subr.bf16.mxu0 0
        %764 = vmatpush1.bf16.msra.mxu0 0
        %765 = vmatprep.subr.bf16.mxu0 0
        %766 = vmatpush1.bf16.msra.mxu0 0
        %767 = vmatprep.subr.bf16.mxu0 0
        %768 = vmatpush1.bf16.msra.mxu0 0
        %769 = vmatprep.subr.bf16.mxu0 0
        %770 = vmatpush1.bf16.msra.mxu0 0
        %771 = vmatprep.subr.bf16.mxu0 0
        %772 = vmatpush1.bf16.msra.mxu0 0
        %773 = vmatprep.subr.bf16.mxu0 0
        %774 = vmatpush1.bf16.msra.mxu0 0
        %775 = vmatprep.subr.bf16.mxu0 0
        %776 = vmatpush1.bf16.msra.mxu0 0
        %777 = vmatprep.subr.bf16.mxu0 0
        %778 = vmatpush1.bf16.msra.mxu0 0
        %779 = vmatprep.subr.bf16.mxu0 0
        %780 = vmatpush1.bf16.msra.mxu0 0
        %781 = vmatprep.subr.bf16.mxu0 0
        %782 = vmatpush1.bf16.msra.mxu0 0
        %783 = vmatprep.subr.bf16.mxu0 0
        %784 = vmatpush1.bf16.msra.mxu0 0
        %785 = vmatprep.subr.bf16.mxu0 0
        %786 = vmatpush1.bf16.msra.mxu0 0
        %787 = vmatprep.subr.bf16.mxu0 0
        %788 = vmatpush1.bf16.msra.mxu0 0
        %789 = vmatprep.subr.bf16.mxu0 0
        %790 = vmatpush1.bf16.msra.mxu0 0
        %791 = vmatprep.mubr.bf16.mxu0 0
        %792 = vmatmul.mubr.bf16.gmra.mrb[0].mxu0 %v593
        %v793 = vpop.f32.mrb[0].mxu0
        %v794 = vadd.f32 %v387, %v793
        %v795 = vpop.f32.mrb[0].mxu0
        %v796 = vadd.f32 %v391, %v795
        %v797 = vpop.f32.mrb[0].mxu0
        %v798 = vpop.f32.mrb[0].mxu0
        %799 = vdwg.mxu0
        %800 = vmatprep.subr.bf16.mxu0 %v539
        %801 = vmatpush1.bf16.msra.mxu0 %v538
        %802 = vmatprep.subr.bf16.mxu0 %v555
        %803 = vmatpush1.bf16.msra.mxu0 %v554
        %804 = vmatprep.subr.bf16.mxu0 0
        %805 = vmatpush1.bf16.msra.mxu0 0
        %806 = vmatprep.subr.bf16.mxu0 0
        %807 = vmatpush1.bf16.msra.mxu0 0
        %808 = vmatprep.subr.bf16.mxu0 0
        %809 = vmatpush1.bf16.msra.mxu0 0
        %810 = vmatprep.subr.bf16.mxu0 0
        %811 = vmatpush1.bf16.msra.mxu0 0
        %812 = vmatprep.subr.bf16.mxu0 0
        %813 = vmatpush1.bf16.msra.mxu0 0
        %814 = vmatprep.subr.bf16.mxu0 0
        %815 = vmatpush1.bf16.msra.mxu0 0
        %816 = vmatprep.subr.bf16.mxu0 0
        %817 = vmatpush1.bf16.msra.mxu0 0
        %818 = vmatprep.subr.bf16.mxu0 0
        %819 = vmatpush1.bf16.msra.mxu0 0
        %820 = vmatprep.subr.bf16.mxu0 0
        %821 = vmatpush1.bf16.msra.mxu0 0
        %822 = vmatprep.subr.bf16.mxu0 0
        %823 = vmatpush1.bf16.msra.mxu0 0
        %824 = vmatprep.subr.bf16.mxu0 0
        %825 = vmatpush1.bf16.msra.mxu0 0
        %826 = vmatprep.subr.bf16.mxu0 0
        %827 = vmatpush1.bf16.msra.mxu0 0
        %828 = vmatprep.subr.bf16.mxu0 0
        %829 = vmatpush1.bf16.msra.mxu0 0
        %830 = vmatprep.subr.bf16.mxu0 0
        %831 = vmatpush1.bf16.msra.mxu0 0
        %832 = vmatprep.mubr.bf16.mxu0 0
        %833 = vmatmul.mubr.bf16.gmra.mrb[0].mxu0 %v593
        %v834 = vpop.f32.mrb[0].mxu0
        %v835 = vadd.f32 %v395, %v834
        %v836 = vpop.f32.mrb[0].mxu0
        %v837 = vadd.f32 %v399, %v836
        %v838 = vpop.f32.mrb[0].mxu0
        %v839 = vpop.f32.mrb[0].mxu0
        %840 = vdwg.mxu0
        %841 = vmatprep.subr.bf16.mxu0 %v541
        %842 = vmatpush1.bf16.msra.mxu0 %v540
        %843 = vmatprep.subr.bf16.mxu0 %v557
        %844 = vmatpush1.bf16.msra.mxu0 %v556
        %845 = vmatprep.subr.bf16.mxu0 0
        %846 = vmatpush1.bf16.msra.mxu0 0
        %847 = vmatprep.subr.bf16.mxu0 0
        %848 = vmatpush1.bf16.msra.mxu0 0
        %849 = vmatprep.subr.bf16.mxu0 0
        %850 = vmatpush1.bf16.msra.mxu0 0
        %851 = vmatprep.subr.bf16.mxu0 0
        %852 = vmatpush1.bf16.msra.mxu0 0
        %853 = vmatprep.subr.bf16.mxu0 0
        %854 = vmatpush1.bf16.msra.mxu0 0
        %855 = vmatprep.subr.bf16.mxu0 0
        %856 = vmatpush1.bf16.msra.mxu0 0
        %857 = vmatprep.subr.bf16.mxu0 0
        %858 = vmatpush1.bf16.msra.mxu0 0
        %859 = vmatprep.subr.bf16.mxu0 0
        %860 = vmatpush1.bf16.msra.mxu0 0
        %861 = vmatprep.subr.bf16.mxu0 0
        %862 = vmatpush1.bf16.msra.mxu0 0
        %863 = vmatprep.subr.bf16.mxu0 0
        %864 = vmatpush1.bf16.msra.mxu0 0
        %865 = vmatprep.subr.bf16.mxu0 0
        %866 = vmatpush1.bf16.msra.mxu0 0
        %867 = vmatprep.subr.bf16.mxu0 0
        %868 = vmatpush1.bf16.msra.mxu0 0
        %869 = vmatprep.subr.bf16.mxu0 0
        %870 = vmatpush1.bf16.msra.mxu0 0
        %871 = vmatprep.subr.bf16.mxu0 0
        %872 = vmatpush1.bf16.msra.mxu0 0
        %873 = vmatprep.mubr.bf16.mxu0 0
        %874 = vmatmul.mubr.bf16.gmra.mrb[0].mxu0 %v593
        %v875 = vpop.f32.mrb[0].mxu0
        %v876 = vadd.f32 %v403, %v875
        %v877 = vpop.f32.mrb[0].mxu0
        %v878 = vadd.f32 %v407, %v877
        %v879 = vpop.f32.mrb[0].mxu0
        %v880 = vpop.f32.mrb[0].mxu0
        %881 = vdwg.mxu0
        %882 = vmatprep.subr.bf16.mxu0 %v543
        %883 = vmatpush1.bf16.msra.mxu0 %v542
        %884 = vmatprep.subr.bf16.mxu0 %v559
        %885 = vmatpush1.bf16.msra.mxu0 %v558
        %886 = vmatprep.subr.bf16.mxu0 0
        %887 = vmatpush1.bf16.msra.mxu0 0
        %888 = vmatprep.subr.bf16.mxu0 0
        %889 = vmatpush1.bf16.msra.mxu0 0
        %890 = vmatprep.subr.bf16.mxu0 0
        %891 = vmatpush1.bf16.msra.mxu0 0
        %892 = vmatprep.subr.bf16.mxu0 0
        %893 = vmatpush1.bf16.msra.mxu0 0
        %894 = vmatprep.subr.bf16.mxu0 0
        %895 = vmatpush1.bf16.msra.mxu0 0
        %896 = vmatprep.subr.bf16.mxu0 0
        %897 = vmatpush1.bf16.msra.mxu0 0
        %898 = vmatprep.subr.bf16.mxu0 0
        %899 = vmatpush1.bf16.msra.mxu0 0
        %900 = vmatprep.subr.bf16.mxu0 0
        %901 = vmatpush1.bf16.msra.mxu0 0
        %902 = vmatprep.subr.bf16.mxu0 0
        %903 = vmatpush1.bf16.msra.mxu0 0
        %904 = vmatprep.subr.bf16.mxu0 0
        %905 = vmatpush1.bf16.msra.mxu0 0
        %906 = vmatprep.subr.bf16.mxu0 0
        %907 = vmatpush1.bf16.msra.mxu0 0
        %908 = vmatprep.subr.bf16.mxu0 0
        %909 = vmatpush1.bf16.msra.mxu0 0
        %910 = vmatprep.subr.bf16.mxu0 0
        %911 = vmatpush1.bf16.msra.mxu0 0
        %912 = vmatprep.subr.bf16.mxu0 0
        %913 = vmatpush1.bf16.msra.mxu0 0
        %914 = vmatprep.mubr.bf16.mxu0 0
        %915 = vmatmul.mubr.bf16.gmra.mrb[0].mxu0 %v593
        %v916 = vpop.f32.mrb[0].mxu0
        %v917 = vadd.f32 %v411, %v916
        %v918 = vpop.f32.mrb[0].mxu0
        %v919 = vadd.f32 %v415, %v918
        %v920 = vpop.f32.mrb[0].mxu0
        %v921 = vpop.f32.mrb[0].mxu0
        %922 = vdwg.mxu0
        %v923 = vmax.f32 %v630, 0.0
        %v924 = vmax.f32 %v632, 0.0
        %v925 = vmax.f32 %v671, 0.0
        %v926 = vmax.f32 %v673, 0.0
        %v927 = vmax.f32 %v712, 0.0
        %v928 = vmax.f32 %v714, 0.0
        %v929 = vmax.f32 %v753, 0.0
        %v930 = vmax.f32 %v755, 0.0
        %v931 = vmax.f32 %v794, 0.0
        %v932 = vmax.f32 %v796, 0.0
        %v933 = vmax.f32 %v835, 0.0
        %v934 = vmax.f32 %v837, 0.0
        %v935 = vmax.f32 %v876, 0.0
        %v936 = vmax.f32 %v878, 0.0
        %v937 = vmax.f32 %v917, 0.0
        %v938 = vmax.f32 %v919, 0.0
        %v939 = vpack.c.bf16 %v923, %v923
        %v940 = vpack.c.bf16 %v924, %v924
        %v941 = vpack.c.bf16 %v925, %v925
        %v942 = vpack.c.bf16 %v926, %v926
        %v943 = vpack.c.bf16 %v927, %v927
        %v944 = vpack.c.bf16 %v928, %v928
        %v945 = vpack.c.bf16 %v929, %v929
        %v946 = vpack.c.bf16 %v930, %v930
        %v947 = vpack.c.bf16 %v931, %v931
        %v948 = vpack.c.bf16 %v932, %v932
        %v949 = vpack.c.bf16 %v933, %v933
        %v950 = vpack.c.bf16 %v934, %v934
        %v951 = vpack.c.bf16 %v935, %v935
        %v952 = vpack.c.bf16 %v936, %v936
        %v953 = vpack.c.bf16 %v937, %v937
        %v954 = vpack.c.bf16 %v938, %v938
        %v955 = vld [vmem:[%s5] sm:$0xf]
        %v956 = vld [vmem:[%s5 + $0x4] sm:$0xf]
        %v957 = vld [vmem:[%s5 + $0x8] sm:$0xf]
        %v958 = vld [vmem:[%s5 + $0xc] sm:$0xf]
        %v959 = vld [vmem:[%s5 + $0x10] sm:$0xf]
        %v960 = vld [vmem:[%s5 + $0x14] sm:$0xf]
        %v961 = vld [vmem:[%s5 + $0x18] sm:$0xf]
        %v962 = vld [vmem:[%s5 + $0x1c] sm:$0xf]
        %v963 = vld [vmem:[%s5 + $0x20] sm:$0xf]
        %v964 = vld [vmem:[%s5 + $0x24] sm:$0xf]
        %v965 = vld [vmem:[%s5 + $0x28] sm:$0xf]
        %v966 = vld [vmem:[%s5 + $0x2c] sm:$0xf]
        %v967 = vld [vmem:[%s5 + $0x30] sm:$0xf]
        %v968 = vld [vmem:[%s5 + $0x34] sm:$0xf]
        %v969 = vld [vmem:[%s5 + $0x38] sm:$0xf]
        %v970 = vld [vmem:[%s5 + $0x3c] sm:$0xf]
        %v971 = vld [vmem:[%s5 + $0x40] sm:$0xf]
        %v972 = vld [vmem:[%s5 + $0x44] sm:$0xf]
        %v973 = vld [vmem:[%s5 + $0x48] sm:$0xf]
        %v974 = vld [vmem:[%s5 + $0x4c] sm:$0xf]
        %v975 = vld [vmem:[%s5 + $0x50] sm:$0xf]
        %v976 = vld [vmem:[%s5 + $0x54] sm:$0xf]
        %v977 = vld [vmem:[%s5 + $0x58] sm:$0xf]
        %v978 = vld [vmem:[%s5 + $0x5c] sm:$0xf]
        %v979 = vld [vmem:[%s5 + $0x60] sm:$0xf]
        %v980 = vld [vmem:[%s5 + $0x64] sm:$0xf]
        %v981 = vld [vmem:[%s5 + $0x68] sm:$0xf]
        %v982 = vld [vmem:[%s5 + $0x6c] sm:$0xf]
        %v983 = vld [vmem:[%s5 + $0x70] sm:$0xf]
        %v984 = vld [vmem:[%s5 + $0x74] sm:$0xf]
        %v985 = vld [vmem:[%s5 + $0x78] sm:$0xf]
        %v986 = vld [vmem:[%s5 + $0x7c] sm:$0xf]
        %v987 = vld [vmem:[%s5 + $0x80] sm:$0xf]
        %v988 = vld [vmem:[%s5 + $0x84] sm:$0xf]
        %v989 = vld [vmem:[%s5 + $0x88] sm:$0xf]
        %v990 = vld [vmem:[%s5 + $0x8c] sm:$0xf]
        %v991 = vld [vmem:[%s5 + $0x90] sm:$0xf]
        %v992 = vld [vmem:[%s5 + $0x94] sm:$0xf]
        %v993 = vld [vmem:[%s5 + $0x98] sm:$0xf]
        %v994 = vld [vmem:[%s5 + $0x9c] sm:$0xf]
        %v995 = vld [vmem:[%s5 + $0xa0] sm:$0xf]
        %v996 = vld [vmem:[%s5 + $0xa4] sm:$0xf]
        %v997 = vld [vmem:[%s5 + $0xa8] sm:$0xf]
        %v998 = vld [vmem:[%s5 + $0xac] sm:$0xf]
        %v999 = vld [vmem:[%s5 + $0xb0] sm:$0xf]
        %v1000 = vld [vmem:[%s5 + $0xb4] sm:$0xf]
        %v1001 = vld [vmem:[%s5 + $0xb8] sm:$0xf]
        %v1002 = vld [vmem:[%s5 + $0xbc] sm:$0xf]
        %v1003 = vld [vmem:[%s5 + $0xc0] sm:$0xf]
        %v1004 = vld [vmem:[%s5 + $0xc4] sm:$0xf]
        %v1005 = vld [vmem:[%s5 + $0xc8] sm:$0xf]
        %v1006 = vld [vmem:[%s5 + $0xcc] sm:$0xf]
        %v1007 = vld [vmem:[%s5 + $0xd0] sm:$0xf]
        %v1008 = vld [vmem:[%s5 + $0xd4] sm:$0xf]
        %v1009 = vld [vmem:[%s5 + $0xd8] sm:$0xf]
        %v1010 = vld [vmem:[%s5 + $0xdc] sm:$0xf]
        %v1011 = vld [vmem:[%s5 + $0xe0] sm:$0xf]
        %v1012 = vld [vmem:[%s5 + $0xe4] sm:$0xf]
        %v1013 = vld [vmem:[%s5 + $0xe8] sm:$0xf]
        %v1014 = vld [vmem:[%s5 + $0xec] sm:$0xf]
        %v1015 = vld [vmem:[%s5 + $0xf0] sm:$0xf]
        %v1016 = vld [vmem:[%s5 + $0xf4] sm:$0xf]
        %v1017 = vld [vmem:[%s5 + $0xf8] sm:$0xf]
        %v1018 = vld [vmem:[%s5 + $0xfc] sm:$0xf]
        %v1019 = vld [vmem:[%s5 + $0x100] sm:$0xf]
        %v1020 = vld [vmem:[%s5 + $0x104] sm:$0xf]
        %v1021 = vld [vmem:[%s5 + $0x108] sm:$0xf]
        %v1022 = vld [vmem:[%s5 + $0x10c] sm:$0xf]
        %v1023 = vld [vmem:[%s5 + $0x110] sm:$0xf]
        %v1024 = vld [vmem:[%s5 + $0x114] sm:$0xf]
        %v1025 = vld [vmem:[%s5 + $0x118] sm:$0xf]
        %v1026 = vld [vmem:[%s5 + $0x11c] sm:$0xf]
        %v1027 = vld [vmem:[%s5 + $0x120] sm:$0xf]
        %v1028 = vld [vmem:[%s5 + $0x124] sm:$0xf]
        %v1029 = vld [vmem:[%s5 + $0x128] sm:$0xf]
        %v1030 = vld [vmem:[%s5 + $0x12c] sm:$0xf]
        %v1031 = vld [vmem:[%s5 + $0x130] sm:$0xf]
        %v1032 = vld [vmem:[%s5 + $0x134] sm:$0xf]
        %v1033 = vld [vmem:[%s5 + $0x138] sm:$0xf]
        %v1034 = vld [vmem:[%s5 + $0x13c] sm:$0xf]
        %v1035 = vld [vmem:[%s5 + $0x140] sm:$0xf]
        %v1036 = vld [vmem:[%s5 + $0x144] sm:$0xf]
        %v1037 = vld [vmem:[%s5 + $0x148] sm:$0xf]
        %v1038 = vld [vmem:[%s5 + $0x14c] sm:$0xf]
        %v1039 = vld [vmem:[%s5 + $0x150] sm:$0xf]
        %v1040 = vld [vmem:[%s5 + $0x154] sm:$0xf]
        %v1041 = vld [vmem:[%s5 + $0x158] sm:$0xf]
        %v1042 = vld [vmem:[%s5 + $0x15c] sm:$0xf]
        %v1043 = vld [vmem:[%s5 + $0x160] sm:$0xf]
        %v1044 = vld [vmem:[%s5 + $0x164] sm:$0xf]
        %v1045 = vld [vmem:[%s5 + $0x168] sm:$0xf]
        %v1046 = vld [vmem:[%s5 + $0x16c] sm:$0xf]
        %v1047 = vld [vmem:[%s5 + $0x170] sm:$0xf]
        %v1048 = vld [vmem:[%s5 + $0x174] sm:$0xf]
        %v1049 = vld [vmem:[%s5 + $0x178] sm:$0xf]
        %v1050 = vld [vmem:[%s5 + $0x17c] sm:$0xf]
        %v1051 = vld [vmem:[%s5 + $0x180] sm:$0xf]
        %v1052 = vld [vmem:[%s5 + $0x184] sm:$0xf]
        %v1053 = vld [vmem:[%s5 + $0x188] sm:$0xf]
        %v1054 = vld [vmem:[%s5 + $0x18c] sm:$0xf]
        %v1055 = vld [vmem:[%s5 + $0x190] sm:$0xf]
        %v1056 = vld [vmem:[%s5 + $0x194] sm:$0xf]
        %v1057 = vld [vmem:[%s5 + $0x198] sm:$0xf]
        %v1058 = vld [vmem:[%s5 + $0x19c] sm:$0xf]
        %v1059 = vld [vmem:[%s5 + $0x1a0] sm:$0xf]
        %v1060 = vld [vmem:[%s5 + $0x1a4] sm:$0xf]
        %v1061 = vld [vmem:[%s5 + $0x1a8] sm:$0xf]
        %v1062 = vld [vmem:[%s5 + $0x1ac] sm:$0xf]
        %v1063 = vld [vmem:[%s5 + $0x1b0] sm:$0xf]
        %v1064 = vld [vmem:[%s5 + $0x1b4] sm:$0xf]
        %v1065 = vld [vmem:[%s5 + $0x1b8] sm:$0xf]
        %v1066 = vld [vmem:[%s5 + $0x1bc] sm:$0xf]
        %v1067 = vld [vmem:[%s5 + $0x1c0] sm:$0xf]
        %v1068 = vld [vmem:[%s5 + $0x1c4] sm:$0xf]
        %v1069 = vld [vmem:[%s5 + $0x1c8] sm:$0xf]
        %v1070 = vld [vmem:[%s5 + $0x1cc] sm:$0xf]
        %v1071 = vld [vmem:[%s5 + $0x1d0] sm:$0xf]
        %v1072 = vld [vmem:[%s5 + $0x1d4] sm:$0xf]
        %v1073 = vld [vmem:[%s5 + $0x1d8] sm:$0xf]
        %v1074 = vld [vmem:[%s5 + $0x1dc] sm:$0xf]
        %v1075 = vld [vmem:[%s5 + $0x1e0] sm:$0xf]
        %v1076 = vld [vmem:[%s5 + $0x1e4] sm:$0xf]
        %v1077 = vld [vmem:[%s5 + $0x1e8] sm:$0xf]
        %v1078 = vld [vmem:[%s5 + $0x1ec] sm:$0xf]
        %v1079 = vld [vmem:[%s5 + $0x1f0] sm:$0xf]
        %v1080 = vld [vmem:[%s5 + $0x1f4] sm:$0xf]
        %v1081 = vld [vmem:[%s5 + $0x1f8] sm:$0xf]
        %v1082 = vld [vmem:[%s5 + $0x1fc] sm:$0xf]
        %v1083 = vld [vmem:[%s5 + $0x200] sm:$0xf]
        %v1084 = vld [vmem:[%s5 + $0x204] sm:$0xf]
        %v1085 = vld [vmem:[%s5 + $0x208] sm:$0xf]
        %v1086 = vld [vmem:[%s5 + $0x20c] sm:$0xf]
        %v1087 = vld [vmem:[%s5 + $0x210] sm:$0xf]
        %v1088 = vld [vmem:[%s5 + $0x214] sm:$0xf]
        %v1089 = vld [vmem:[%s5 + $0x218] sm:$0xf]
        %v1090 = vld [vmem:[%s5 + $0x21c] sm:$0xf]
        %v1091 = vld [vmem:[%s5 + $0x220] sm:$0xf]
        %v1092 = vld [vmem:[%s5 + $0x224] sm:$0xf]
        %v1093 = vld [vmem:[%s5 + $0x228] sm:$0xf]
        %v1094 = vld [vmem:[%s5 + $0x22c] sm:$0xf]
        %v1095 = vld [vmem:[%s5 + $0x230] sm:$0xf]
        %v1096 = vld [vmem:[%s5 + $0x234] sm:$0xf]
        %v1097 = vld [vmem:[%s5 + $0x238] sm:$0xf]
        %v1098 = vld [vmem:[%s5 + $0x23c] sm:$0xf]
        %v1099 = vld [vmem:[%s5 + $0x240] sm:$0xf]
        %v1100 = vld [vmem:[%s5 + $0x244] sm:$0xf]
        %v1101 = vld [vmem:[%s5 + $0x248] sm:$0xf]
        %v1102 = vld [vmem:[%s5 + $0x24c] sm:$0xf]
        %v1103 = vld [vmem:[%s5 + $0x250] sm:$0xf]
        %v1104 = vld [vmem:[%s5 + $0x254] sm:$0xf]
        %v1105 = vld [vmem:[%s5 + $0x258] sm:$0xf]
        %v1106 = vld [vmem:[%s5 + $0x25c] sm:$0xf]
        %v1107 = vld [vmem:[%s5 + $0x260] sm:$0xf]
        %v1108 = vld [vmem:[%s5 + $0x264] sm:$0xf]
        %v1109 = vld [vmem:[%s5 + $0x268] sm:$0xf]
        %v1110 = vld [vmem:[%s5 + $0x26c] sm:$0xf]
        %v1111 = vld [vmem:[%s5 + $0x270] sm:$0xf]
        %v1112 = vld [vmem:[%s5 + $0x274] sm:$0xf]
        %v1113 = vld [vmem:[%s5 + $0x278] sm:$0xf]
        %v1114 = vld [vmem:[%s5 + $0x27c] sm:$0xf]
        %v1115 = vld [vmem:[%s5 + $0x280] sm:$0xf]
        %v1116 = vld [vmem:[%s5 + $0x284] sm:$0xf]
        %v1117 = vld [vmem:[%s5 + $0x288] sm:$0xf]
        %v1118 = vld [vmem:[%s5 + $0x28c] sm:$0xf]
        %v1119 = vld [vmem:[%s5 + $0x290] sm:$0xf]
        %v1120 = vld [vmem:[%s5 + $0x294] sm:$0xf]
        %v1121 = vld [vmem:[%s5 + $0x298] sm:$0xf]
        %v1122 = vld [vmem:[%s5 + $0x29c] sm:$0xf]
        %v1123 = vld [vmem:[%s5 + $0x2a0] sm:$0xf]
        %v1124 = vld [vmem:[%s5 + $0x2a4] sm:$0xf]
        %v1125 = vld [vmem:[%s5 + $0x2a8] sm:$0xf]
        %v1126 = vld [vmem:[%s5 + $0x2ac] sm:$0xf]
        %v1127 = vld [vmem:[%s5 + $0x2b0] sm:$0xf]
        %v1128 = vld [vmem:[%s5 + $0x2b4] sm:$0xf]
        %v1129 = vld [vmem:[%s5 + $0x2b8] sm:$0xf]
        %v1130 = vld [vmem:[%s5 + $0x2bc] sm:$0xf]
        %v1131 = vld [vmem:[%s5 + $0x2c0] sm:$0xf]
        %v1132 = vld [vmem:[%s5 + $0x2c4] sm:$0xf]
        %v1133 = vld [vmem:[%s5 + $0x2c8] sm:$0xf]
        %v1134 = vld [vmem:[%s5 + $0x2cc] sm:$0xf]
        %v1135 = vld [vmem:[%s5 + $0x2d0] sm:$0xf]
        %v1136 = vld [vmem:[%s5 + $0x2d4] sm:$0xf]
        %v1137 = vld [vmem:[%s5 + $0x2d8] sm:$0xf]
        %v1138 = vld [vmem:[%s5 + $0x2dc] sm:$0xf]
        %v1139 = vld [vmem:[%s5 + $0x2e0] sm:$0xf]
        %v1140 = vld [vmem:[%s5 + $0x2e4] sm:$0xf]
        %v1141 = vld [vmem:[%s5 + $0x2e8] sm:$0xf]
        %v1142 = vld [vmem:[%s5 + $0x2ec] sm:$0xf]
        %v1143 = vld [vmem:[%s5 + $0x2f0] sm:$0xf]
        %v1144 = vld [vmem:[%s5 + $0x2f4] sm:$0xf]
        %v1145 = vld [vmem:[%s5 + $0x2f8] sm:$0xf]
        %v1146 = vld [vmem:[%s5 + $0x2fc] sm:$0xf]
        %v1147 = vld [vmem:[%s5 + $0x300] sm:$0xf]
        %v1148 = vld [vmem:[%s5 + $0x304] sm:$0xf]
        %v1149 = vld [vmem:[%s5 + $0x308] sm:$0xf]
        %v1150 = vld [vmem:[%s5 + $0x30c] sm:$0xf]
        %v1151 = vld [vmem:[%s5 + $0x310] sm:$0xf]
        %v1152 = vld [vmem:[%s5 + $0x314] sm:$0xf]
        %v1153 = vld [vmem:[%s5 + $0x318] sm:$0xf]
        %v1154 = vld [vmem:[%s5 + $0x31c] sm:$0xf]
        %v1155 = vld [vmem:[%s5 + $0x320] sm:$0xf]
        %v1156 = vld [vmem:[%s5 + $0x324] sm:$0xf]
        %v1157 = vld [vmem:[%s5 + $0x328] sm:$0xf]
        %v1158 = vld [vmem:[%s5 + $0x32c] sm:$0xf]
        %v1159 = vld [vmem:[%s5 + $0x330] sm:$0xf]
        %v1160 = vld [vmem:[%s5 + $0x334] sm:$0xf]
        %v1161 = vld [vmem:[%s5 + $0x338] sm:$0xf]
        %v1162 = vld [vmem:[%s5 + $0x33c] sm:$0xf]
        %v1163 = vld [vmem:[%s5 + $0x340] sm:$0xf]
        %v1164 = vld [vmem:[%s5 + $0x344] sm:$0xf]
        %v1165 = vld [vmem:[%s5 + $0x348] sm:$0xf]
        %v1166 = vld [vmem:[%s5 + $0x34c] sm:$0xf]
        %v1167 = vld [vmem:[%s5 + $0x350] sm:$0xf]
        %v1168 = vld [vmem:[%s5 + $0x354] sm:$0xf]
        %v1169 = vld [vmem:[%s5 + $0x358] sm:$0xf]
        %v1170 = vld [vmem:[%s5 + $0x35c] sm:$0xf]
        %v1171 = vld [vmem:[%s5 + $0x360] sm:$0xf]
        %v1172 = vld [vmem:[%s5 + $0x364] sm:$0xf]
        %v1173 = vld [vmem:[%s5 + $0x368] sm:$0xf]
        %v1174 = vld [vmem:[%s5 + $0x36c] sm:$0xf]
        %v1175 = vld [vmem:[%s5 + $0x370] sm:$0xf]
        %v1176 = vld [vmem:[%s5 + $0x374] sm:$0xf]
        %v1177 = vld [vmem:[%s5 + $0x378] sm:$0xf]
        %v1178 = vld [vmem:[%s5 + $0x37c] sm:$0xf]
        %v1179 = vld [vmem:[%s5 + $0x380] sm:$0xf]
        %v1180 = vld [vmem:[%s5 + $0x384] sm:$0xf]
        %v1181 = vld [vmem:[%s5 + $0x388] sm:$0xf]
        %v1182 = vld [vmem:[%s5 + $0x38c] sm:$0xf]
        %v1183 = vld [vmem:[%s5 + $0x390] sm:$0xf]
        %v1184 = vld [vmem:[%s5 + $0x394] sm:$0xf]
        %v1185 = vld [vmem:[%s5 + $0x398] sm:$0xf]
        %v1186 = vld [vmem:[%s5 + $0x39c] sm:$0xf]
        %v1187 = vld [vmem:[%s5 + $0x3a0] sm:$0xf]
        %v1188 = vld [vmem:[%s5 + $0x3a4] sm:$0xf]
        %v1189 = vld [vmem:[%s5 + $0x3a8] sm:$0xf]
        %v1190 = vld [vmem:[%s5 + $0x3ac] sm:$0xf]
        %v1191 = vld [vmem:[%s5 + $0x3b0] sm:$0xf]
        %v1192 = vld [vmem:[%s5 + $0x3b4] sm:$0xf]
        %v1193 = vld [vmem:[%s5 + $0x3b8] sm:$0xf]
        %v1194 = vld [vmem:[%s5 + $0x3bc] sm:$0xf]
        %v1195 = vld [vmem:[%s5 + $0x3c0] sm:$0xf]
        %v1196 = vld [vmem:[%s5 + $0x3c4] sm:$0xf]
        %v1197 = vld [vmem:[%s5 + $0x3c8] sm:$0xf]
        %v1198 = vld [vmem:[%s5 + $0x3cc] sm:$0xf]
        %v1199 = vld [vmem:[%s5 + $0x3d0] sm:$0xf]
        %v1200 = vld [vmem:[%s5 + $0x3d4] sm:$0xf]
        %v1201 = vld [vmem:[%s5 + $0x3d8] sm:$0xf]
        %v1202 = vld [vmem:[%s5 + $0x3dc] sm:$0xf]
        %v1203 = vld [vmem:[%s5 + $0x3e0] sm:$0xf]
        %v1204 = vld [vmem:[%s5 + $0x3e4] sm:$0xf]
        %v1205 = vld [vmem:[%s5 + $0x3e8] sm:$0xf]
        %v1206 = vld [vmem:[%s5 + $0x3ec] sm:$0xf]
        %v1207 = vld [vmem:[%s5 + $0x3f0] sm:$0xf]
        %v1208 = vld [vmem:[%s5 + $0x3f4] sm:$0xf]
        %v1209 = vld [vmem:[%s5 + $0x3f8] sm:$0xf]
        %v1210 = vld [vmem:[%s5 + $0x3fc] sm:$0xf]
        %v1211 = vld [vmem:[%s6] sm:$0x1]
        %v1213 = vlaneseq
        %v1214 = vshrl.u32 %v1213, 7
        %v1215 = vsub.s32 0, %v1214
        %v1216 = vrot.slane %v1211, %v1215
        %v1474 = vunpack.c.l.b16 %v955
        %v1475 = vunpack.c.l.b16 %v956
        %v1476 = vunpack.c.l.b16 %v957
        %v1477 = vunpack.c.l.b16 %v958
        %v1478 = vunpack.c.l.b16 %v959
        %v1479 = vunpack.c.l.b16 %v960
        %v1480 = vunpack.c.l.b16 %v961
        %v1481 = vunpack.c.l.b16 %v962
        %v1482 = vunpack.c.l.b16 %v963
        %v1483 = vunpack.c.l.b16 %v964
        %v1484 = vunpack.c.l.b16 %v965
        %v1485 = vunpack.c.l.b16 %v966
        %v1486 = vunpack.c.l.b16 %v967
        %v1487 = vunpack.c.l.b16 %v968
        %v1488 = vunpack.c.l.b16 %v969
        %v1489 = vunpack.c.l.b16 %v970
        %v1490 = vunpack.c.l.b16 %v971
        %v1491 = vunpack.c.l.b16 %v972
        %v1492 = vunpack.c.l.b16 %v973
        %v1493 = vunpack.c.l.b16 %v974
        %v1494 = vunpack.c.l.b16 %v975
        %v1495 = vunpack.c.l.b16 %v976
        %v1496 = vunpack.c.l.b16 %v977
        %v1497 = vunpack.c.l.b16 %v978
        %v1498 = vunpack.c.l.b16 %v979
        %v1499 = vunpack.c.l.b16 %v980
        %v1500 = vunpack.c.l.b16 %v981
        %v1501 = vunpack.c.l.b16 %v982
        %v1502 = vunpack.c.l.b16 %v983
        %v1503 = vunpack.c.l.b16 %v984
        %v1504 = vunpack.c.l.b16 %v985
        %v1505 = vunpack.c.l.b16 %v986
        %v1506 = vunpack.c.l.b16 %v987
        %v1507 = vunpack.c.l.b16 %v988
        %v1508 = vunpack.c.l.b16 %v989
        %v1509 = vunpack.c.l.b16 %v990
        %v1510 = vunpack.c.l.b16 %v991
        %v1511 = vunpack.c.l.b16 %v992
        %v1512 = vunpack.c.l.b16 %v993
        %v1513 = vunpack.c.l.b16 %v994
        %v1514 = vunpack.c.l.b16 %v995
        %v1515 = vunpack.c.l.b16 %v996
        %v1516 = vunpack.c.l.b16 %v997
        %v1517 = vunpack.c.l.b16 %v998
        %v1518 = vunpack.c.l.b16 %v999
        %v1519 = vunpack.c.l.b16 %v1000
        %v1520 = vunpack.c.l.b16 %v1001
        %v1521 = vunpack.c.l.b16 %v1002
        %v1522 = vunpack.c.l.b16 %v1003
        %v1523 = vunpack.c.l.b16 %v1004
        %v1524 = vunpack.c.l.b16 %v1005
        %v1525 = vunpack.c.l.b16 %v1006
        %v1526 = vunpack.c.l.b16 %v1007
        %v1527 = vunpack.c.l.b16 %v1008
        %v1528 = vunpack.c.l.b16 %v1009
        %v1529 = vunpack.c.l.b16 %v1010
        %v1530 = vunpack.c.l.b16 %v1011
        %v1531 = vunpack.c.l.b16 %v1012
        %v1532 = vunpack.c.l.b16 %v1013
        %v1533 = vunpack.c.l.b16 %v1014
        %v1534 = vunpack.c.l.b16 %v1015
        %v1535 = vunpack.c.l.b16 %v1016
        %v1536 = vunpack.c.l.b16 %v1017
        %v1537 = vunpack.c.l.b16 %v1018
        %v1538 = vunpack.c.l.b16 %v1019
        %v1539 = vunpack.c.l.b16 %v1020
        %v1540 = vunpack.c.l.b16 %v1021
        %v1541 = vunpack.c.l.b16 %v1022
        %v1542 = vunpack.c.l.b16 %v1023
        %v1543 = vunpack.c.l.b16 %v1024
        %v1544 = vunpack.c.l.b16 %v1025
        %v1545 = vunpack.c.l.b16 %v1026
        %v1546 = vunpack.c.l.b16 %v1027
        %v1547 = vunpack.c.l.b16 %v1028
        %v1548 = vunpack.c.l.b16 %v1029
        %v1549 = vunpack.c.l.b16 %v1030
        %v1550 = vunpack.c.l.b16 %v1031
        %v1551 = vunpack.c.l.b16 %v1032
        %v1552 = vunpack.c.l.b16 %v1033
        %v1553 = vunpack.c.l.b16 %v1034
        %v1554 = vunpack.c.l.b16 %v1035
        %v1555 = vunpack.c.l.b16 %v1036
        %v1556 = vunpack.c.l.b16 %v1037
        %v1557 = vunpack.c.l.b16 %v1038
        %v1558 = vunpack.c.l.b16 %v1039
        %v1559 = vunpack.c.l.b16 %v1040
        %v1560 = vunpack.c.l.b16 %v1041
        %v1561 = vunpack.c.l.b16 %v1042
        %v1562 = vunpack.c.l.b16 %v1043
        %v1563 = vunpack.c.l.b16 %v1044
        %v1564 = vunpack.c.l.b16 %v1045
        %v1565 = vunpack.c.l.b16 %v1046
        %v1566 = vunpack.c.l.b16 %v1047
        %v1567 = vunpack.c.l.b16 %v1048
        %v1568 = vunpack.c.l.b16 %v1049
        %v1569 = vunpack.c.l.b16 %v1050
        %v1570 = vunpack.c.l.b16 %v1051
        %v1571 = vunpack.c.l.b16 %v1052
        %v1572 = vunpack.c.l.b16 %v1053
        %v1573 = vunpack.c.l.b16 %v1054
        %v1574 = vunpack.c.l.b16 %v1055
        %v1575 = vunpack.c.l.b16 %v1056
        %v1576 = vunpack.c.l.b16 %v1057
        %v1577 = vunpack.c.l.b16 %v1058
        %v1578 = vunpack.c.l.b16 %v1059
        %v1579 = vunpack.c.l.b16 %v1060
        %v1580 = vunpack.c.l.b16 %v1061
        %v1581 = vunpack.c.l.b16 %v1062
        %v1582 = vunpack.c.l.b16 %v1063
        %v1583 = vunpack.c.l.b16 %v1064
        %v1584 = vunpack.c.l.b16 %v1065
        %v1585 = vunpack.c.l.b16 %v1066
        %v1586 = vunpack.c.l.b16 %v1067
        %v1587 = vunpack.c.l.b16 %v1068
        %v1588 = vunpack.c.l.b16 %v1069
        %v1589 = vunpack.c.l.b16 %v1070
        %v1590 = vunpack.c.l.b16 %v1071
        %v1591 = vunpack.c.l.b16 %v1072
        %v1592 = vunpack.c.l.b16 %v1073
        %v1593 = vunpack.c.l.b16 %v1074
        %v1594 = vunpack.c.l.b16 %v1075
        %v1595 = vunpack.c.l.b16 %v1076
        %v1596 = vunpack.c.l.b16 %v1077
        %v1597 = vunpack.c.l.b16 %v1078
        %v1598 = vunpack.c.l.b16 %v1079
        %v1599 = vunpack.c.l.b16 %v1080
        %v1600 = vunpack.c.l.b16 %v1081
        %v1601 = vunpack.c.l.b16 %v1082
        %v1602 = vunpack.c.l.b16 %v1083
        %v1603 = vunpack.c.l.b16 %v1084
        %v1604 = vunpack.c.l.b16 %v1085
        %v1605 = vunpack.c.l.b16 %v1086
        %v1606 = vunpack.c.l.b16 %v1087
        %v1607 = vunpack.c.l.b16 %v1088
        %v1608 = vunpack.c.l.b16 %v1089
        %v1609 = vunpack.c.l.b16 %v1090
        %v1610 = vunpack.c.l.b16 %v1091
        %v1611 = vunpack.c.l.b16 %v1092
        %v1612 = vunpack.c.l.b16 %v1093
        %v1613 = vunpack.c.l.b16 %v1094
        %v1614 = vunpack.c.l.b16 %v1095
        %v1615 = vunpack.c.l.b16 %v1096
        %v1616 = vunpack.c.l.b16 %v1097
        %v1617 = vunpack.c.l.b16 %v1098
        %v1618 = vunpack.c.l.b16 %v1099
        %v1619 = vunpack.c.l.b16 %v1100
        %v1620 = vunpack.c.l.b16 %v1101
        %v1621 = vunpack.c.l.b16 %v1102
        %v1622 = vunpack.c.l.b16 %v1103
        %v1623 = vunpack.c.l.b16 %v1104
        %v1624 = vunpack.c.l.b16 %v1105
        %v1625 = vunpack.c.l.b16 %v1106
        %v1626 = vunpack.c.l.b16 %v1107
        %v1627 = vunpack.c.l.b16 %v1108
        %v1628 = vunpack.c.l.b16 %v1109
        %v1629 = vunpack.c.l.b16 %v1110
        %v1630 = vunpack.c.l.b16 %v1111
        %v1631 = vunpack.c.l.b16 %v1112
        %v1632 = vunpack.c.l.b16 %v1113
        %v1633 = vunpack.c.l.b16 %v1114
        %v1634 = vunpack.c.l.b16 %v1115
        %v1635 = vunpack.c.l.b16 %v1116
        %v1636 = vunpack.c.l.b16 %v1117
        %v1637 = vunpack.c.l.b16 %v1118
        %v1638 = vunpack.c.l.b16 %v1119
        %v1639 = vunpack.c.l.b16 %v1120
        %v1640 = vunpack.c.l.b16 %v1121
        %v1641 = vunpack.c.l.b16 %v1122
        %v1642 = vunpack.c.l.b16 %v1123
        %v1643 = vunpack.c.l.b16 %v1124
        %v1644 = vunpack.c.l.b16 %v1125
        %v1645 = vunpack.c.l.b16 %v1126
        %v1646 = vunpack.c.l.b16 %v1127
        %v1647 = vunpack.c.l.b16 %v1128
        %v1648 = vunpack.c.l.b16 %v1129
        %v1649 = vunpack.c.l.b16 %v1130
        %v1650 = vunpack.c.l.b16 %v1131
        %v1651 = vunpack.c.l.b16 %v1132
        %v1652 = vunpack.c.l.b16 %v1133
        %v1653 = vunpack.c.l.b16 %v1134
        %v1654 = vunpack.c.l.b16 %v1135
        %v1655 = vunpack.c.l.b16 %v1136
        %v1656 = vunpack.c.l.b16 %v1137
        %v1657 = vunpack.c.l.b16 %v1138
        %v1658 = vunpack.c.l.b16 %v1139
        %v1659 = vunpack.c.l.b16 %v1140
        %v1660 = vunpack.c.l.b16 %v1141
        %v1661 = vunpack.c.l.b16 %v1142
        %v1662 = vunpack.c.l.b16 %v1143
        %v1663 = vunpack.c.l.b16 %v1144
        %v1664 = vunpack.c.l.b16 %v1145
        %v1665 = vunpack.c.l.b16 %v1146
        %v1666 = vunpack.c.l.b16 %v1147
        %v1667 = vunpack.c.l.b16 %v1148
        %v1668 = vunpack.c.l.b16 %v1149
        %v1669 = vunpack.c.l.b16 %v1150
        %v1670 = vunpack.c.l.b16 %v1151
        %v1671 = vunpack.c.l.b16 %v1152
        %v1672 = vunpack.c.l.b16 %v1153
        %v1673 = vunpack.c.l.b16 %v1154
        %v1674 = vunpack.c.l.b16 %v1155
        %v1675 = vunpack.c.l.b16 %v1156
        %v1676 = vunpack.c.l.b16 %v1157
        %v1677 = vunpack.c.l.b16 %v1158
        %v1678 = vunpack.c.l.b16 %v1159
        %v1679 = vunpack.c.l.b16 %v1160
        %v1680 = vunpack.c.l.b16 %v1161
        %v1681 = vunpack.c.l.b16 %v1162
        %v1682 = vunpack.c.l.b16 %v1163
        %v1683 = vunpack.c.l.b16 %v1164
        %v1684 = vunpack.c.l.b16 %v1165
        %v1685 = vunpack.c.l.b16 %v1166
        %v1686 = vunpack.c.l.b16 %v1167
        %v1687 = vunpack.c.l.b16 %v1168
        %v1688 = vunpack.c.l.b16 %v1169
        %v1689 = vunpack.c.l.b16 %v1170
        %v1690 = vunpack.c.l.b16 %v1171
        %v1691 = vunpack.c.l.b16 %v1172
        %v1692 = vunpack.c.l.b16 %v1173
        %v1693 = vunpack.c.l.b16 %v1174
        %v1694 = vunpack.c.l.b16 %v1175
        %v1695 = vunpack.c.l.b16 %v1176
        %v1696 = vunpack.c.l.b16 %v1177
        %v1697 = vunpack.c.l.b16 %v1178
        %v1698 = vunpack.c.l.b16 %v1179
        %v1699 = vunpack.c.l.b16 %v1180
        %v1700 = vunpack.c.l.b16 %v1181
        %v1701 = vunpack.c.l.b16 %v1182
        %v1702 = vunpack.c.l.b16 %v1183
        %v1703 = vunpack.c.l.b16 %v1184
        %v1704 = vunpack.c.l.b16 %v1185
        %v1705 = vunpack.c.l.b16 %v1186
        %v1706 = vunpack.c.l.b16 %v1187
        %v1707 = vunpack.c.l.b16 %v1188
        %v1708 = vunpack.c.l.b16 %v1189
        %v1709 = vunpack.c.l.b16 %v1190
        %v1710 = vunpack.c.l.b16 %v1191
        %v1711 = vunpack.c.l.b16 %v1192
        %v1712 = vunpack.c.l.b16 %v1193
        %v1713 = vunpack.c.l.b16 %v1194
        %v1714 = vunpack.c.l.b16 %v1195
        %v1715 = vunpack.c.l.b16 %v1196
        %v1716 = vunpack.c.l.b16 %v1197
        %v1717 = vunpack.c.l.b16 %v1198
        %v1718 = vunpack.c.l.b16 %v1199
        %v1719 = vunpack.c.l.b16 %v1200
        %v1720 = vunpack.c.l.b16 %v1201
        %v1721 = vunpack.c.l.b16 %v1202
        %v1722 = vunpack.c.l.b16 %v1203
        %v1723 = vunpack.c.l.b16 %v1204
        %v1724 = vunpack.c.l.b16 %v1205
        %v1725 = vunpack.c.l.b16 %v1206
        %v1726 = vunpack.c.l.b16 %v1207
        %v1727 = vunpack.c.l.b16 %v1208
        %v1728 = vunpack.c.l.b16 %v1209
        %v1729 = vunpack.c.l.b16 %v1210
        %v1730 = vpack.c.b16 %v1475, %v1474
        %v1731 = vpack.c.b16 %v1477, %v1476
        %v1732 = vpack.c.b16 %v1479, %v1478
        %v1733 = vpack.c.b16 %v1481, %v1480
        %v1734 = vpack.c.b16 %v1483, %v1482
        %v1735 = vpack.c.b16 %v1485, %v1484
        %v1736 = vpack.c.b16 %v1487, %v1486
        %v1737 = vpack.c.b16 %v1489, %v1488
        %v1738 = vpack.c.b16 %v1491, %v1490
        %v1739 = vpack.c.b16 %v1493, %v1492
        %v1740 = vpack.c.b16 %v1495, %v1494
        %v1741 = vpack.c.b16 %v1497, %v1496
        %v1742 = vpack.c.b16 %v1499, %v1498
        %v1743 = vpack.c.b16 %v1501, %v1500
        %v1744 = vpack.c.b16 %v1503, %v1502
        %v1745 = vpack.c.b16 %v1505, %v1504
        %v1746 = vpack.c.b16 %v1507, %v1506
        %v1747 = vpack.c.b16 %v1509, %v1508
        %v1748 = vpack.c.b16 %v1511, %v1510
        %v1749 = vpack.c.b16 %v1513, %v1512
        %v1750 = vpack.c.b16 %v1515, %v1514
        %v1751 = vpack.c.b16 %v1517, %v1516
        %v1752 = vpack.c.b16 %v1519, %v1518
        %v1753 = vpack.c.b16 %v1521, %v1520
        %v1754 = vpack.c.b16 %v1523, %v1522
        %v1755 = vpack.c.b16 %v1525, %v1524
        %v1756 = vpack.c.b16 %v1527, %v1526
        %v1757 = vpack.c.b16 %v1529, %v1528
        %v1758 = vpack.c.b16 %v1531, %v1530
        %v1759 = vpack.c.b16 %v1533, %v1532
        %v1760 = vpack.c.b16 %v1535, %v1534
        %v1761 = vpack.c.b16 %v1537, %v1536
        %v1762 = vpack.c.b16 %v1539, %v1538
        %v1763 = vpack.c.b16 %v1541, %v1540
        %v1764 = vpack.c.b16 %v1543, %v1542
        %v1765 = vpack.c.b16 %v1545, %v1544
        %v1766 = vpack.c.b16 %v1547, %v1546
        %v1767 = vpack.c.b16 %v1549, %v1548
        %v1768 = vpack.c.b16 %v1551, %v1550
        %v1769 = vpack.c.b16 %v1553, %v1552
        %v1770 = vpack.c.b16 %v1555, %v1554
        %v1771 = vpack.c.b16 %v1557, %v1556
        %v1772 = vpack.c.b16 %v1559, %v1558
        %v1773 = vpack.c.b16 %v1561, %v1560
        %v1774 = vpack.c.b16 %v1563, %v1562
        %v1775 = vpack.c.b16 %v1565, %v1564
        %v1776 = vpack.c.b16 %v1567, %v1566
        %v1777 = vpack.c.b16 %v1569, %v1568
        %v1778 = vpack.c.b16 %v1571, %v1570
        %v1779 = vpack.c.b16 %v1573, %v1572
        %v1780 = vpack.c.b16 %v1575, %v1574
        %v1781 = vpack.c.b16 %v1577, %v1576
        %v1782 = vpack.c.b16 %v1579, %v1578
        %v1783 = vpack.c.b16 %v1581, %v1580
        %v1784 = vpack.c.b16 %v1583, %v1582
        %v1785 = vpack.c.b16 %v1585, %v1584
        %v1786 = vpack.c.b16 %v1587, %v1586
        %v1787 = vpack.c.b16 %v1589, %v1588
        %v1788 = vpack.c.b16 %v1591, %v1590
        %v1789 = vpack.c.b16 %v1593, %v1592
        %v1790 = vpack.c.b16 %v1595, %v1594
        %v1791 = vpack.c.b16 %v1597, %v1596
        %v1792 = vpack.c.b16 %v1599, %v1598
        %v1793 = vpack.c.b16 %v1601, %v1600
        %v1794 = vpack.c.b16 %v1603, %v1602
        %v1795 = vpack.c.b16 %v1605, %v1604
        %v1796 = vpack.c.b16 %v1607, %v1606
        %v1797 = vpack.c.b16 %v1609, %v1608
        %v1798 = vpack.c.b16 %v1611, %v1610
        %v1799 = vpack.c.b16 %v1613, %v1612
        %v1800 = vpack.c.b16 %v1615, %v1614
        %v1801 = vpack.c.b16 %v1617, %v1616
        %v1802 = vpack.c.b16 %v1619, %v1618
        %v1803 = vpack.c.b16 %v1621, %v1620
        %v1804 = vpack.c.b16 %v1623, %v1622
        %v1805 = vpack.c.b16 %v1625, %v1624
        %v1806 = vpack.c.b16 %v1627, %v1626
        %v1807 = vpack.c.b16 %v1629, %v1628
        %v1808 = vpack.c.b16 %v1631, %v1630
        %v1809 = vpack.c.b16 %v1633, %v1632
        %v1810 = vpack.c.b16 %v1635, %v1634
        %v1811 = vpack.c.b16 %v1637, %v1636
        %v1812 = vpack.c.b16 %v1639, %v1638
        %v1813 = vpack.c.b16 %v1641, %v1640
        %v1814 = vpack.c.b16 %v1643, %v1642
        %v1815 = vpack.c.b16 %v1645, %v1644
        %v1816 = vpack.c.b16 %v1647, %v1646
        %v1817 = vpack.c.b16 %v1649, %v1648
        %v1818 = vpack.c.b16 %v1651, %v1650
        %v1819 = vpack.c.b16 %v1653, %v1652
        %v1820 = vpack.c.b16 %v1655, %v1654
        %v1821 = vpack.c.b16 %v1657, %v1656
        %v1822 = vpack.c.b16 %v1659, %v1658
        %v1823 = vpack.c.b16 %v1661, %v1660
        %v1824 = vpack.c.b16 %v1663, %v1662
        %v1825 = vpack.c.b16 %v1665, %v1664
        %v1826 = vpack.c.b16 %v1667, %v1666
        %v1827 = vpack.c.b16 %v1669, %v1668
        %v1828 = vpack.c.b16 %v1671, %v1670
        %v1829 = vpack.c.b16 %v1673, %v1672
        %v1830 = vpack.c.b16 %v1675, %v1674
        %v1831 = vpack.c.b16 %v1677, %v1676
        %v1832 = vpack.c.b16 %v1679, %v1678
        %v1833 = vpack.c.b16 %v1681, %v1680
        %v1834 = vpack.c.b16 %v1683, %v1682
        %v1835 = vpack.c.b16 %v1685, %v1684
        %v1836 = vpack.c.b16 %v1687, %v1686
        %v1837 = vpack.c.b16 %v1689, %v1688
        %v1838 = vpack.c.b16 %v1691, %v1690
        %v1839 = vpack.c.b16 %v1693, %v1692
        %v1840 = vpack.c.b16 %v1695, %v1694
        %v1841 = vpack.c.b16 %v1697, %v1696
        %v1842 = vpack.c.b16 %v1699, %v1698
        %v1843 = vpack.c.b16 %v1701, %v1700
        %v1844 = vpack.c.b16 %v1703, %v1702
        %v1845 = vpack.c.b16 %v1705, %v1704
        %v1846 = vpack.c.b16 %v1707, %v1706
        %v1847 = vpack.c.b16 %v1709, %v1708
        %v1848 = vpack.c.b16 %v1711, %v1710
        %v1849 = vpack.c.b16 %v1713, %v1712
        %v1850 = vpack.c.b16 %v1715, %v1714
        %v1851 = vpack.c.b16 %v1717, %v1716
        %v1852 = vpack.c.b16 %v1719, %v1718
        %v1853 = vpack.c.b16 %v1721, %v1720
        %v1854 = vpack.c.b16 %v1723, %v1722
        %v1855 = vpack.c.b16 %v1725, %v1724
        %v1856 = vpack.c.b16 %v1727, %v1726
        %v1857 = vpack.c.b16 %v1729, %v1728
        %1986 = vmatprep.subr.bf16.mxu0 0
        %1987 = vmatpush1.bf16.msra.mxu0 %v1730
        %1988 = vmatprep.subr.bf16.mxu0 0
        %1989 = vmatpush1.bf16.msra.mxu0 %v1731
        %1990 = vmatprep.subr.bf16.mxu0 0
        %1991 = vmatpush1.bf16.msra.mxu0 %v1732
        %1992 = vmatprep.subr.bf16.mxu0 0
        %1993 = vmatpush1.bf16.msra.mxu0 %v1733
        %1994 = vmatprep.subr.bf16.mxu0 0
        %1995 = vmatpush1.bf16.msra.mxu0 %v1734
        %1996 = vmatprep.subr.bf16.mxu0 0
        %1997 = vmatpush1.bf16.msra.mxu0 %v1735
        %1998 = vmatprep.subr.bf16.mxu0 0
        %1999 = vmatpush1.bf16.msra.mxu0 %v1736
        %2000 = vmatprep.subr.bf16.mxu0 0
        %2001 = vmatpush1.bf16.msra.mxu0 %v1737
        %2002 = vmatprep.subr.bf16.mxu0 0
        %2003 = vmatpush1.bf16.msra.mxu0 %v1738
        %2004 = vmatprep.subr.bf16.mxu0 0
        %2005 = vmatpush1.bf16.msra.mxu0 %v1739
        %2006 = vmatprep.subr.bf16.mxu0 0
        %2007 = vmatpush1.bf16.msra.mxu0 %v1740
        %2008 = vmatprep.subr.bf16.mxu0 0
        %2009 = vmatpush1.bf16.msra.mxu0 %v1741
        %2010 = vmatprep.subr.bf16.mxu0 0
        %2011 = vmatpush1.bf16.msra.mxu0 %v1742
        %2012 = vmatprep.subr.bf16.mxu0 0
        %2013 = vmatpush1.bf16.msra.mxu0 %v1743
        %2014 = vmatprep.subr.bf16.mxu0 0
        %2015 = vmatpush1.bf16.msra.mxu0 %v1744
        %2016 = vmatprep.subr.bf16.mxu0 0
        %2017 = vmatpush1.bf16.msra.mxu0 %v1745
        %2018 = vmatprep.mubr.bf16.mxu0 %v940
        %2019 = vmatmul.mubr.bf16.gmra.mrb[0].mxu0 %v939
        %v2020 = vpop.f32.mrb[0].mxu0
        %v2021 = vadd.f32 %v1216, %v2020
        %v2022 = vpop.f32.mrb[0].mxu0
        %v2023 = vpop.f32.mrb[0].mxu0
        %v2024 = vpop.f32.mrb[0].mxu0
        %2025 = vdwg.mxu0
        %2026 = vmatprep.subr.bf16.mxu0 0
        %2027 = vmatpush1.bf16.msra.mxu0 %v1746
        %2028 = vmatprep.subr.bf16.mxu0 0
        %2029 = vmatpush1.bf16.msra.mxu0 %v1747
        %2030 = vmatprep.subr.bf16.mxu0 0
        %2031 = vmatpush1.bf16.msra.mxu0 %v1748
        %2032 = vmatprep.subr.bf16.mxu0 0
        %2033 = vmatpush1.bf16.msra.mxu0 %v1749
        %2034 = vmatprep.subr.bf16.mxu0 0
        %2035 = vmatpush1.bf16.msra.mxu0 %v1750
        %2036 = vmatprep.subr.bf16.mxu0 0
        %2037 = vmatpush1.bf16.msra.mxu0 %v1751
        %2038 = vmatprep.subr.bf16.mxu0 0
        %2039 = vmatpush1.bf16.msra.mxu0 %v1752
        %2040 = vmatprep.subr.bf16.mxu0 0
        %2041 = vmatpush1.bf16.msra.mxu0 %v1753
        %2042 = vmatprep.subr.bf16.mxu0 0
        %2043 = vmatpush1.bf16.msra.mxu0 %v1754
        %2044 = vmatprep.subr.bf16.mxu0 0
        %2045 = vmatpush1.bf16.msra.mxu0 %v1755
        %2046 = vmatprep.subr.bf16.mxu0 0
        %2047 = vmatpush1.bf16.msra.mxu0 %v1756
        %2048 = vmatprep.subr.bf16.mxu0 0
        %2049 = vmatpush1.bf16.msra.mxu0 %v1757
        %2050 = vmatprep.subr.bf16.mxu0 0
        %2051 = vmatpush1.bf16.msra.mxu0 %v1758
        %2052 = vmatprep.subr.bf16.mxu0 0
        %2053 = vmatpush1.bf16.msra.mxu0 %v1759
        %2054 = vmatprep.subr.bf16.mxu0 0
        %2055 = vmatpush1.bf16.msra.mxu0 %v1760
        %2056 = vmatprep.subr.bf16.mxu0 0
        %2057 = vmatpush1.bf16.msra.mxu0 %v1761
        %2058 = vmatprep.mubr.bf16.mxu0 %v942
        %2059 = vmatmul.mubr.bf16.gmra.mrb[0].mxu0 %v941
        %v2060 = vpop.f32.mrb[0].mxu0
        %v2061 = vadd.f32 %v2021, %v2060
        %v2062 = vpop.f32.mrb[0].mxu0
        %v2063 = vpop.f32.mrb[0].mxu0
        %v2064 = vpop.f32.mrb[0].mxu0
        %2065 = vdwg.mxu0
        %2066 = vmatprep.subr.bf16.mxu0 0
        %2067 = vmatpush1.bf16.msra.mxu0 %v1762
        %2068 = vmatprep.subr.bf16.mxu0 0
        %2069 = vmatpush1.bf16.msra.mxu0 %v1763
        %2070 = vmatprep.subr.bf16.mxu0 0
        %2071 = vmatpush1.bf16.msra.mxu0 %v1764
        %2072 = vmatprep.subr.bf16.mxu0 0
        %2073 = vmatpush1.bf16.msra.mxu0 %v1765
        %2074 = vmatprep.subr.bf16.mxu0 0
        %2075 = vmatpush1.bf16.msra.mxu0 %v1766
        %2076 = vmatprep.subr.bf16.mxu0 0
        %2077 = vmatpush1.bf16.msra.mxu0 %v1767
        %2078 = vmatprep.subr.bf16.mxu0 0
        %2079 = vmatpush1.bf16.msra.mxu0 %v1768
        %2080 = vmatprep.subr.bf16.mxu0 0
        %2081 = vmatpush1.bf16.msra.mxu0 %v1769
        %2082 = vmatprep.subr.bf16.mxu0 0
        %2083 = vmatpush1.bf16.msra.mxu0 %v1770
        %2084 = vmatprep.subr.bf16.mxu0 0
        %2085 = vmatpush1.bf16.msra.mxu0 %v1771
        %2086 = vmatprep.subr.bf16.mxu0 0
        %2087 = vmatpush1.bf16.msra.mxu0 %v1772
        %2088 = vmatprep.subr.bf16.mxu0 0
        %2089 = vmatpush1.bf16.msra.mxu0 %v1773
        %2090 = vmatprep.subr.bf16.mxu0 0
        %2091 = vmatpush1.bf16.msra.mxu0 %v1774
        %2092 = vmatprep.subr.bf16.mxu0 0
        %2093 = vmatpush1.bf16.msra.mxu0 %v1775
        %2094 = vmatprep.subr.bf16.mxu0 0
        %2095 = vmatpush1.bf16.msra.mxu0 %v1776
        %2096 = vmatprep.subr.bf16.mxu0 0
        %2097 = vmatpush1.bf16.msra.mxu0 %v1777
        %2098 = vmatprep.mubr.bf16.mxu0 %v944
        %2099 = vmatmul.mubr.bf16.gmra.mrb[0].mxu0 %v943
        %v2100 = vpop.f32.mrb[0].mxu0
        %v2101 = vadd.f32 %v2061, %v2100
        %v2102 = vpop.f32.mrb[0].mxu0
        %v2103 = vpop.f32.mrb[0].mxu0
        %v2104 = vpop.f32.mrb[0].mxu0
        %2105 = vdwg.mxu0
        %2106 = vmatprep.subr.bf16.mxu0 0
        %2107 = vmatpush1.bf16.msra.mxu0 %v1778
        %2108 = vmatprep.subr.bf16.mxu0 0
        %2109 = vmatpush1.bf16.msra.mxu0 %v1779
        %2110 = vmatprep.subr.bf16.mxu0 0
        %2111 = vmatpush1.bf16.msra.mxu0 %v1780
        %2112 = vmatprep.subr.bf16.mxu0 0
        %2113 = vmatpush1.bf16.msra.mxu0 %v1781
        %2114 = vmatprep.subr.bf16.mxu0 0
        %2115 = vmatpush1.bf16.msra.mxu0 %v1782
        %2116 = vmatprep.subr.bf16.mxu0 0
        %2117 = vmatpush1.bf16.msra.mxu0 %v1783
        %2118 = vmatprep.subr.bf16.mxu0 0
        %2119 = vmatpush1.bf16.msra.mxu0 %v1784
        %2120 = vmatprep.subr.bf16.mxu0 0
        %2121 = vmatpush1.bf16.msra.mxu0 %v1785
        %2122 = vmatprep.subr.bf16.mxu0 0
        %2123 = vmatpush1.bf16.msra.mxu0 %v1786
        %2124 = vmatprep.subr.bf16.mxu0 0
        %2125 = vmatpush1.bf16.msra.mxu0 %v1787
        %2126 = vmatprep.subr.bf16.mxu0 0
        %2127 = vmatpush1.bf16.msra.mxu0 %v1788
        %2128 = vmatprep.subr.bf16.mxu0 0
        %2129 = vmatpush1.bf16.msra.mxu0 %v1789
        %2130 = vmatprep.subr.bf16.mxu0 0
        %2131 = vmatpush1.bf16.msra.mxu0 %v1790
        %2132 = vmatprep.subr.bf16.mxu0 0
        %2133 = vmatpush1.bf16.msra.mxu0 %v1791
        %2134 = vmatprep.subr.bf16.mxu0 0
        %2135 = vmatpush1.bf16.msra.mxu0 %v1792
        %2136 = vmatprep.subr.bf16.mxu0 0
        %2137 = vmatpush1.bf16.msra.mxu0 %v1793
        %2138 = vmatprep.mubr.bf16.mxu0 %v946
        %2139 = vmatmul.mubr.bf16.gmra.mrb[0].mxu0 %v945
        %v2140 = vpop.f32.mrb[0].mxu0
        %v2141 = vadd.f32 %v2101, %v2140
        %v2142 = vpop.f32.mrb[0].mxu0
        %v2143 = vpop.f32.mrb[0].mxu0
        %v2144 = vpop.f32.mrb[0].mxu0
        %2145 = vdwg.mxu0
        %2146 = vmatprep.subr.bf16.mxu0 0
        %2147 = vmatpush1.bf16.msra.mxu0 %v1794
        %2148 = vmatprep.subr.bf16.mxu0 0
        %2149 = vmatpush1.bf16.msra.mxu0 %v1795
        %2150 = vmatprep.subr.bf16.mxu0 0
        %2151 = vmatpush1.bf16.msra.mxu0 %v1796
        %2152 = vmatprep.subr.bf16.mxu0 0
        %2153 = vmatpush1.bf16.msra.mxu0 %v1797
        %2154 = vmatprep.subr.bf16.mxu0 0
        %2155 = vmatpush1.bf16.msra.mxu0 %v1798
        %2156 = vmatprep.subr.bf16.mxu0 0
        %2157 = vmatpush1.bf16.msra.mxu0 %v1799
        %2158 = vmatprep.subr.bf16.mxu0 0
        %2159 = vmatpush1.bf16.msra.mxu0 %v1800
        %2160 = vmatprep.subr.bf16.mxu0 0
        %2161 = vmatpush1.bf16.msra.mxu0 %v1801
        %2162 = vmatprep.subr.bf16.mxu0 0
        %2163 = vmatpush1.bf16.msra.mxu0 %v1802
        %2164 = vmatprep.subr.bf16.mxu0 0
        %2165 = vmatpush1.bf16.msra.mxu0 %v1803
        %2166 = vmatprep.subr.bf16.mxu0 0
        %2167 = vmatpush1.bf16.msra.mxu0 %v1804
        %2168 = vmatprep.subr.bf16.mxu0 0
        %2169 = vmatpush1.bf16.msra.mxu0 %v1805
        %2170 = vmatprep.subr.bf16.mxu0 0
        %2171 = vmatpush1.bf16.msra.mxu0 %v1806
        %2172 = vmatprep.subr.bf16.mxu0 0
        %2173 = vmatpush1.bf16.msra.mxu0 %v1807
        %2174 = vmatprep.subr.bf16.mxu0 0
        %2175 = vmatpush1.bf16.msra.mxu0 %v1808
        %2176 = vmatprep.subr.bf16.mxu0 0
        %2177 = vmatpush1.bf16.msra.mxu0 %v1809
        %2178 = vmatprep.mubr.bf16.mxu0 %v948
        %2179 = vmatmul.mubr.bf16.gmra.mrb[0].mxu0 %v947
        %v2180 = vpop.f32.mrb[0].mxu0
        %v2181 = vadd.f32 %v2141, %v2180
        %v2182 = vpop.f32.mrb[0].mxu0
        %v2183 = vpop.f32.mrb[0].mxu0
        %v2184 = vpop.f32.mrb[0].mxu0
        %2185 = vdwg.mxu0
        %2186 = vmatprep.subr.bf16.mxu0 0
        %2187 = vmatpush1.bf16.msra.mxu0 %v1810
        %2188 = vmatprep.subr.bf16.mxu0 0
        %2189 = vmatpush1.bf16.msra.mxu0 %v1811
        %2190 = vmatprep.subr.bf16.mxu0 0
        %2191 = vmatpush1.bf16.msra.mxu0 %v1812
        %2192 = vmatprep.subr.bf16.mxu0 0
        %2193 = vmatpush1.bf16.msra.mxu0 %v1813
        %2194 = vmatprep.subr.bf16.mxu0 0
        %2195 = vmatpush1.bf16.msra.mxu0 %v1814
        %2196 = vmatprep.subr.bf16.mxu0 0
        %2197 = vmatpush1.bf16.msra.mxu0 %v1815
        %2198 = vmatprep.subr.bf16.mxu0 0
        %2199 = vmatpush1.bf16.msra.mxu0 %v1816
        %2200 = vmatprep.subr.bf16.mxu0 0
        %2201 = vmatpush1.bf16.msra.mxu0 %v1817
        %2202 = vmatprep.subr.bf16.mxu0 0
        %2203 = vmatpush1.bf16.msra.mxu0 %v1818
        %2204 = vmatprep.subr.bf16.mxu0 0
        %2205 = vmatpush1.bf16.msra.mxu0 %v1819
        %2206 = vmatprep.subr.bf16.mxu0 0
        %2207 = vmatpush1.bf16.msra.mxu0 %v1820
        %2208 = vmatprep.subr.bf16.mxu0 0
        %2209 = vmatpush1.bf16.msra.mxu0 %v1821
        %2210 = vmatprep.subr.bf16.mxu0 0
        %2211 = vmatpush1.bf16.msra.mxu0 %v1822
        %2212 = vmatprep.subr.bf16.mxu0 0
        %2213 = vmatpush1.bf16.msra.mxu0 %v1823
        %2214 = vmatprep.subr.bf16.mxu0 0
        %2215 = vmatpush1.bf16.msra.mxu0 %v1824
        %2216 = vmatprep.subr.bf16.mxu0 0
        %2217 = vmatpush1.bf16.msra.mxu0 %v1825
        %2218 = vmatprep.mubr.bf16.mxu0 %v950
        %2219 = vmatmul.mubr.bf16.gmra.mrb[0].mxu0 %v949
        %v2220 = vpop.f32.mrb[0].mxu0
        %v2221 = vadd.f32 %v2181, %v2220
        %v2222 = vpop.f32.mrb[0].mxu0
        %v2223 = vpop.f32.mrb[0].mxu0
        %v2224 = vpop.f32.mrb[0].mxu0
        %2225 = vdwg.mxu0
        %2226 = vmatprep.subr.bf16.mxu0 0
        %2227 = vmatpush1.bf16.msra.mxu0 %v1826
        %2228 = vmatprep.subr.bf16.mxu0 0
        %2229 = vmatpush1.bf16.msra.mxu0 %v1827
        %2230 = vmatprep.subr.bf16.mxu0 0
        %2231 = vmatpush1.bf16.msra.mxu0 %v1828
        %2232 = vmatprep.subr.bf16.mxu0 0
        %2233 = vmatpush1.bf16.msra.mxu0 %v1829
        %2234 = vmatprep.subr.bf16.mxu0 0
        %2235 = vmatpush1.bf16.msra.mxu0 %v1830
        %2236 = vmatprep.subr.bf16.mxu0 0
        %2237 = vmatpush1.bf16.msra.mxu0 %v1831
        %2238 = vmatprep.subr.bf16.mxu0 0
        %2239 = vmatpush1.bf16.msra.mxu0 %v1832
        %2240 = vmatprep.subr.bf16.mxu0 0
        %2241 = vmatpush1.bf16.msra.mxu0 %v1833
        %2242 = vmatprep.subr.bf16.mxu0 0
        %2243 = vmatpush1.bf16.msra.mxu0 %v1834
        %2244 = vmatprep.subr.bf16.mxu0 0
        %2245 = vmatpush1.bf16.msra.mxu0 %v1835
        %2246 = vmatprep.subr.bf16.mxu0 0
        %2247 = vmatpush1.bf16.msra.mxu0 %v1836
        %2248 = vmatprep.subr.bf16.mxu0 0
        %2249 = vmatpush1.bf16.msra.mxu0 %v1837
        %2250 = vmatprep.subr.bf16.mxu0 0
        %2251 = vmatpush1.bf16.msra.mxu0 %v1838
        %2252 = vmatprep.subr.bf16.mxu0 0
        %2253 = vmatpush1.bf16.msra.mxu0 %v1839
        %2254 = vmatprep.subr.bf16.mxu0 0
        %2255 = vmatpush1.bf16.msra.mxu0 %v1840
        %2256 = vmatprep.subr.bf16.mxu0 0
        %2257 = vmatpush1.bf16.msra.mxu0 %v1841
        %2258 = vmatprep.mubr.bf16.mxu0 %v952
        %2259 = vmatmul.mubr.bf16.gmra.mrb[0].mxu0 %v951
        %v2260 = vpop.f32.mrb[0].mxu0
        %v2261 = vadd.f32 %v2221, %v2260
        %v2262 = vpop.f32.mrb[0].mxu0
        %v2263 = vpop.f32.mrb[0].mxu0
        %v2264 = vpop.f32.mrb[0].mxu0
        %2265 = vdwg.mxu0
        %2266 = vmatprep.subr.bf16.mxu0 0
        %2267 = vmatpush1.bf16.msra.mxu0 %v1842
        %2268 = vmatprep.subr.bf16.mxu0 0
        %2269 = vmatpush1.bf16.msra.mxu0 %v1843
        %2270 = vmatprep.subr.bf16.mxu0 0
        %2271 = vmatpush1.bf16.msra.mxu0 %v1844
        %2272 = vmatprep.subr.bf16.mxu0 0
        %2273 = vmatpush1.bf16.msra.mxu0 %v1845
        %2274 = vmatprep.subr.bf16.mxu0 0
        %2275 = vmatpush1.bf16.msra.mxu0 %v1846
        %2276 = vmatprep.subr.bf16.mxu0 0
        %2277 = vmatpush1.bf16.msra.mxu0 %v1847
        %2278 = vmatprep.subr.bf16.mxu0 0
        %2279 = vmatpush1.bf16.msra.mxu0 %v1848
        %2280 = vmatprep.subr.bf16.mxu0 0
        %2281 = vmatpush1.bf16.msra.mxu0 %v1849
        %2282 = vmatprep.subr.bf16.mxu0 0
        %2283 = vmatpush1.bf16.msra.mxu0 %v1850
        %2284 = vmatprep.subr.bf16.mxu0 0
        %2285 = vmatpush1.bf16.msra.mxu0 %v1851
        %2286 = vmatprep.subr.bf16.mxu0 0
        %2287 = vmatpush1.bf16.msra.mxu0 %v1852
        %2288 = vmatprep.subr.bf16.mxu0 0
        %2289 = vmatpush1.bf16.msra.mxu0 %v1853
        %2290 = vmatprep.subr.bf16.mxu0 0
        %2291 = vmatpush1.bf16.msra.mxu0 %v1854
        %2292 = vmatprep.subr.bf16.mxu0 0
        %2293 = vmatpush1.bf16.msra.mxu0 %v1855
        %2294 = vmatprep.subr.bf16.mxu0 0
        %2295 = vmatpush1.bf16.msra.mxu0 %v1856
        %2296 = vmatprep.subr.bf16.mxu0 0
        %2297 = vmatpush1.bf16.msra.mxu0 %v1857
        %2298 = vmatprep.mubr.bf16.mxu0 %v954
        %2299 = vmatmul.mubr.bf16.gmra.mrb[0].mxu0 %v953
        %v2300 = vpop.f32.mrb[0].mxu0
        %v2301 = vadd.f32 %v2261, %v2300
        %v2302 = vpop.f32.mrb[0].mxu0
        %v2303 = vpop.f32.mrb[0].mxu0
        %v2304 = vpop.f32.mrb[0].mxu0
        %2305 = vdwg.mxu0
        %v2306 = vadd.f32 %v275, %v2301
        %2307 = vst.msk [vmem:[%s269] sm:$0xff] %vm278, %v2306
        %s2308 = sand.u32 %s181, 1
        %s2309 = scalar_lea.sflag [#allocation3], %s2308
        %s2310 = sand.u32 %s181, 1
        %s2311 = smul.addr %s2310, 8
        %s2312 = scalar_lea.vmem [#allocation2], %s2311
        // Predicated region
        $region49: #{decoder_layer.5} parent=47 // pred_check
          %p2313 = pneg %p191
        $region50: #{decoder_layer.5} parent=47 // pred_check_branch
          %2315 = sbr.rel (%p2313) target = $region52
        $region51: #{decoder_layer.5} parent=47 // pred_region
          %s2317 = ssub.s32 128, 128
          %2318 = vsyncadd %s2309, %s2317
          %s2319 = smul.addr %s21, 128
          %s2320 = scalar_lea.hbm %s7, %s2319
          %s2322 = sshll.u32 %s2312, 4
          %s2323 = int_to_ptr.vmem [resolvable:$true] %s2322
          %2325 = dma.vmem_to_hbm [thread:$0]  %s2323, 128, %s2320, %s2309
        $region52: #{decoder_layer.5} parent=47 // pred_fallthru
          _
      $region48: #{decoder_layer.5} parent=5 // pred_fallthru
        _
      %p2326 = scmp.le.s32.totalorder 2, %s16
      // Predicated region
      $region53: #{decoder_layer.5} parent=5 // pred_check
        %p2327 = pneg %p2326
      $region54: #{decoder_layer.5} parent=5 // pred_check_branch
        %2329 = sbr.rel (%p2327) target = $region56
      $region55: #{decoder_layer.5} parent=5 // pred_region
        %s2330 = ssub.s32 %s16, 2
        // Predicated region
        $region57: #{decoder_layer.5} parent=55 // pred_check
          %p2331 = pneg %p197
        $region58: #{decoder_layer.5} parent=55 // pred_check_branch
          %2333 = sbr.rel (%p2331) target = $region60
        $region59: #{decoder_layer.5} parent=55 // pred_region
          %s2334 = sand.u32 %s182, 1
          %s2335 = scalar_lea.sflag [#allocation3], %s2334
          %s2336 = sand.u32 %s182, 1
          %s2337 = smul.addr %s2336, 8
          %s2338 = scalar_lea.vmem [#allocation2], %s2337
          %2339 = dma.done %s2335, 128
        $region60: #{decoder_layer.5} parent=55 // pred_fallthru
          _
      $region56: #{decoder_layer.5} parent=5 // pred_fallthru
        _
    $region6: #{decoder_layer.5} parent=1 // loop_footer
      %s20 = sadd.s32 1, %s16
    $region7: #{decoder_layer.5} parent=1 // loop_footer_branch
      %15 = sbr.rel target = $region3
    $region8: #{decoder_layer.5} parent=1 // loop_exit
      _
    %2340 = vsyncpa [#allocation3], 1
    %s2341 = scalar_lea.sflag [#allocation3], 1
    %2342 = vsyncpa %s2341, 1

</llo_original>
